<compile_context>
chip_gen: v7x
topology: tpu7x:2x2x1
jax: 0.10.0
libtpu: 0.0.40
codegen_flags: <defaults>
</compile_context>

<pallas_src>
import jax
import jax.numpy as jnp
from jax import lax
from jax.experimental import pallas as pl
from jax.experimental.pallas import tpu as pltpu


def _round_up(x, m):
    return (x + m - 1) // m * m


def bilstm_classifier_kernel(x_ref,        # [T, Bt, Dp]   embedded inputs, time-major, padded
                             w_ih_ref,     # [Dp, 8*Hp]    concat(fwd|bwd) input->gate weights
                             b_ref,        # [1, 8*Hp]     concat(fwd|bwd) combined biases
                             w_hh_f_ref,   # [Hp, 4*Hp]    forward recurrent weights
                             w_hh_b_ref,   # [Hp, 4*Hp]    backward recurrent weights
                             w_out_ref,    # [2*Hp, Op]    classifier weight (rows: fwd | bwd)
                             b_out_ref,    # [1, Op]       classifier bias (-1e30 on pad lanes)
                             out_ref,      # [Bt, Op]      softmax probabilities
                             gx_ref):      # scratch [T*Bt, 8*Hp] precomputed input projections
    T, Bt, Dp = x_ref.shape
    Hp = w_hh_f_ref.shape[0]
    G4 = 4 * Hp

    # ---- (1) Hoist input projection: one large MXU matmul for all timesteps
    #          and BOTH directions, bias folded in (single broadcast).
    x2d = x_ref[...].reshape(T * Bt, Dp)
    gx_ref[...] = (jnp.dot(x2d, w_ih_ref[...], preferred_element_type=jnp.float32)
                   + b_ref[...])

    w_hh_f = w_hh_f_ref[...]
    w_hh_b = w_hh_b_ref[...]

    def cell(gates, c):
        # PyTorch gate order i, f, g, o; each slice starts on a 128-lane boundary.
        i_g = jax.nn.sigmoid(gates[:, 0 * Hp:1 * Hp])
        f_g = jax.nn.sigmoid(gates[:, 1 * Hp:2 * Hp])
        g_g = jnp.tanh(gates[:, 2 * Hp:3 * Hp])
        o_g = jax.nn.sigmoid(gates[:, 3 * Hp:4 * Hp])
        c_new = f_g * c + i_g * g_g
        h_new = o_g * jnp.tanh(c_new)
        return h_new, c_new

    # ---- (2) Fused recurrence: forward step t and backward step T-1-t share
    #          one loop iteration, so the two independent h@W_hh matmuls and
    #          one direction's EUP/VPU gate math overlap the other's MXU push.
    def body(t, carry):
        h_f, c_f, h_b, c_b = carry
        row_f = pl.multiple_of(t * Bt, Bt)
        row_b = pl.multiple_of((T - 1 - t) * Bt, Bt)
        gx_f = gx_ref[pl.ds(row_f, Bt), 0:G4]           # forward gates pre-activation
        gx_b = gx_ref[pl.ds(row_b, Bt), G4:2 * G4]      # backward gates pre-activation
        gates_f = jnp.dot(h_f, w_hh_f, preferred_element_type=jnp.float32) + gx_f
        gates_b = jnp.dot(h_b, w_hh_b, preferred_element_type=jnp.float32) + gx_b
        h_f, c_f = cell(gates_f, c_f)
        h_b, c_b = cell(gates_b, c_b)
        return h_f, c_f, h_b, c_b

    z = jnp.zeros((Bt, Hp), jnp.float32)
    unroll = True if T <= 16 else 2          # give LLO scheduler cross-iteration visibility
    h_f, _, h_b, _ = lax.fori_loop(0, T, body, (z, z, z, z), unroll=unroll)

    # ---- (3) Classifier on concat([h_fwd, h_bwd]) as two matmuls, softmax on a
    #          lane-dense [Bt, Op] slab. Padded output lanes carry a -1e30 bias,
    #          so exp() maps them to exactly 0 and they never touch the sum.
    logits = (jnp.dot(h_f, w_out_ref[0:Hp, :], preferred_element_type=jnp.float32)
              + jnp.dot(h_b, w_out_ref[Hp:2 * Hp, :], preferred_element_type=jnp.float32)
              + b_out_ref[...])
    m = jnp.max(logits, axis=1, keepdims=True)
    e = jnp.exp(logits - m)
    s = jnp.sum(e, axis=1, keepdims=True)
    out_ref[...] = (e * pl.reciprocal(s, approx=False)).astype(out_ref.dtype)


def _pad_gate_blocks(w, h, hp):
    """Pad each of the 4 (i,f,g,o) gate blocks on the last axis from h to hp."""
    pad = [(0, 0)] * (w.ndim - 1) + [(0, hp - h)]
    return jnp.concatenate(
        [jnp.pad(w[..., g * h:(g + 1) * h], pad) for g in range(4)], axis=-1)


def bilstm_classifier(token_ids, params):
    """token_ids: [B, T] int32. Returns softmax probabilities [B, output_dim]."""
    emb_table = params["embedding"]                  # [V, D]
    B, T = token_ids.shape
    D = emb_table.shape[1]
    H = params["w_hh_f"].shape[0]
    O = params["w_out"].shape[1]

    Hp = _round_up(H, 128)                           # lane-align hidden / gates
    Dp = _round_up(D, 128)                           # lane-align embedding dim
    Op = _round_up(O, 128)                           # lane-dense output store
    Bp = _round_up(B, 8)                             # sublane-align batch
    if Bp > 128:
        Bp = _round_up(Bp, 128)
        b_tile = 128
    else:
        b_tile = Bp

    # Gather the embedding directly time-major (avoids a separate [B,T,D]
    # transpose of the activation), then zero-pad to [T, Bp, Dp].
    # TODO(synk): fuse the embedding gather into the kernel via
    # PrefetchScalarGridSpec + pl.Element row-gather to avoid materializing it.
    x_tbd = jnp.take(emb_table, token_ids.T, axis=0)            # [T, B, D]
    x_tbd = jnp.pad(x_tbd, ((0, 0), (0, Bp - B), (0, Dp - D)))

    # Zero-pad H -> Hp per gate block: padded hidden lanes stay exactly 0
    # through the recurrence (sigmoid(0)*0), so results are bit-for-bit exact.
    w_ih_f = jnp.pad(_pad_gate_blocks(params["w_ih_f"], H, Hp), ((0, Dp - D), (0, 0)))
    w_ih_b = jnp.pad(_pad_gate_blocks(params["w_ih_b"], H, Hp), ((0, Dp - D), (0, 0)))
    w_ih_all = jnp.concatenate([w_ih_f, w_ih_b], axis=1)        # [Dp, 8Hp]
    b_all = jnp.concatenate([_pad_gate_blocks(params["b_f"], H, Hp),
                             _pad_gate_blocks(params["b_b"], H, Hp)], axis=1)  # [1, 8Hp]
    w_hh_f = jnp.pad(_pad_gate_blocks(params["w_hh_f"], H, Hp), ((0, Hp - H), (0, 0)))
    w_hh_b = jnp.pad(_pad_gate_blocks(params["w_hh_b"], H, Hp), ((0, Hp - H), (0, 0)))
    w_out = params["w_out"]
    w_out_f = jnp.pad(w_out[0:H, :], ((0, Hp - H), (0, Op - O)))
    w_out_b = jnp.pad(w_out[H:2 * H, :], ((0, Hp - H), (0, Op - O)))
    w_out_p = jnp.concatenate([w_out_f, w_out_b], axis=0)        # [2Hp, Op]
    b_out_p = jnp.pad(params["b_out"], ((0, 0), (0, Op - O)),
                      constant_values=-1e30)                     # mask padded logit lanes

    # TODO(synk): for very long T on v7x (64 MiB VMEM), chunk the time axis
    # (tile gx / x over T with double-buffered DMA) instead of keeping the whole
    # [T*Bt, 8Hp] projection resident, and set vmem_limit_bytes explicitly.
    grid = (Bp // b_tile,)
    out_padded = pl.pallas_call(
        bilstm_classifier_kernel,
        out_shape=jax.ShapeDtypeStruct((Bp, Op), jnp.float32),
        grid=grid,
        in_specs=[
            pl.BlockSpec((T, b_tile, Dp), lambda i: (0, i, 0)),
            pl.BlockSpec((Dp, 8 * Hp), lambda i: (0, 0)),
            pl.BlockSpec((1, 8 * Hp), lambda i: (0, 0)),
            pl.BlockSpec((Hp, 4 * Hp), lambda i: (0, 0)),
            pl.BlockSpec((Hp, 4 * Hp), lambda i: (0, 0)),
            pl.BlockSpec((2 * Hp, Op), lambda i: (0, 0)),
            pl.BlockSpec((1, Op), lambda i: (0, 0)),
        ],
        out_specs=pl.BlockSpec((b_tile, Op), lambda i: (i, 0)),
        scratch_shapes=[pltpu.VMEM((T * b_tile, 8 * Hp), jnp.float32)],
        compiler_params=pltpu.CompilerParams(
            dimension_semantics=("parallel",)),     # batch tiles across TCs (v7x)
    )(x_tbd, w_ih_all, b_all, w_hh_f, w_hh_b, w_out_p, b_out_p)

    return out_padded[:B, :O]


def init_params(key, vocab, d_model, hidden, output_dim):
    ks = jax.random.split(key, 9)
    k_lstm = 1.0 / jnp.sqrt(hidden)
    k_lin = 1.0 / jnp.sqrt(2.0 * hidden)

    def u(k, shape, scale):
        return jax.random.uniform(k, shape, jnp.float32, -scale, scale)

    return {
        "embedding": jax.random.normal(ks[0], (vocab, d_model), jnp.float32) * 0.02,
        # weights stored pre-transposed for x @ W usage; gate order i,f,g,o
        "w_ih_f": u(ks[1], (d_model, 4 * hidden), k_lstm),
        "w_hh_f": u(ks[2], (hidden, 4 * hidden), k_lstm),
        "b_f":    u(ks[3], (1, 4 * hidden), k_lstm),       # b_ih + b_hh combined
        "w_ih_b": u(ks[4], (d_model, 4 * hidden), k_lstm),
        "w_hh_b": u(ks[5], (hidden, 4 * hidden), k_lstm),
        "b_b":    u(ks[6], (1, 4 * hidden), k_lstm),
        "w_out":  u(ks[7], (2 * hidden, output_dim), k_lin),
        "b_out":  u(ks[8], (1, output_dim), k_lin),
    }


def reference_forward(token_ids, params):
    """Pure-JAX reference implementing the same PyTorch semantics."""
    emb = jnp.take(params["embedding"], token_ids, axis=0)   # [B, T, D]
    B, T, D = emb.shape
    H = params["w_hh_f"].shape[0]

    def step(x_t, h, c, wih, whh, b):
        g = x_t @ wih + h @ whh + b
        i = jax.nn.sigmoid(g[:, 0:H])
        f = jax.nn.sigmoid(g[:, H:2 * H])
        gg = jnp.tanh(g[:, 2 * H:3 * H])
        o = jax.nn.sigmoid(g[:, 3 * H:4 * H])
        c = f * c + i * gg
        h = o * jnp.tanh(c)
        return h, c

    h = jnp.zeros((B, H)); c = jnp.zeros((B, H))
    for t in range(T):
        h, c = step(emb[:, t], h, c, params["w_ih_f"], params["w_hh_f"], params["b_f"])
    h_fwd = h
    h = jnp.zeros((B, H)); c = jnp.zeros((B, H))
    for t in range(T - 1, -1, -1):
        h, c = step(emb[:, t], h, c, params["w_ih_b"], params["w_hh_b"], params["b_b"])
    h_bwd = h
    logits = jnp.concatenate([h_fwd, h_bwd], axis=-1) @ params["w_out"] + params["b_out"]
    return jax.nn.softmax(logits, axis=1)


if __name__ == "__main__":
    B, T = 2, 8           # batch, sequence length
    VOCAB = 50            # tiny synthetic vocab (stands in for T5 vocab)
    D_MODEL = 64          # stands in for T5Config.d_model
    HIDDEN = 32           # hidden_dim
    OUTPUT_DIM = 4

    key = jax.random.PRNGKey(0)
    k_ids, k_params = jax.random.split(key)
    token_ids = jax.random.randint(k_ids, (B, T), 0, VOCAB, dtype=jnp.int32)
    params = init_params(k_params, VOCAB, D_MODEL, HIDDEN, OUTPUT_DIM)

    out = bilstm_classifier(token_ids, params)
    out = jax.block_until_ready(out)

    ref = reference_forward(token_ids, params)
    assert out.shape == (B, OUTPUT_DIM)
    assert jnp.allclose(out, ref, atol=1e-5, rtol=1e-5), float(jnp.max(jnp.abs(out - ref)))

    print("KERNEL_OK")
</pallas_src>

<mosaic_0001>
module attributes {stable_mosaic.version = 11 : i64} {
  func.func @bilstm_classifier_kernel(%arg0: i32, %arg1: memref<8x8x128xf32, #tpu.memory_space<vmem>>, %arg2: memref<128x1024xf32, #tpu.memory_space<vmem>>, %arg3: memref<1x1024xf32, #tpu.memory_space<vmem>>, %arg4: memref<128x512xf32, #tpu.memory_space<vmem>>, %arg5: memref<128x512xf32, #tpu.memory_space<vmem>>, %arg6: memref<256x128xf32, #tpu.memory_space<vmem>>, %arg7: memref<1x128xf32, #tpu.memory_space<vmem>>, %arg8: memref<8x128xf32, #tpu.memory_space<vmem>>, %arg9: memref<64x1024xf32, #tpu.memory_space<vmem>>) attributes {dimension_semantics = [#tpu.dimension_semantics<parallel>], iteration_bounds = array<i64: 1>, scalar_prefetch = 0 : i64, scratch_operands = 1 : i64, tpu.core_type = #tpu.core_type<tc>, window_params = [{transform_indices = @transform_0, window_bounds = array<i64: 8, 8, 128>}, {pipeline_mode = #tpu.pipeline_mode<synchronous>, transform_indices = @transform_1, window_bounds = array<i64: 128, 1024>}, {pipeline_mode = #tpu.pipeline_mode<synchronous>, transform_indices = @transform_2, window_bounds = array<i64: 1, 1024>}, {pipeline_mode = #tpu.pipeline_mode<synchronous>, transform_indices = @transform_3, window_bounds = array<i64: 128, 512>}, {pipeline_mode = #tpu.pipeline_mode<synchronous>, transform_indices = @transform_4, window_bounds = array<i64: 128, 512>}, {pipeline_mode = #tpu.pipeline_mode<synchronous>, transform_indices = @transform_5, window_bounds = array<i64: 256, 128>}, {pipeline_mode = #tpu.pipeline_mode<synchronous>, transform_indices = @transform_6, window_bounds = array<i64: 1, 128>}, {transform_indices = @transform_7, window_bounds = array<i64: 8, 128>}]} {
    %c0 = arith.constant 0 : index
    %c0_0 = arith.constant 0 : index
    %c0_1 = arith.constant 0 : index
    %0 = vector.load %arg1[%c0, %c0_0, %c0_1] : memref<8x8x128xf32, #tpu.memory_space<vmem>>, vector<8x8x128xf32>
    %1 = vector.shape_cast %0 : vector<8x8x128xf32> to vector<64x128xf32>
    %c0_2 = arith.constant 0 : index
    %c0_3 = arith.constant 0 : index
    %2 = vector.load %arg2[%c0_2, %c0_3] : memref<128x1024xf32, #tpu.memory_space<vmem>>, vector<128x1024xf32>
    %cst = arith.constant dense<0.000000e+00> : vector<64x1024xf32>
    %3 = tpu.matmul %1, %2, %cst {dimension_numbers = #tpu.dot_dimension_numbers<[1], [0], [0], [1], [0, 0, 1, 1], [], []>} : vector<64x128xf32>, vector<128x1024xf32>, vector<64x1024xf32> -> vector<64x1024xf32>
    %c0_4 = arith.constant 0 : index
    %c0_5 = arith.constant 0 : index
    %4 = vector.load %arg3[%c0_4, %c0_5] : memref<1x1024xf32, #tpu.memory_space<vmem>>, vector<1x1024xf32>
    %5 = vector.broadcast %4 : vector<1x1024xf32> to vector<64x1024xf32>
    %6 = arith.addf %3, %5 : vector<64x1024xf32>
    %c0_6 = arith.constant 0 : index
    %c0_7 = arith.constant 0 : index
    %7 = vector.load %arg9[%c0_6, %c0_7] : memref<64x1024xf32, #tpu.memory_space<vmem>>, vector<64x1024xf32>
    tpu.vector_store %arg9[%c0_6, %c0_7], %6 {strides = array<i32>} : memref<64x1024xf32, #tpu.memory_space<vmem>>, vector<64x1024xf32>,
    %c0_8 = arith.constant 0 : index
    %c0_9 = arith.constant 0 : index
    %8 = vector.load %arg4[%c0_8, %c0_9] : memref<128x512xf32, #tpu.memory_space<vmem>>, vector<128x512xf32>
    %c0_10 = arith.constant 0 : index
    %c0_11 = arith.constant 0 : index
    %9 = vector.load %arg5[%c0_10, %c0_11] : memref<128x512xf32, #tpu.memory_space<vmem>>, vector<128x512xf32>
    %cst_12 = arith.constant 0.000000e+00 : f32
    %10 = vector.broadcast %cst_12 : f32 to vector<8x128xf32>
    %c0_i32 = arith.constant 0 : i32
    %c8_i32 = arith.constant 8 : i32
    %11 = arith.muli %c0_i32, %c8_i32 : i32
    %12 = tpu.assume_multiple %11, 8 : i32
    %c7_i32 = arith.constant 7 : i32
    %13 = arith.subi %c7_i32, %c0_i32 : i32
    %c8_i32_13 = arith.constant 8 : i32
    %14 = arith.muli %13, %c8_i32_13 : i32
    %15 = tpu.assume_multiple %14, 8 : i32
    %16 = arith.index_cast %12 : i32 to index
    %c0_14 = arith.constant 0 : index
    %17 = vector.load %arg9[%16, %c0_14] : memref<64x1024xf32, #tpu.memory_space<vmem>>, vector<8x512xf32>
    %18 = arith.index_cast %15 : i32 to index
    %c512 = arith.constant 512 : index
    %19 = vector.load %arg9[%18, %c512] : memref<64x1024xf32, #tpu.memory_space<vmem>>, vector<8x512xf32>
    %cst_15 = arith.constant dense<0.000000e+00> : vector<8x512xf32>
    %20 = tpu.matmul %10, %8, %cst_15 {dimension_numbers = #tpu.dot_dimension_numbers<[1], [0], [0], [1], [0, 0, 1, 1], [], []>} : vector<8x128xf32>, vector<128x512xf32>, vector<8x512xf32> -> vector<8x512xf32>
    %21 = arith.addf %20, %17 : vector<8x512xf32>
    %cst_16 = arith.constant dense<0.000000e+00> : vector<8x512xf32>
    %22 = tpu.matmul %10, %9, %cst_16 {dimension_numbers = #tpu.dot_dimension_numbers<[1], [0], [0], [1], [0, 0, 1, 1], [], []>} : vector<8x128xf32>, vector<128x512xf32>, vector<8x512xf32> -> vector<8x512xf32>
    %23 = arith.addf %22, %19 : vector<8x512xf32>
    %24 = vector.extract_strided_slice %21 {offsets = [0, 0], sizes = [8, 128], strides = [1, 1]} : vector<8x512xf32> to vector<8x128xf32>
    %25 = arith.negf %24 : vector<8x128xf32>
    %26 = math.exp %25 : vector<8x128xf32>
    %cst_17 = arith.constant 1.000000e+00 : f32
    %27 = vector.broadcast %cst_17 : f32 to vector<8x128xf32>
    %28 = arith.addf %27, %26 : vector<8x128xf32>
    %29 = arith.divf %27, %28 : vector<8x128xf32>
    %30 = vector.extract_strided_slice %21 {offsets = [0, 128], sizes = [8, 128], strides = [1, 1]} : vector<8x512xf32> to vector<8x128xf32>
    %31 = arith.negf %30 : vector<8x128xf32>
    %32 = math.exp %31 : vector<8x128xf32>
    %cst_18 = arith.constant 1.000000e+00 : f32
    %33 = vector.broadcast %cst_18 : f32 to vector<8x128xf32>
    %34 = arith.addf %33, %32 : vector<8x128xf32>
    %35 = arith.divf %33, %34 : vector<8x128xf32>
    %36 = vector.extract_strided_slice %21 {offsets = [0, 256], sizes = [8, 128], strides = [1, 1]} : vector<8x512xf32> to vector<8x128xf32>
    %37 = math.tanh %36 : vector<8x128xf32>
    %38 = vector.extract_strided_slice %21 {offsets = [0, 384], sizes = [8, 128], strides = [1, 1]} : vector<8x512xf32> to vector<8x128xf32>
    %39 = arith.negf %38 : vector<8x128xf32>
    %40 = math.exp %39 : vector<8x128xf32>
    %cst_19 = arith.constant 1.000000e+00 : f32
    %41 = vector.broadcast %cst_19 : f32 to vector<8x128xf32>
    %42 = arith.addf %41, %40 : vector<8x128xf32>
    %43 = arith.divf %41, %42 : vector<8x128xf32>
    %44 = arith.mulf %35, %10 : vector<8x128xf32>
    %45 = arith.mulf %29, %37 : vector<8x128xf32>
    %46 = arith.addf %44, %45 : vector<8x128xf32>
    %47 = math.tanh %46 : vector<8x128xf32>
    %48 = arith.mulf %43, %47 : vector<8x128xf32>
    %49 = vector.extract_strided_slice %23 {offsets = [0, 0], sizes = [8, 128], strides = [1, 1]} : vector<8x512xf32> to vector<8x128xf32>
    %50 = arith.negf %49 : vector<8x128xf32>
    %51 = math.exp %50 : vector<8x128xf32>
    %cst_20 = arith.constant 1.000000e+00 : f32
    %52 = vector.broadcast %cst_20 : f32 to vector<8x128xf32>
    %53 = arith.addf %52, %51 : vector<8x128xf32>
    %54 = arith.divf %52, %53 : vector<8x128xf32>
    %55 = vector.extract_strided_slice %23 {offsets = [0, 128], sizes = [8, 128], strides = [1, 1]} : vector<8x512xf32> to vector<8x128xf32>
    %56 = arith.negf %55 : vector<8x128xf32>
    %57 = math.exp %56 : vector<8x128xf32>
    %cst_21 = arith.constant 1.000000e+00 : f32
    %58 = vector.broadcast %cst_21 : f32 to vector<8x128xf32>
    %59 = arith.addf %58, %57 : vector<8x128xf32>
    %60 = arith.divf %58, %59 : vector<8x128xf32>
    %61 = vector.extract_strided_slice %23 {offsets = [0, 256], sizes = [8, 128], strides = [1, 1]} : vector<8x512xf32> to vector<8x128xf32>
    %62 = math.tanh %61 : vector<8x128xf32>
    %63 = vector.extract_strided_slice %23 {offsets = [0, 384], sizes = [8, 128], strides = [1, 1]} : vector<8x512xf32> to vector<8x128xf32>
    %64 = arith.negf %63 : vector<8x128xf32>
    %65 = math.exp %64 : vector<8x128xf32>
    %cst_22 = arith.constant 1.000000e+00 : f32
    %66 = vector.broadcast %cst_22 : f32 to vector<8x128xf32>
    %67 = arith.addf %66, %65 : vector<8x128xf32>
    %68 = arith.divf %66, %67 : vector<8x128xf32>
    %69 = arith.mulf %60, %10 : vector<8x128xf32>
    %70 = arith.mulf %54, %62 : vector<8x128xf32>
    %71 = arith.addf %69, %70 : vector<8x128xf32>
    %72 = math.tanh %71 : vector<8x128xf32>
    %73 = arith.mulf %68, %72 : vector<8x128xf32>
    %c1_i32 = arith.constant 1 : i32
    %c8_i32_23 = arith.constant 8 : i32
    %74 = arith.muli %c1_i32, %c8_i32_23 : i32
    %75 = tpu.assume_multiple %74, 8 : i32
    %c7_i32_24 = arith.constant 7 : i32
    %76 = arith.subi %c7_i32_24, %c1_i32 : i32
    %c8_i32_25 = arith.constant 8 : i32
    %77 = arith.muli %76, %c8_i32_25 : i32
    %78 = tpu.assume_multiple %77, 8 : i32
    %79 = arith.index_cast %75 : i32 to index
    %c0_26 = arith.constant 0 : index
    %80 = vector.load %arg9[%79, %c0_26] : memref<64x1024xf32, #tpu.memory_space<vmem>>, vector<8x512xf32>
    %81 = arith.index_cast %78 : i32 to index
    %c512_27 = arith.constant 512 : index
    %82 = vector.load %arg9[%81, %c512_27] : memref<64x1024xf32, #tpu.memory_space<vmem>>, vector<8x512xf32>
    %cst_28 = arith.constant dense<0.000000e+00> : vector<8x512xf32>
    %83 = tpu.matmul %48, %8, %cst_28 {dimension_numbers = #tpu.dot_dimension_numbers<[1], [0], [0], [1], [0, 0, 1, 1], [], []>} : vector<8x128xf32>, vector<128x512xf32>, vector<8x512xf32> -> vector<8x512xf32>
    %84 = arith.addf %83, %80 : vector<8x512xf32>
    %cst_29 = arith.constant dense<0.000000e+00> : vector<8x512xf32>
    %85 = tpu.matmul %73, %9, %cst_29 {dimension_numbers = #tpu.dot_dimension_numbers<[1], [0], [0], [1], [0, 0, 1, 1], [], []>} : vector<8x128xf32>, vector<128x512xf32>, vector<8x512xf32> -> vector<8x512xf32>
    %86 = arith.addf %85, %82 : vector<8x512xf32>
    %87 = vector.extract_strided_slice %84 {offsets = [0, 0], sizes = [8, 128], strides = [1, 1]} : vector<8x512xf32> to vector<8x128xf32>
    %88 = arith.negf %87 : vector<8x128xf32>
    %89 = math.exp %88 : vector<8x128xf32>
    %cst_30 = arith.constant 1.000000e+00 : f32
    %90 = vector.broadcast %cst_30 : f32 to vector<8x128xf32>
    %91 = arith.addf %90, %89 : vector<8x128xf32>
    %92 = arith.divf %90, %91 : vector<8x128xf32>
    %93 = vector.extract_strided_slice %84 {offsets = [0, 128], sizes = [8, 128], strides = [1, 1]} : vector<8x512xf32> to vector<8x128xf32>
    %94 = arith.negf %93 : vector<8x128xf32>
    %95 = math.exp %94 : vector<8x128xf32>
    %cst_31 = arith.constant 1.000000e+00 : f32
    %96 = vector.broadcast %cst_31 : f32 to vector<8x128xf32>
    %97 = arith.addf %96, %95 : vector<8x128xf32>
    %98 = arith.divf %96, %97 : vector<8x128xf32>
    %99 = vector.extract_strided_slice %84 {offsets = [0, 256], sizes = [8, 128], strides = [1, 1]} : vector<8x512xf32> to vector<8x128xf32>
    %100 = math.tanh %99 : vector<8x128xf32>
    %101 = vector.extract_strided_slice %84 {offsets = [0, 384], sizes = [8, 128], strides = [1, 1]} : vector<8x512xf32> to vector<8x128xf32>
    %102 = arith.negf %101 : vector<8x128xf32>
    %103 = math.exp %102 : vector<8x128xf32>
    %cst_32 = arith.constant 1.000000e+00 : f32
    %104 = vector.broadcast %cst_32 : f32 to vector<8x128xf32>
    %105 = arith.addf %104, %103 : vector<8x128xf32>
    %106 = arith.divf %104, %105 : vector<8x128xf32>
    %107 = arith.mulf %98, %46 : vector<8x128xf32>
    %108 = arith.mulf %92, %100 : vector<8x128xf32>
    %109 = arith.addf %107, %108 : vector<8x128xf32>
    %110 = math.tanh %109 : vector<8x128xf32>
    %111 = arith.mulf %106, %110 : vector<8x128xf32>
    %112 = vector.extract_strided_slice %86 {offsets = [0, 0], sizes = [8, 128], strides = [1, 1]} : vector<8x512xf32> to vector<8x128xf32>
    %113 = arith.negf %112 : vector<8x128xf32>
    %114 = math.exp %113 : vector<8x128xf32>
    %cst_33 = arith.constant 1.000000e+00 : f32
    %115 = vector.broadcast %cst_33 : f32 to vector<8x128xf32>
    %116 = arith.addf %115, %114 : vector<8x128xf32>
    %117 = arith.divf %115, %116 : vector<8x128xf32>
    %118 = vector.extract_strided_slice %86 {offsets = [0, 128], sizes = [8, 128], strides = [1, 1]} : vector<8x512xf32> to vector<8x128xf32>
    %119 = arith.negf %118 : vector<8x128xf32>
    %120 = math.exp %119 : vector<8x128xf32>
    %cst_34 = arith.constant 1.000000e+00 : f32
    %121 = vector.broadcast %cst_34 : f32 to vector<8x128xf32>
    %122 = arith.addf %121, %120 : vector<8x128xf32>
    %123 = arith.divf %121, %122 : vector<8x128xf32>
    %124 = vector.extract_strided_slice %86 {offsets = [0, 256], sizes = [8, 128], strides = [1, 1]} : vector<8x512xf32> to vector<8x128xf32>
    %125 = math.tanh %124 : vector<8x128xf32>
    %126 = vector.extract_strided_slice %86 {offsets = [0, 384], sizes = [8, 128], strides = [1, 1]} : vector<8x512xf32> to vector<8x128xf32>
    %127 = arith.negf %126 : vector<8x128xf32>
    %128 = math.exp %127 : vector<8x128xf32>
    %cst_35 = arith.constant 1.000000e+00 : f32
    %129 = vector.broadcast %cst_35 : f32 to vector<8x128xf32>
    %130 = arith.addf %129, %128 : vector<8x128xf32>
    %131 = arith.divf %129, %130 : vector<8x128xf32>
    %132 = arith.mulf %123, %71 : vector<8x128xf32>
    %133 = arith.mulf %117, %125 : vector<8x128xf32>
    %134 = arith.addf %132, %133 : vector<8x128xf32>
    %135 = math.tanh %134 : vector<8x128xf32>
    %136 = arith.mulf %131, %135 : vector<8x128xf32>
    %c2_i32 = arith.constant 2 : i32
    %c8_i32_36 = arith.constant 8 : i32
    %137 = arith.muli %c2_i32, %c8_i32_36 : i32
    %138 = tpu.assume_multiple %137, 8 : i32
    %c7_i32_37 = arith.constant 7 : i32
    %139 = arith.subi %c7_i32_37, %c2_i32 : i32
    %c8_i32_38 = arith.constant 8 : i32
    %140 = arith.muli %139, %c8_i32_38 : i32
    %141 = tpu.assume_multiple %140, 8 : i32
    %142 = arith.index_cast %138 : i32 to index
    %c0_39 = arith.constant 0 : index
    %143 = vector.load %arg9[%142, %c0_39] : memref<64x1024xf32, #tpu.memory_space<vmem>>, vector<8x512xf32>
    %144 = arith.index_cast %141 : i32 to index
    %c512_40 = arith.constant 512 : index
    %145 = vector.load %arg9[%144, %c512_40] : memref<64x1024xf32, #tpu.memory_space<vmem>>, vector<8x512xf32>
    %cst_41 = arith.constant dense<0.000000e+00> : vector<8x512xf32>
    %146 = tpu.matmul %111, %8, %cst_41 {dimension_numbers = #tpu.dot_dimension_numbers<[1], [0], [0], [1], [0, 0, 1, 1], [], []>} : vector<8x128xf32>, vector<128x512xf32>, vector<8x512xf32> -> vector<8x512xf32>
    %147 = arith.addf %146, %143 : vector<8x512xf32>
    %cst_42 = arith.constant dense<0.000000e+00> : vector<8x512xf32>
    %148 = tpu.matmul %136, %9, %cst_42 {dimension_numbers = #tpu.dot_dimension_numbers<[1], [0], [0], [1], [0, 0, 1, 1], [], []>} : vector<8x128xf32>, vector<128x512xf32>, vector<8x512xf32> -> vector<8x512xf32>
    %149 = arith.addf %148, %145 : vector<8x512xf32>
    %150 = vector.extract_strided_slice %147 {offsets = [0, 0], sizes = [8, 128], strides = [1, 1]} : vector<8x512xf32> to vector<8x128xf32>
    %151 = arith.negf %150 : vector<8x128xf32>
    %152 = math.exp %151 : vector<8x128xf32>
    %cst_43 = arith.constant 1.000000e+00 : f32
    %153 = vector.broadcast %cst_43 : f32 to vector<8x128xf32>
    %154 = arith.addf %153, %152 : vector<8x128xf32>
    %155 = arith.divf %153, %154 : vector<8x128xf32>
    %156 = vector.extract_strided_slice %147 {offsets = [0, 128], sizes = [8, 128], strides = [1, 1]} : vector<8x512xf32> to vector<8x128xf32>
    %157 = arith.negf %156 : vector<8x128xf32>
    %158 = math.exp %157 : vector<8x128xf32>
    %cst_44 = arith.constant 1.000000e+00 : f32
    %159 = vector.broadcast %cst_44 : f32 to vector<8x128xf32>
    %160 = arith.addf %159, %158 : vector<8x128xf32>
    %161 = arith.divf %159, %160 : vector<8x128xf32>
    %162 = vector.extract_strided_slice %147 {offsets = [0, 256], sizes = [8, 128], strides = [1, 1]} : vector<8x512xf32> to vector<8x128xf32>
    %163 = math.tanh %162 : vector<8x128xf32>
    %164 = vector.extract_strided_slice %147 {offsets = [0, 384], sizes = [8, 128], strides = [1, 1]} : vector<8x512xf32> to vector<8x128xf32>
    %165 = arith.negf %164 : vector<8x128xf32>
    %166 = math.exp %165 : vector<8x128xf32>
    %cst_45 = arith.constant 1.000000e+00 : f32
    %167 = vector.broadcast %cst_45 : f32 to vector<8x128xf32>
    %168 = arith.addf %167, %166 : vector<8x128xf32>
    %169 = arith.divf %167, %168 : vector<8x128xf32>
    %170 = arith.mulf %161, %109 : vector<8x128xf32>
    %171 = arith.mulf %155, %163 : vector<8x128xf32>
    %172 = arith.addf %170, %171 : vector<8x128xf32>
    %173 = math.tanh %172 : vector<8x128xf32>
    %174 = arith.mulf %169, %173 : vector<8x128xf32>
    %175 = vector.extract_strided_slice %149 {offsets = [0, 0], sizes = [8, 128], strides = [1, 1]} : vector<8x512xf32> to vector<8x128xf32>
    %176 = arith.negf %175 : vector<8x128xf32>
    %177 = math.exp %176 : vector<8x128xf32>
    %cst_46 = arith.constant 1.000000e+00 : f32
    %178 = vector.broadcast %cst_46 : f32 to vector<8x128xf32>
    %179 = arith.addf %178, %177 : vector<8x128xf32>
    %180 = arith.divf %178, %179 : vector<8x128xf32>
    %181 = vector.extract_strided_slice %149 {offsets = [0, 128], sizes = [8, 128], strides = [1, 1]} : vector<8x512xf32> to vector<8x128xf32>
    %182 = arith.negf %181 : vector<8x128xf32>
    %183 = math.exp %182 : vector<8x128xf32>
    %cst_47 = arith.constant 1.000000e+00 : f32
    %184 = vector.broadcast %cst_47 : f32 to vector<8x128xf32>
    %185 = arith.addf %184, %183 : vector<8x128xf32>
    %186 = arith.divf %184, %185 : vector<8x128xf32>
    %187 = vector.extract_strided_slice %149 {offsets = [0, 256], sizes = [8, 128], strides = [1, 1]} : vector<8x512xf32> to vector<8x128xf32>
    %188 = math.tanh %187 : vector<8x128xf32>
    %189 = vector.extract_strided_slice %149 {offsets = [0, 384], sizes = [8, 128], strides = [1, 1]} : vector<8x512xf32> to vector<8x128xf32>
    %190 = arith.negf %189 : vector<8x128xf32>
    %191 = math.exp %190 : vector<8x128xf32>
    %cst_48 = arith.constant 1.000000e+00 : f32
    %192 = vector.broadcast %cst_48 : f32 to vector<8x128xf32>
    %193 = arith.addf %192, %191 : vector<8x128xf32>
    %194 = arith.divf %192, %193 : vector<8x128xf32>
    %195 = arith.mulf %186, %134 : vector<8x128xf32>
    %196 = arith.mulf %180, %188 : vector<8x128xf32>
    %197 = arith.addf %195, %196 : vector<8x128xf32>
    %198 = math.tanh %197 : vector<8x128xf32>
    %199 = arith.mulf %194, %198 : vector<8x128xf32>
    %c3_i32 = arith.constant 3 : i32
    %c8_i32_49 = arith.constant 8 : i32
    %200 = arith.muli %c3_i32, %c8_i32_49 : i32
    %201 = tpu.assume_multiple %200, 8 : i32
    %c7_i32_50 = arith.constant 7 : i32
    %202 = arith.subi %c7_i32_50, %c3_i32 : i32
    %c8_i32_51 = arith.constant 8 : i32
    %203 = arith.muli %202, %c8_i32_51 : i32
    %204 = tpu.assume_multiple %203, 8 : i32
    %205 = arith.index_cast %201 : i32 to index
    %c0_52 = arith.constant 0 : index
    %206 = vector.load %arg9[%205, %c0_52] : memref<64x1024xf32, #tpu.memory_space<vmem>>, vector<8x512xf32>
    %207 = arith.index_cast %204 : i32 to index
    %c512_53 = arith.constant 512 : index
    %208 = vector.load %arg9[%207, %c512_53] : memref<64x1024xf32, #tpu.memory_space<vmem>>, vector<8x512xf32>
    %cst_54 = arith.constant dense<0.000000e+00> : vector<8x512xf32>
    %209 = tpu.matmul %174, %8, %cst_54 {dimension_numbers = #tpu.dot_dimension_numbers<[1], [0], [0], [1], [0, 0, 1, 1], [], []>} : vector<8x128xf32>, vector<128x512xf32>, vector<8x512xf32> -> vector<8x512xf32>
    %210 = arith.addf %209, %206 : vector<8x512xf32>
    %cst_55 = arith.constant dense<0.000000e+00> : vector<8x512xf32>
    %211 = tpu.matmul %199, %9, %cst_55 {dimension_numbers = #tpu.dot_dimension_numbers<[1], [0], [0], [1], [0, 0, 1, 1], [], []>} : vector<8x128xf32>, vector<128x512xf32>, vector<8x512xf32> -> vector<8x512xf32>
    %212 = arith.addf %211, %208 : vector<8x512xf32>
    %213 = vector.extract_strided_slice %210 {offsets = [0, 0], sizes = [8, 128], strides = [1, 1]} : vector<8x512xf32> to vector<8x128xf32>
    %214 = arith.negf %213 : vector<8x128xf32>
    %215 = math.exp %214 : vector<8x128xf32>
    %cst_56 = arith.constant 1.000000e+00 : f32
    %216 = vector.broadcast %cst_56 : f32 to vector<8x128xf32>
    %217 = arith.addf %216, %215 : vector<8x128xf32>
    %218 = arith.divf %216, %217 : vector<8x128xf32>
    %219 = vector.extract_strided_slice %210 {offsets = [0, 128], sizes = [8, 128], strides = [1, 1]} : vector<8x512xf32> to vector<8x128xf32>
    %220 = arith.negf %219 : vector<8x128xf32>
    %221 = math.exp %220 : vector<8x128xf32>
    %cst_57 = arith.constant 1.000000e+00 : f32
    %222 = vector.broadcast %cst_57 : f32 to vector<8x128xf32>
    %223 = arith.addf %222, %221 : vector<8x128xf32>
    %224 = arith.divf %222, %223 : vector<8x128xf32>
    %225 = vector.extract_strided_slice %210 {offsets = [0, 256], sizes = [8, 128], strides = [1, 1]} : vector<8x512xf32> to vector<8x128xf32>
    %226 = math.tanh %225 : vector<8x128xf32>
    %227 = vector.extract_strided_slice %210 {offsets = [0, 384], sizes = [8, 128], strides = [1, 1]} : vector<8x512xf32> to vector<8x128xf32>
    %228 = arith.negf %227 : vector<8x128xf32>
    %229 = math.exp %228 : vector<8x128xf32>
    %cst_58 = arith.constant 1.000000e+00 : f32
    %230 = vector.broadcast %cst_58 : f32 to vector<8x128xf32>
    %231 = arith.addf %230, %229 : vector<8x128xf32>
    %232 = arith.divf %230, %231 : vector<8x128xf32>
    %233 = arith.mulf %224, %172 : vector<8x128xf32>
    %234 = arith.mulf %218, %226 : vector<8x128xf32>
    %235 = arith.addf %233, %234 : vector<8x128xf32>
    %236 = math.tanh %235 : vector<8x128xf32>
    %237 = arith.mulf %232, %236 : vector<8x128xf32>
    %238 = vector.extract_strided_slice %212 {offsets = [0, 0], sizes = [8, 128], strides = [1, 1]} : vector<8x512xf32> to vector<8x128xf32>
    %239 = arith.negf %238 : vector<8x128xf32>
    %240 = math.exp %239 : vector<8x128xf32>
    %cst_59 = arith.constant 1.000000e+00 : f32
    %241 = vector.broadcast %cst_59 : f32 to vector<8x128xf32>
    %242 = arith.addf %241, %240 : vector<8x128xf32>
    %243 = arith.divf %241, %242 : vector<8x128xf32>
    %244 = vector.extract_strided_slice %212 {offsets = [0, 128], sizes = [8, 128], strides = [1, 1]} : vector<8x512xf32> to vector<8x128xf32>
    %245 = arith.negf %244 : vector<8x128xf32>
    %246 = math.exp %245 : vector<8x128xf32>
    %cst_60 = arith.constant 1.000000e+00 : f32
    %247 = vector.broadcast %cst_60 : f32 to vector<8x128xf32>
    %248 = arith.addf %247, %246 : vector<8x128xf32>
    %249 = arith.divf %247, %248 : vector<8x128xf32>
    %250 = vector.extract_strided_slice %212 {offsets = [0, 256], sizes = [8, 128], strides = [1, 1]} : vector<8x512xf32> to vector<8x128xf32>
    %251 = math.tanh %250 : vector<8x128xf32>
    %252 = vector.extract_strided_slice %212 {offsets = [0, 384], sizes = [8, 128], strides = [1, 1]} : vector<8x512xf32> to vector<8x128xf32>
    %253 = arith.negf %252 : vector<8x128xf32>
    %254 = math.exp %253 : vector<8x128xf32>
    %cst_61 = arith.constant 1.000000e+00 : f32
    %255 = vector.broadcast %cst_61 : f32 to vector<8x128xf32>
    %256 = arith.addf %255, %254 : vector<8x128xf32>
    %257 = arith.divf %255, %256 : vector<8x128xf32>
    %258 = arith.mulf %249, %197 : vector<8x128xf32>
    %259 = arith.mulf %243, %251 : vector<8x128xf32>
    %260 = arith.addf %258, %259 : vector<8x128xf32>
    %261 = math.tanh %260 : vector<8x128xf32>
    %262 = arith.mulf %257, %261 : vector<8x128xf32>
    %c4_i32 = arith.constant 4 : i32
    %c8_i32_62 = arith.constant 8 : i32
    %263 = arith.muli %c4_i32, %c8_i32_62 : i32
    %264 = tpu.assume_multiple %263, 8 : i32
    %c7_i32_63 = arith.constant 7 : i32
    %265 = arith.subi %c7_i32_63, %c4_i32 : i32
    %c8_i32_64 = arith.constant 8 : i32
    %266 = arith.muli %265, %c8_i32_64 : i32
    %267 = tpu.assume_multiple %266, 8 : i32
    %268 = arith.index_cast %264 : i32 to index
    %c0_65 = arith.constant 0 : index
    %269 = vector.load %arg9[%268, %c0_65] : memref<64x1024xf32, #tpu.memory_space<vmem>>, vector<8x512xf32>
    %270 = arith.index_cast %267 : i32 to index
    %c512_66 = arith.constant 512 : index
    %271 = vector.load %arg9[%270, %c512_66] : memref<64x1024xf32, #tpu.memory_space<vmem>>, vector<8x512xf32>
    %cst_67 = arith.constant dense<0.000000e+00> : vector<8x512xf32>
    %272 = tpu.matmul %237, %8, %cst_67 {dimension_numbers = #tpu.dot_dimension_numbers<[1], [0], [0], [1], [0, 0, 1, 1], [], []>} : vector<8x128xf32>, vector<128x512xf32>, vector<8x512xf32> -> vector<8x512xf32>
    %273 = arith.addf %272, %269 : vector<8x512xf32>
    %cst_68 = arith.constant dense<0.000000e+00> : vector<8x512xf32>
    %274 = tpu.matmul %262, %9, %cst_68 {dimension_numbers = #tpu.dot_dimension_numbers<[1], [0], [0], [1], [0, 0, 1, 1], [], []>} : vector<8x128xf32>, vector<128x512xf32>, vector<8x512xf32> -> vector<8x512xf32>
    %275 = arith.addf %274, %271 : vector<8x512xf32>
    %276 = vector.extract_strided_slice %273 {offsets = [0, 0], sizes = [8, 128], strides = [1, 1]} : vector<8x512xf32> to vector<8x128xf32>
    %277 = arith.negf %276 : vector<8x128xf32>
    %278 = math.exp %277 : vector<8x128xf32>
    %cst_69 = arith.constant 1.000000e+00 : f32
    %279 = vector.broadcast %cst_69 : f32 to vector<8x128xf32>
    %280 = arith.addf %279, %278 : vector<8x128xf32>
    %281 = arith.divf %279, %280 : vector<8x128xf32>
    %282 = vector.extract_strided_slice %273 {offsets = [0, 128], sizes = [8, 128], strides = [1, 1]} : vector<8x512xf32> to vector<8x128xf32>
    %283 = arith.negf %282 : vector<8x128xf32>
    %284 = math.exp %283 : vector<8x128xf32>
    %cst_70 = arith.constant 1.000000e+00 : f32
    %285 = vector.broadcast %cst_70 : f32 to vector<8x128xf32>
    %286 = arith.addf %285, %284 : vector<8x128xf32>
    %287 = arith.divf %285, %286 : vector<8x128xf32>
    %288 = vector.extract_strided_slice %273 {offsets = [0, 256], sizes = [8, 128], strides = [1, 1]} : vector<8x512xf32> to vector<8x128xf32>
    %289 = math.tanh %288 : vector<8x128xf32>
    %290 = vector.extract_strided_slice %273 {offsets = [0, 384], sizes = [8, 128], strides = [1, 1]} : vector<8x512xf32> to vector<8x128xf32>
    %291 = arith.negf %290 : vector<8x128xf32>
    %292 = math.exp %291 : vector<8x128xf32>
    %cst_71 = arith.constant 1.000000e+00 : f32
    %293 = vector.broadcast %cst_71 : f32 to vector<8x128xf32>
    %294 = arith.addf %293, %292 : vector<8x128xf32>
    %295 = arith.divf %293, %294 : vector<8x128xf32>
    %296 = arith.mulf %287, %235 : vector<8x128xf32>
    %297 = arith.mulf %281, %289 : vector<8x128xf32>
    %298 = arith.addf %296, %297 : vector<8x128xf32>
    %299 = math.tanh %298 : vector<8x128xf32>
    %300 = arith.mulf %295, %299 : vector<8x128xf32>
    %301 = vector.extract_strided_slice %275 {offsets = [0, 0], sizes = [8, 128], strides = [1, 1]} : vector<8x512xf32> to vector<8x128xf32>
    %302 = arith.negf %301 : vector<8x128xf32>
    %303 = math.exp %302 : vector<8x128xf32>
    %cst_72 = arith.constant 1.000000e+00 : f32
    %304 = vector.broadcast %cst_72 : f32 to vector<8x128xf32>
    %305 = arith.addf %304, %303 : vector<8x128xf32>
    %306 = arith.divf %304, %305 : vector<8x128xf32>
    %307 = vector.extract_strided_slice %275 {offsets = [0, 128], sizes = [8, 128], strides = [1, 1]} : vector<8x512xf32> to vector<8x128xf32>
    %308 = arith.negf %307 : vector<8x128xf32>
    %309 = math.exp %308 : vector<8x128xf32>
    %cst_73 = arith.constant 1.000000e+00 : f32
    %310 = vector.broadcast %cst_73 : f32 to vector<8x128xf32>
    %311 = arith.addf %310, %309 : vector<8x128xf32>
    %312 = arith.divf %310, %311 : vector<8x128xf32>
    %313 = vector.extract_strided_slice %275 {offsets = [0, 256], sizes = [8, 128], strides = [1, 1]} : vector<8x512xf32> to vector<8x128xf32>
    %314 = math.tanh %313 : vector<8x128xf32>
    %315 = vector.extract_strided_slice %275 {offsets = [0, 384], sizes = [8, 128], strides = [1, 1]} : vector<8x512xf32> to vector<8x128xf32>
    %316 = arith.negf %315 : vector<8x128xf32>
    %317 = math.exp %316 : vector<8x128xf32>
    %cst_74 = arith.constant 1.000000e+00 : f32
    %318 = vector.broadcast %cst_74 : f32 to vector<8x128xf32>
    %319 = arith.addf %318, %317 : vector<8x128xf32>
    %320 = arith.divf %318, %319 : vector<8x128xf32>
    %321 = arith.mulf %312, %260 : vector<8x128xf32>
    %322 = arith.mulf %306, %314 : vector<8x128xf32>
    %323 = arith.addf %321, %322 : vector<8x128xf32>
    %324 = math.tanh %323 : vector<8x128xf32>
    %325 = arith.mulf %320, %324 : vector<8x128xf32>
    %c5_i32 = arith.constant 5 : i32
    %c8_i32_75 = arith.constant 8 : i32
    %326 = arith.muli %c5_i32, %c8_i32_75 : i32
    %327 = tpu.assume_multiple %326, 8 : i32
    %c7_i32_76 = arith.constant 7 : i32
    %328 = arith.subi %c7_i32_76, %c5_i32 : i32
    %c8_i32_77 = arith.constant 8 : i32
    %329 = arith.muli %328, %c8_i32_77 : i32
    %330 = tpu.assume_multiple %329, 8 : i32
    %331 = arith.index_cast %327 : i32 to index
    %c0_78 = arith.constant 0 : index
    %332 = vector.load %arg9[%331, %c0_78] : memref<64x1024xf32, #tpu.memory_space<vmem>>, vector<8x512xf32>
    %333 = arith.index_cast %330 : i32 to index
    %c512_79 = arith.constant 512 : index
    %334 = vector.load %arg9[%333, %c512_79] : memref<64x1024xf32, #tpu.memory_space<vmem>>, vector<8x512xf32>
    %cst_80 = arith.constant dense<0.000000e+00> : vector<8x512xf32>
    %335 = tpu.matmul %300, %8, %cst_80 {dimension_numbers = #tpu.dot_dimension_numbers<[1], [0], [0], [1], [0, 0, 1, 1], [], []>} : vector<8x128xf32>, vector<128x512xf32>, vector<8x512xf32> -> vector<8x512xf32>
    %336 = arith.addf %335, %332 : vector<8x512xf32>
    %cst_81 = arith.constant dense<0.000000e+00> : vector<8x512xf32>
    %337 = tpu.matmul %325, %9, %cst_81 {dimension_numbers = #tpu.dot_dimension_numbers<[1], [0], [0], [1], [0, 0, 1, 1], [], []>} : vector<8x128xf32>, vector<128x512xf32>, vector<8x512xf32> -> vector<8x512xf32>
    %338 = arith.addf %337, %334 : vector<8x512xf32>
    %339 = vector.extract_strided_slice %336 {offsets = [0, 0], sizes = [8, 128], strides = [1, 1]} : vector<8x512xf32> to vector<8x128xf32>
    %340 = arith.negf %339 : vector<8x128xf32>
    %341 = math.exp %340 : vector<8x128xf32>
    %cst_82 = arith.constant 1.000000e+00 : f32
    %342 = vector.broadcast %cst_82 : f32 to vector<8x128xf32>
    %343 = arith.addf %342, %341 : vector<8x128xf32>
    %344 = arith.divf %342, %343 : vector<8x128xf32>
    %345 = vector.extract_strided_slice %336 {offsets = [0, 128], sizes = [8, 128], strides = [1, 1]} : vector<8x512xf32> to vector<8x128xf32>
    %346 = arith.negf %345 : vector<8x128xf32>
    %347 = math.exp %346 : vector<8x128xf32>
    %cst_83 = arith.constant 1.000000e+00 : f32
    %348 = vector.broadcast %cst_83 : f32 to vector<8x128xf32>
    %349 = arith.addf %348, %347 : vector<8x128xf32>
    %350 = arith.divf %348, %349 : vector<8x128xf32>
    %351 = vector.extract_strided_slice %336 {offsets = [0, 256], sizes = [8, 128], strides = [1, 1]} : vector<8x512xf32> to vector<8x128xf32>
    %352 = math.tanh %351 : vector<8x128xf32>
    %353 = vector.extract_strided_slice %336 {offsets = [0, 384], sizes = [8, 128], strides = [1, 1]} : vector<8x512xf32> to vector<8x128xf32>
    %354 = arith.negf %353 : vector<8x128xf32>
    %355 = math.exp %354 : vector<8x128xf32>
    %cst_84 = arith.constant 1.000000e+00 : f32
    %356 = vector.broadcast %cst_84 : f32 to vector<8x128xf32>
    %357 = arith.addf %356, %355 : vector<8x128xf32>
    %358 = arith.divf %356, %357 : vector<8x128xf32>
    %359 = arith.mulf %350, %298 : vector<8x128xf32>
    %360 = arith.mulf %344, %352 : vector<8x128xf32>
    %361 = arith.addf %359, %360 : vector<8x128xf32>
    %362 = math.tanh %361 : vector<8x128xf32>
    %363 = arith.mulf %358, %362 : vector<8x128xf32>
    %364 = vector.extract_strided_slice %338 {offsets = [0, 0], sizes = [8, 128], strides = [1, 1]} : vector<8x512xf32> to vector<8x128xf32>
    %365 = arith.negf %364 : vector<8x128xf32>
    %366 = math.exp %365 : vector<8x128xf32>
    %cst_85 = arith.constant 1.000000e+00 : f32
    %367 = vector.broadcast %cst_85 : f32 to vector<8x128xf32>
    %368 = arith.addf %367, %366 : vector<8x128xf32>
    %369 = arith.divf %367, %368 : vector<8x128xf32>
    %370 = vector.extract_strided_slice %338 {offsets = [0, 128], sizes = [8, 128], strides = [1, 1]} : vector<8x512xf32> to vector<8x128xf32>
    %371 = arith.negf %370 : vector<8x128xf32>
    %372 = math.exp %371 : vector<8x128xf32>
    %cst_86 = arith.constant 1.000000e+00 : f32
    %373 = vector.broadcast %cst_86 : f32 to vector<8x128xf32>
    %374 = arith.addf %373, %372 : vector<8x128xf32>
    %375 = arith.divf %373, %374 : vector<8x128xf32>
    %376 = vector.extract_strided_slice %338 {offsets = [0, 256], sizes = [8, 128], strides = [1, 1]} : vector<8x512xf32> to vector<8x128xf32>
    %377 = math.tanh %376 : vector<8x128xf32>
    %378 = vector.extract_strided_slice %338 {offsets = [0, 384], sizes = [8, 128], strides = [1, 1]} : vector<8x512xf32> to vector<8x128xf32>
    %379 = arith.negf %378 : vector<8x128xf32>
    %380 = math.exp %379 : vector<8x128xf32>
    %cst_87 = arith.constant 1.000000e+00 : f32
    %381 = vector.broadcast %cst_87 : f32 to vector<8x128xf32>
    %382 = arith.addf %381, %380 : vector<8x128xf32>
    %383 = arith.divf %381, %382 : vector<8x128xf32>
    %384 = arith.mulf %375, %323 : vector<8x128xf32>
    %385 = arith.mulf %369, %377 : vector<8x128xf32>
    %386 = arith.addf %384, %385 : vector<8x128xf32>
    %387 = math.tanh %386 : vector<8x128xf32>
    %388 = arith.mulf %383, %387 : vector<8x128xf32>
    %c6_i32 = arith.constant 6 : i32
    %c8_i32_88 = arith.constant 8 : i32
    %389 = arith.muli %c6_i32, %c8_i32_88 : i32
    %390 = tpu.assume_multiple %389, 8 : i32
    %c7_i32_89 = arith.constant 7 : i32
    %391 = arith.subi %c7_i32_89, %c6_i32 : i32
    %c8_i32_90 = arith.constant 8 : i32
    %392 = arith.muli %391, %c8_i32_90 : i32
    %393 = tpu.assume_multiple %392, 8 : i32
    %394 = arith.index_cast %390 : i32 to index
    %c0_91 = arith.constant 0 : index
    %395 = vector.load %arg9[%394, %c0_91] : memref<64x1024xf32, #tpu.memory_space<vmem>>, vector<8x512xf32>
    %396 = arith.index_cast %393 : i32 to index
    %c512_92 = arith.constant 512 : index
    %397 = vector.load %arg9[%396, %c512_92] : memref<64x1024xf32, #tpu.memory_space<vmem>>, vector<8x512xf32>
    %cst_93 = arith.constant dense<0.000000e+00> : vector<8x512xf32>
    %398 = tpu.matmul %363, %8, %cst_93 {dimension_numbers = #tpu.dot_dimension_numbers<[1], [0], [0], [1], [0, 0, 1, 1], [], []>} : vector<8x128xf32>, vector<128x512xf32>, vector<8x512xf32> -> vector<8x512xf32>
    %399 = arith.addf %398, %395 : vector<8x512xf32>
    %cst_94 = arith.constant dense<0.000000e+00> : vector<8x512xf32>
    %400 = tpu.matmul %388, %9, %cst_94 {dimension_numbers = #tpu.dot_dimension_numbers<[1], [0], [0], [1], [0, 0, 1, 1], [], []>} : vector<8x128xf32>, vector<128x512xf32>, vector<8x512xf32> -> vector<8x512xf32>
    %401 = arith.addf %400, %397 : vector<8x512xf32>
    %402 = vector.extract_strided_slice %399 {offsets = [0, 0], sizes = [8, 128], strides = [1, 1]} : vector<8x512xf32> to vector<8x128xf32>
    %403 = arith.negf %402 : vector<8x128xf32>
    %404 = math.exp %403 : vector<8x128xf32>
    %cst_95 = arith.constant 1.000000e+00 : f32
    %405 = vector.broadcast %cst_95 : f32 to vector<8x128xf32>
    %406 = arith.addf %405, %404 : vector<8x128xf32>
    %407 = arith.divf %405, %406 : vector<8x128xf32>
    %408 = vector.extract_strided_slice %399 {offsets = [0, 128], sizes = [8, 128], strides = [1, 1]} : vector<8x512xf32> to vector<8x128xf32>
    %409 = arith.negf %408 : vector<8x128xf32>
    %410 = math.exp %409 : vector<8x128xf32>
    %cst_96 = arith.constant 1.000000e+00 : f32
    %411 = vector.broadcast %cst_96 : f32 to vector<8x128xf32>
    %412 = arith.addf %411, %410 : vector<8x128xf32>
    %413 = arith.divf %411, %412 : vector<8x128xf32>
    %414 = vector.extract_strided_slice %399 {offsets = [0, 256], sizes = [8, 128], strides = [1, 1]} : vector<8x512xf32> to vector<8x128xf32>
    %415 = math.tanh %414 : vector<8x128xf32>
    %416 = vector.extract_strided_slice %399 {offsets = [0, 384], sizes = [8, 128], strides = [1, 1]} : vector<8x512xf32> to vector<8x128xf32>
    %417 = arith.negf %416 : vector<8x128xf32>
    %418 = math.exp %417 : vector<8x128xf32>
    %cst_97 = arith.constant 1.000000e+00 : f32
    %419 = vector.broadcast %cst_97 : f32 to vector<8x128xf32>
    %420 = arith.addf %419, %418 : vector<8x128xf32>
    %421 = arith.divf %419, %420 : vector<8x128xf32>
    %422 = arith.mulf %413, %361 : vector<8x128xf32>
    %423 = arith.mulf %407, %415 : vector<8x128xf32>
    %424 = arith.addf %422, %423 : vector<8x128xf32>
    %425 = math.tanh %424 : vector<8x128xf32>
    %426 = arith.mulf %421, %425 : vector<8x128xf32>
    %427 = vector.extract_strided_slice %401 {offsets = [0, 0], sizes = [8, 128], strides = [1, 1]} : vector<8x512xf32> to vector<8x128xf32>
    %428 = arith.negf %427 : vector<8x128xf32>
    %429 = math.exp %428 : vector<8x128xf32>
    %cst_98 = arith.constant 1.000000e+00 : f32
    %430 = vector.broadcast %cst_98 : f32 to vector<8x128xf32>
    %431 = arith.addf %430, %429 : vector<8x128xf32>
    %432 = arith.divf %430, %431 : vector<8x128xf32>
    %433 = vector.extract_strided_slice %401 {offsets = [0, 128], sizes = [8, 128], strides = [1, 1]} : vector<8x512xf32> to vector<8x128xf32>
    %434 = arith.negf %433 : vector<8x128xf32>
    %435 = math.exp %434 : vector<8x128xf32>
    %cst_99 = arith.constant 1.000000e+00 : f32
    %436 = vector.broadcast %cst_99 : f32 to vector<8x128xf32>
    %437 = arith.addf %436, %435 : vector<8x128xf32>
    %438 = arith.divf %436, %437 : vector<8x128xf32>
    %439 = vector.extract_strided_slice %401 {offsets = [0, 256], sizes = [8, 128], strides = [1, 1]} : vector<8x512xf32> to vector<8x128xf32>
    %440 = math.tanh %439 : vector<8x128xf32>
    %441 = vector.extract_strided_slice %401 {offsets = [0, 384], sizes = [8, 128], strides = [1, 1]} : vector<8x512xf32> to vector<8x128xf32>
    %442 = arith.negf %441 : vector<8x128xf32>
    %443 = math.exp %442 : vector<8x128xf32>
    %cst_100 = arith.constant 1.000000e+00 : f32
    %444 = vector.broadcast %cst_100 : f32 to vector<8x128xf32>
    %445 = arith.addf %444, %443 : vector<8x128xf32>
    %446 = arith.divf %444, %445 : vector<8x128xf32>
    %447 = arith.mulf %438, %386 : vector<8x128xf32>
    %448 = arith.mulf %432, %440 : vector<8x128xf32>
    %449 = arith.addf %447, %448 : vector<8x128xf32>
    %450 = math.tanh %449 : vector<8x128xf32>
    %451 = arith.mulf %446, %450 : vector<8x128xf32>
    %c7_i32_101 = arith.constant 7 : i32
    %c8_i32_102 = arith.constant 8 : i32
    %452 = arith.muli %c7_i32_101, %c8_i32_102 : i32
    %453 = tpu.assume_multiple %452, 8 : i32
    %c7_i32_103 = arith.constant 7 : i32
    %454 = arith.subi %c7_i32_103, %c7_i32_101 : i32
    %c8_i32_104 = arith.constant 8 : i32
    %455 = arith.muli %454, %c8_i32_104 : i32
    %456 = tpu.assume_multiple %455, 8 : i32
    %457 = arith.index_cast %453 : i32 to index
    %c0_105 = arith.constant 0 : index
    %458 = vector.load %arg9[%457, %c0_105] : memref<64x1024xf32, #tpu.memory_space<vmem>>, vector<8x512xf32>
    %459 = arith.index_cast %456 : i32 to index
    %c512_106 = arith.constant 512 : index
    %460 = vector.load %arg9[%459, %c512_106] : memref<64x1024xf32, #tpu.memory_space<vmem>>, vector<8x512xf32>
    %cst_107 = arith.constant dense<0.000000e+00> : vector<8x512xf32>
    %461 = tpu.matmul %426, %8, %cst_107 {dimension_numbers = #tpu.dot_dimension_numbers<[1], [0], [0], [1], [0, 0, 1, 1], [], []>} : vector<8x128xf32>, vector<128x512xf32>, vector<8x512xf32> -> vector<8x512xf32>
    %462 = arith.addf %461, %458 : vector<8x512xf32>
    %cst_108 = arith.constant dense<0.000000e+00> : vector<8x512xf32>
    %463 = tpu.matmul %451, %9, %cst_108 {dimension_numbers = #tpu.dot_dimension_numbers<[1], [0], [0], [1], [0, 0, 1, 1], [], []>} : vector<8x128xf32>, vector<128x512xf32>, vector<8x512xf32> -> vector<8x512xf32>
    %464 = arith.addf %463, %460 : vector<8x512xf32>
    %465 = vector.extract_strided_slice %462 {offsets = [0, 0], sizes = [8, 128], strides = [1, 1]} : vector<8x512xf32> to vector<8x128xf32>
    %466 = arith.negf %465 : vector<8x128xf32>
    %467 = math.exp %466 : vector<8x128xf32>
    %cst_109 = arith.constant 1.000000e+00 : f32
    %468 = vector.broadcast %cst_109 : f32 to vector<8x128xf32>
    %469 = arith.addf %468, %467 : vector<8x128xf32>
    %470 = arith.divf %468, %469 : vector<8x128xf32>
    %471 = vector.extract_strided_slice %462 {offsets = [0, 128], sizes = [8, 128], strides = [1, 1]} : vector<8x512xf32> to vector<8x128xf32>
    %472 = arith.negf %471 : vector<8x128xf32>
    %473 = math.exp %472 : vector<8x128xf32>
    %cst_110 = arith.constant 1.000000e+00 : f32
    %474 = vector.broadcast %cst_110 : f32 to vector<8x128xf32>
    %475 = arith.addf %474, %473 : vector<8x128xf32>
    %476 = arith.divf %474, %475 : vector<8x128xf32>
    %477 = vector.extract_strided_slice %462 {offsets = [0, 256], sizes = [8, 128], strides = [1, 1]} : vector<8x512xf32> to vector<8x128xf32>
    %478 = math.tanh %477 : vector<8x128xf32>
    %479 = vector.extract_strided_slice %462 {offsets = [0, 384], sizes = [8, 128], strides = [1, 1]} : vector<8x512xf32> to vector<8x128xf32>
    %480 = arith.negf %479 : vector<8x128xf32>
    %481 = math.exp %480 : vector<8x128xf32>
    %cst_111 = arith.constant 1.000000e+00 : f32
    %482 = vector.broadcast %cst_111 : f32 to vector<8x128xf32>
    %483 = arith.addf %482, %481 : vector<8x128xf32>
    %484 = arith.divf %482, %483 : vector<8x128xf32>
    %485 = arith.mulf %476, %424 : vector<8x128xf32>
    %486 = arith.mulf %470, %478 : vector<8x128xf32>
    %487 = arith.addf %485, %486 : vector<8x128xf32>
    %488 = math.tanh %487 : vector<8x128xf32>
    %489 = arith.mulf %484, %488 : vector<8x128xf32>
    %490 = vector.extract_strided_slice %464 {offsets = [0, 0], sizes = [8, 128], strides = [1, 1]} : vector<8x512xf32> to vector<8x128xf32>
    %491 = arith.negf %490 : vector<8x128xf32>
    %492 = math.exp %491 : vector<8x128xf32>
    %cst_112 = arith.constant 1.000000e+00 : f32
    %493 = vector.broadcast %cst_112 : f32 to vector<8x128xf32>
    %494 = arith.addf %493, %492 : vector<8x128xf32>
    %495 = arith.divf %493, %494 : vector<8x128xf32>
    %496 = vector.extract_strided_slice %464 {offsets = [0, 128], sizes = [8, 128], strides = [1, 1]} : vector<8x512xf32> to vector<8x128xf32>
    %497 = arith.negf %496 : vector<8x128xf32>
    %498 = math.exp %497 : vector<8x128xf32>
    %cst_113 = arith.constant 1.000000e+00 : f32
    %499 = vector.broadcast %cst_113 : f32 to vector<8x128xf32>
    %500 = arith.addf %499, %498 : vector<8x128xf32>
    %501 = arith.divf %499, %500 : vector<8x128xf32>
    %502 = vector.extract_strided_slice %464 {offsets = [0, 256], sizes = [8, 128], strides = [1, 1]} : vector<8x512xf32> to vector<8x128xf32>
    %503 = math.tanh %502 : vector<8x128xf32>
    %504 = vector.extract_strided_slice %464 {offsets = [0, 384], sizes = [8, 128], strides = [1, 1]} : vector<8x512xf32> to vector<8x128xf32>
    %505 = arith.negf %504 : vector<8x128xf32>
    %506 = math.exp %505 : vector<8x128xf32>
    %cst_114 = arith.constant 1.000000e+00 : f32
    %507 = vector.broadcast %cst_114 : f32 to vector<8x128xf32>
    %508 = arith.addf %507, %506 : vector<8x128xf32>
    %509 = arith.divf %507, %508 : vector<8x128xf32>
    %510 = arith.mulf %501, %449 : vector<8x128xf32>
    %511 = arith.mulf %495, %503 : vector<8x128xf32>
    %512 = arith.addf %510, %511 : vector<8x128xf32>
    %513 = math.tanh %512 : vector<8x128xf32>
    %514 = arith.mulf %509, %513 : vector<8x128xf32>
    %c8_i32_115 = arith.constant 8 : i32
    %c0_116 = arith.constant 0 : index
    %c0_117 = arith.constant 0 : index
    %515 = vector.load %arg6[%c0_116, %c0_117] : memref<256x128xf32, #tpu.memory_space<vmem>>, vector<128x128xf32>
    %cst_118 = arith.constant dense<0.000000e+00> : vector<8x128xf32>
    %516 = tpu.matmul %489, %515, %cst_118 {dimension_numbers = #tpu.dot_dimension_numbers<[1], [0], [0], [1], [0, 0, 1, 1], [], []>} : vector<8x128xf32>, vector<128x128xf32>, vector<8x128xf32> -> vector<8x128xf32>
    %c128 = arith.constant 128 : index
    %c0_119 = arith.constant 0 : index
    %517 = vector.load %arg6[%c128, %c0_119] : memref<256x128xf32, #tpu.memory_space<vmem>>, vector<128x128xf32>
    %cst_120 = arith.constant dense<0.000000e+00> : vector<8x128xf32>
    %518 = tpu.matmul %514, %517, %cst_120 {dimension_numbers = #tpu.dot_dimension_numbers<[1], [0], [0], [1], [0, 0, 1, 1], [], []>} : vector<8x128xf32>, vector<128x128xf32>, vector<8x128xf32> -> vector<8x128xf32>
    %519 = arith.addf %516, %518 : vector<8x128xf32>
    %c0_121 = arith.constant 0 : index
    %c0_122 = arith.constant 0 : index
    %520 = vector.load %arg7[%c0_121, %c0_122] : memref<1x128xf32, #tpu.memory_space<vmem>>, vector<1x128xf32>
    %521 = vector.broadcast %520 : vector<1x128xf32> to vector<8x128xf32>
    %522 = arith.addf %519, %521 : vector<8x128xf32>
    %cst_123 = arith.constant dense<0xFF800000> : vector<8xf32>
    %523 = vector.multi_reduction <maximumf>, %522, %cst_123 [1] : vector<8x128xf32> to vector<8xf32>
    %524 = vector.shape_cast %523 : vector<8xf32> to vector<8x1xf32>
    %525 = vector.broadcast %524 : vector<8x1xf32> to vector<8x128xf32>
    %526 = arith.subf %522, %525 : vector<8x128xf32>
    %527 = math.exp %526 : vector<8x128xf32>
    %cst_124 = arith.constant dense<0.000000e+00> : vector<8xf32>
    %528 = vector.multi_reduction <add>, %527, %cst_124 [1] : vector<8x128xf32> to vector<8xf32>
    %529 = vector.shape_cast %528 : vector<8xf32> to vector<8x1xf32>
    %530 = tpu.reciprocal %529 : vector<8x1xf32> -> vector<8x1xf32>
    %531 = vector.broadcast %530 : vector<8x1xf32> to vector<8x128xf32>
    %532 = arith.mulf %527, %531 : vector<8x128xf32>
    %c0_125 = arith.constant 0 : index
    %c0_126 = arith.constant 0 : index
    %533 = vector.load %arg8[%c0_125, %c0_126] : memref<8x128xf32, #tpu.memory_space<vmem>>, vector<8x128xf32>
    tpu.vector_store %arg8[%c0_125, %c0_126], %532 {strides = array<i32>} : memref<8x128xf32, #tpu.memory_space<vmem>>, vector<8x128xf32>,
    return
  }
  func.func @transform_0(%arg0: i32) -> (i32, i32, i32) {
    %c0_i32 = arith.constant 0 : i32
    %c0_i32_0 = arith.constant 0 : i32
    %c0_i32_1 = arith.constant 0 : i32
    return %c0_i32, %arg0, %c0_i32_0 : i32, i32, i32
  }
  func.func @transform_1(%arg0: i32) -> (i32, i32) {
    %c0_i32 = arith.constant 0 : i32
    %c0_i32_0 = arith.constant 0 : i32
    %c0_i32_1 = arith.constant 0 : i32
    return %c0_i32, %c0_i32_0 : i32, i32
  }
  func.func @transform_2(%arg0: i32) -> (i32, i32) {
    %c0_i32 = arith.constant 0 : i32
    %c0_i32_0 = arith.constant 0 : i32
    %c0_i32_1 = arith.constant 0 : i32
    return %c0_i32, %c0_i32_0 : i32, i32
  }
  func.func @transform_3(%arg0: i32) -> (i32, i32) {
    %c0_i32 = arith.constant 0 : i32
    %c0_i32_0 = arith.constant 0 : i32
    %c0_i32_1 = arith.constant 0 : i32
    return %c0_i32, %c0_i32_0 : i32, i32
  }
  func.func @transform_4(%arg0: i32) -> (i32, i32) {
    %c0_i32 = arith.constant 0 : i32
    %c0_i32_0 = arith.constant 0 : i32
    %c0_i32_1 = arith.constant 0 : i32
    return %c0_i32, %c0_i32_0 : i32, i32
  }
  func.func @transform_5(%arg0: i32) -> (i32, i32) {
    %c0_i32 = arith.constant 0 : i32
    %c0_i32_0 = arith.constant 0 : i32
    %c0_i32_1 = arith.constant 0 : i32
    return %c0_i32, %c0_i32_0 : i32, i32
  }
  func.func @transform_6(%arg0: i32) -> (i32, i32) {
    %c0_i32 = arith.constant 0 : i32
    %c0_i32_0 = arith.constant 0 : i32
    %c0_i32_1 = arith.constant 0 : i32
    return %c0_i32, %c0_i32_0 : i32, i32
  }
  func.func @transform_7(%arg0: i32) -> (i32, i32) {
    %c0_i32 = arith.constant 0 : i32
    %c0_i32_0 = arith.constant 0 : i32
    return %arg0, %c0_i32 : i32, i32
  }
}

</mosaic_0001>

<llo_original>
// kernel: tpu_custom_call.1
$region0: #{tpu_custom_call.1}
  #allocation0 [shape = 'u32[]', space=smem, size = 0x4, offset = 0x4, fixed_abs, tag = 'smem constant byte address 0x4 - core index']
  #allocation1 [shape = 'u32[144,128]{1,0:T(1,128)}', space=vmem, size = 0x12000, scoped, tag = 'internal scratch']
  #allocation2 [shape = 'f32[64,1024]{1,0:T(8,128)}', space=vmem, size = 0x40000, scoped, tag = 'scratch operand']
  %s0 = inlined_call_operand.hbm [shape: f32[8,8,128], index: 0, kind: input, shape index: {}]
  %s1 = inlined_call_operand.hbm [shape: f32[128,1024], index: 1, kind: input, shape index: {}]
  %s2 = inlined_call_operand.hbm [shape: f32[1,1024], index: 2, kind: input, shape index: {}]
  %s3 = inlined_call_operand.hbm [shape: f32[128,512], index: 3, kind: input, shape index: {}]
  %s4 = inlined_call_operand.hbm [shape: f32[128,512], index: 4, kind: input, shape index: {}]
  %s5 = inlined_call_operand.hbm [shape: f32[256,128], index: 5, kind: input, shape index: {}]
  %s6 = inlined_call_operand.vmem [shape: f32[1,128], index: 6, kind: input, shape index: {}]
  %s7 = inlined_call_operand.hbm [shape: f32[8,128], index: 7, kind: output, shape index: {}]
  %s8 = sld [smem:[#allocation0]]
  $region62: #{tpu_custom_call.1} parent=0
    _
  %s10 = ssub.s32 1, %s8
  %s11 = scalar_select 0, %s10, %s8
  $region1: #{tpu_custom_call.1} parent=0
    #allocation3 [shape = 'u8[32768]{0}', space=vmem, size = 0x8000, scoped, tag = 'input window, operand 0, single buffered']
    #allocation4 [shape = 's32[1]{0}', space=sflag, size = 0x4, scoped, tag = 'scoped memory for tpu_custom_call.1']
    #allocation5 [shape = 's32[1]{0}', space=sflag, size = 0x4, scoped, tag = 'scoped memory for tpu_custom_call.1']
    #allocation6 [shape = 'u8[524288]{0}', space=vmem, size = 0x80000, scoped, tag = 'input window, operand 1, single buffered']
    #allocation7 [shape = 's32[1]{0}', space=sflag, size = 0x4, scoped, tag = 'scoped memory for tpu_custom_call.1']
    #allocation8 [shape = 'u8[4096]{0}', space=vmem, size = 0x1000, scoped, tag = 'input window, operand 2, single buffered']
    #allocation9 [shape = 'u8[262144]{0}', space=vmem, size = 0x40000, scoped, tag = 'input window, operand 3, single buffered']
    #allocation10 [shape = 's32[1]{0}', space=sflag, size = 0x4, scoped, tag = 'scoped memory for tpu_custom_call.1']
    #allocation11 [shape = 'u8[262144]{0}', space=vmem, size = 0x40000, scoped, tag = 'input window, operand 4, single buffered']
    #allocation12 [shape = 'u8[131072]{0}', space=vmem, size = 0x20000, scoped, tag = 'input window, operand 5, single buffered']
    #allocation13 [shape = 's32[1]{0}', space=sflag, size = 0x4, scoped, tag = 'scoped memory for tpu_custom_call.1']
    #allocation14 [shape = 'u8[4096]{0}', space=vmem, size = 0x1000, scoped, tag = 'output window, operand 0, single buffered']
    %12 = vsyncpa [#allocation4], 0
    %13 = vsyncpa [#allocation7], 0
    %14 = vsyncpa [#allocation10], 0
    %15 = vsyncpa [#allocation13], 0
    %16 = vsyncpa [#allocation5], 0
    // Predicated region
    $region2: #{tpu_custom_call.1} parent=1 // pred_check
      _
    $region3: #{tpu_custom_call.1} parent=1 // pred_check_branch
      %18 = sbr.rel (0) target = $region5
    $region4: #{tpu_custom_call.1} parent=1 // pred_region
      %s20 = ssub.s32 1024, 1024
      %21 = vsyncadd [#allocation4], %s20
      %s22 = sshll.u32 [#allocation3], 4
      %s23 = int_to_ptr.vmem [resolvable:$true] %s22
      %28 = dma.hbm_to_vmem [thread:$0]  %s0, 1024, %s23, [#allocation4], 128, 128, 8
    $region5: #{tpu_custom_call.1} parent=1 // pred_fallthru
      _
    // Predicated region
    $region6: #{tpu_custom_call.1} parent=1 // pred_check
      _
    $region7: #{tpu_custom_call.1} parent=1 // pred_check_branch
      %30 = sbr.rel (0) target = $region9
    $region8: #{tpu_custom_call.1} parent=1 // pred_region
      %s32 = ssub.s32 16384, 16384
      %33 = vsyncadd [#allocation7], %s32
      %s34 = sshll.u32 [#allocation6], 4
      %s35 = int_to_ptr.vmem [resolvable:$true] %s34
      %40 = dma.hbm_to_vmem [thread:$0]  %s1, 16384, %s35, [#allocation7], 1024, 1024, 64
    $region9: #{tpu_custom_call.1} parent=1 // pred_fallthru
      _
    // Predicated region
    $region10: #{tpu_custom_call.1} parent=1 // pred_check
      _
    $region11: #{tpu_custom_call.1} parent=1 // pred_check_branch
      %42 = sbr.rel (0) target = $region13
    $region12: #{tpu_custom_call.1} parent=1 // pred_region
      %s44 = ssub.s32 128, 128
      %45 = vsyncadd [#allocation7], %s44
      %s47 = sshll.u32 [#allocation8], 4
      %s48 = int_to_ptr.vmem [resolvable:$true] %s47
      %50 = dma.hbm_to_vmem [thread:$0]  %s2, 128, %s48, [#allocation7]
    $region13: #{tpu_custom_call.1} parent=1 // pred_fallthru
      _
    // Predicated region
    $region14: #{tpu_custom_call.1} parent=1 // pred_check
      _
    $region15: #{tpu_custom_call.1} parent=1 // pred_check_branch
      %52 = sbr.rel (0) target = $region17
    $region16: #{tpu_custom_call.1} parent=1 // pred_region
      %s54 = ssub.s32 8192, 8192
      %55 = vsyncadd [#allocation10], %s54
      %s56 = sshll.u32 [#allocation9], 4
      %s57 = int_to_ptr.vmem [resolvable:$true] %s56
      %62 = dma.hbm_to_vmem [thread:$0]  %s3, 8192, %s57, [#allocation10], 512, 512, 32
    $region17: #{tpu_custom_call.1} parent=1 // pred_fallthru
      _
    // Predicated region
    $region18: #{tpu_custom_call.1} parent=1 // pred_check
      _
    $region19: #{tpu_custom_call.1} parent=1 // pred_check_branch
      %64 = sbr.rel (0) target = $region21
    $region20: #{tpu_custom_call.1} parent=1 // pred_region
      %s66 = ssub.s32 8192, 8192
      %67 = vsyncadd [#allocation10], %s66
      %s68 = sshll.u32 [#allocation11], 4
      %s69 = int_to_ptr.vmem [resolvable:$true] %s68
      %74 = dma.hbm_to_vmem [thread:$0]  %s4, 8192, %s69, [#allocation10], 512, 512, 32
    $region21: #{tpu_custom_call.1} parent=1 // pred_fallthru
      _
    // Predicated region
    $region22: #{tpu_custom_call.1} parent=1 // pred_check
      _
    $region23: #{tpu_custom_call.1} parent=1 // pred_check_branch
      %76 = sbr.rel (0) target = $region25
    $region24: #{tpu_custom_call.1} parent=1 // pred_region
      %s78 = ssub.s32 4096, 4096
      %79 = vsyncadd [#allocation13], %s78
      %s80 = sshll.u32 [#allocation12], 4
      %s81 = int_to_ptr.vmem [resolvable:$true] %s80
      %86 = dma.hbm_to_vmem [thread:$0]  %s5, 4096, %s81, [#allocation13], 128, 128, 8
    $region25: #{tpu_custom_call.1} parent=1 // pred_fallthru
      _
    // Predicated region
    $region26: #{tpu_custom_call.1} parent=1 // pred_check
      _
    $region27: #{tpu_custom_call.1} parent=1 // pred_check_branch
      %88 = sbr.rel (0) target = $region29
    $region28: #{tpu_custom_call.1} parent=1 // pred_region
      _
    $region29: #{tpu_custom_call.1} parent=1 // pred_fallthru
      _
    // Predicated region
    $region30: #{tpu_custom_call.1} parent=1 // pred_check
      _
    $region31: #{tpu_custom_call.1} parent=1 // pred_check_branch
      %90 = sbr.rel (0) target = $region33
    $region32: #{tpu_custom_call.1} parent=1 // pred_region
      %91 = dma.done [#allocation4], 1024
    $region33: #{tpu_custom_call.1} parent=1 // pred_fallthru
      _
    // Predicated region
    $region34: #{tpu_custom_call.1} parent=1 // pred_check
      _
    $region35: #{tpu_custom_call.1} parent=1 // pred_check_branch
      %93 = sbr.rel (0) target = $region37
    $region36: #{tpu_custom_call.1} parent=1 // pred_region
      %94 = dma.done [#allocation7], 16384
    $region37: #{tpu_custom_call.1} parent=1 // pred_fallthru
      _
    // Predicated region
    $region38: #{tpu_custom_call.1} parent=1 // pred_check
      _
    $region39: #{tpu_custom_call.1} parent=1 // pred_check_branch
      %96 = sbr.rel (0) target = $region41
    $region40: #{tpu_custom_call.1} parent=1 // pred_region
      %97 = dma.done [#allocation7], 128
    $region41: #{tpu_custom_call.1} parent=1 // pred_fallthru
      _
    // Predicated region
    $region42: #{tpu_custom_call.1} parent=1 // pred_check
      _
    $region43: #{tpu_custom_call.1} parent=1 // pred_check_branch
      %99 = sbr.rel (0) target = $region45
    $region44: #{tpu_custom_call.1} parent=1 // pred_region
      %100 = dma.done [#allocation10], 8192
    $region45: #{tpu_custom_call.1} parent=1 // pred_fallthru
      _
    // Predicated region
    $region46: #{tpu_custom_call.1} parent=1 // pred_check
      _
    $region47: #{tpu_custom_call.1} parent=1 // pred_check_branch
      %102 = sbr.rel (0) target = $region49
    $region48: #{tpu_custom_call.1} parent=1 // pred_region
      %103 = dma.done [#allocation10], 8192
    $region49: #{tpu_custom_call.1} parent=1 // pred_fallthru
      _
    // Predicated region
    $region50: #{tpu_custom_call.1} parent=1 // pred_check
      _
    $region51: #{tpu_custom_call.1} parent=1 // pred_check_branch
      %105 = sbr.rel (0) target = $region53
    $region52: #{tpu_custom_call.1} parent=1 // pred_region
      %106 = dma.done [#allocation13], 4096
    $region53: #{tpu_custom_call.1} parent=1 // pred_fallthru
      _
    %v107 = vld [vmem:[#allocation3] sm:$0xff]
    %v108 = vld [vmem:[#allocation3 + $0x8] sm:$0xff]
    %v109 = vld [vmem:[#allocation3 + $0x10] sm:$0xff]
    %v110 = vld [vmem:[#allocation3 + $0x18] sm:$0xff]
    %v111 = vld [vmem:[#allocation3 + $0x20] sm:$0xff]
    %v112 = vld [vmem:[#allocation3 + $0x28] sm:$0xff]
    %v113 = vld [vmem:[#allocation3 + $0x30] sm:$0xff]
    %v114 = vld [vmem:[#allocation3 + $0x38] sm:$0xff]
    %v115 = vld [vmem:[#allocation6] sm:$0xff]
    %v116 = vld [vmem:[#allocation6 + $0x8] sm:$0xff]
    %v117 = vld [vmem:[#allocation6 + $0x10] sm:$0xff]
    %v118 = vld [vmem:[#allocation6 + $0x18] sm:$0xff]
    %v119 = vld [vmem:[#allocation6 + $0x20] sm:$0xff]
    %v120 = vld [vmem:[#allocation6 + $0x28] sm:$0xff]
    %v121 = vld [vmem:[#allocation6 + $0x30] sm:$0xff]
    %v122 = vld [vmem:[#allocation6 + $0x38] sm:$0xff]
    %v123 = vld [vmem:[#allocation6 + $0x40] sm:$0xff]
    %v124 = vld [vmem:[#allocation6 + $0x48] sm:$0xff]
    %v125 = vld [vmem:[#allocation6 + $0x50] sm:$0xff]
    %v126 = vld [vmem:[#allocation6 + $0x58] sm:$0xff]
    %v127 = vld [vmem:[#allocation6 + $0x60] sm:$0xff]
    %v128 = vld [vmem:[#allocation6 + $0x68] sm:$0xff]
    %v129 = vld [vmem:[#allocation6 + $0x70] sm:$0xff]
    %v130 = vld [vmem:[#allocation6 + $0x78] sm:$0xff]
    %v131 = vld [vmem:[#allocation6 + $0x80] sm:$0xff]
    %v132 = vld [vmem:[#allocation6 + $0x88] sm:$0xff]
    %v133 = vld [vmem:[#allocation6 + $0x90] sm:$0xff]
    %v134 = vld [vmem:[#allocation6 + $0x98] sm:$0xff]
    %v135 = vld [vmem:[#allocation6 + $0xa0] sm:$0xff]
    %v136 = vld [vmem:[#allocation6 + $0xa8] sm:$0xff]
    %v137 = vld [vmem:[#allocation6 + $0xb0] sm:$0xff]
    %v138 = vld [vmem:[#allocation6 + $0xb8] sm:$0xff]
    %v139 = vld [vmem:[#allocation6 + $0xc0] sm:$0xff]
    %v140 = vld [vmem:[#allocation6 + $0xc8] sm:$0xff]
    %v141 = vld [vmem:[#allocation6 + $0xd0] sm:$0xff]
    %v142 = vld [vmem:[#allocation6 + $0xd8] sm:$0xff]
    %v143 = vld [vmem:[#allocation6 + $0xe0] sm:$0xff]
    %v144 = vld [vmem:[#allocation6 + $0xe8] sm:$0xff]
    %v145 = vld [vmem:[#allocation6 + $0xf0] sm:$0xff]
    %v146 = vld [vmem:[#allocation6 + $0xf8] sm:$0xff]
    %v147 = vld [vmem:[#allocation6 + $0x100] sm:$0xff]
    %v148 = vld [vmem:[#allocation6 + $0x108] sm:$0xff]
    %v149 = vld [vmem:[#allocation6 + $0x110] sm:$0xff]
    %v150 = vld [vmem:[#allocation6 + $0x118] sm:$0xff]
    %v151 = vld [vmem:[#allocation6 + $0x120] sm:$0xff]
    %v152 = vld [vmem:[#allocation6 + $0x128] sm:$0xff]
    %v153 = vld [vmem:[#allocation6 + $0x130] sm:$0xff]
    %v154 = vld [vmem:[#allocation6 + $0x138] sm:$0xff]
    %v155 = vld [vmem:[#allocation6 + $0x140] sm:$0xff]
    %v156 = vld [vmem:[#allocation6 + $0x148] sm:$0xff]
    %v157 = vld [vmem:[#allocation6 + $0x150] sm:$0xff]
    %v158 = vld [vmem:[#allocation6 + $0x158] sm:$0xff]
    %v159 = vld [vmem:[#allocation6 + $0x160] sm:$0xff]
    %v160 = vld [vmem:[#allocation6 + $0x168] sm:$0xff]
    %v161 = vld [vmem:[#allocation6 + $0x170] sm:$0xff]
    %v162 = vld [vmem:[#allocation6 + $0x178] sm:$0xff]
    %v163 = vld [vmem:[#allocation6 + $0x180] sm:$0xff]
    %v164 = vld [vmem:[#allocation6 + $0x188] sm:$0xff]
    %v165 = vld [vmem:[#allocation6 + $0x190] sm:$0xff]
    %v166 = vld [vmem:[#allocation6 + $0x198] sm:$0xff]
    %v167 = vld [vmem:[#allocation6 + $0x1a0] sm:$0xff]
    %v168 = vld [vmem:[#allocation6 + $0x1a8] sm:$0xff]
    %v169 = vld [vmem:[#allocation6 + $0x1b0] sm:$0xff]
    %v170 = vld [vmem:[#allocation6 + $0x1b8] sm:$0xff]
    %v171 = vld [vmem:[#allocation6 + $0x1c0] sm:$0xff]
    %v172 = vld [vmem:[#allocation6 + $0x1c8] sm:$0xff]
    %v173 = vld [vmem:[#allocation6 + $0x1d0] sm:$0xff]
    %v174 = vld [vmem:[#allocation6 + $0x1d8] sm:$0xff]
    %v175 = vld [vmem:[#allocation6 + $0x1e0] sm:$0xff]
    %v176 = vld [vmem:[#allocation6 + $0x1e8] sm:$0xff]
    %v177 = vld [vmem:[#allocation6 + $0x1f0] sm:$0xff]
    %v178 = vld [vmem:[#allocation6 + $0x1f8] sm:$0xff]
    %v179 = vld [vmem:[#allocation6 + $0x200] sm:$0xff]
    %v180 = vld [vmem:[#allocation6 + $0x208] sm:$0xff]
    %v181 = vld [vmem:[#allocation6 + $0x210] sm:$0xff]
    %v182 = vld [vmem:[#allocation6 + $0x218] sm:$0xff]
    %v183 = vld [vmem:[#allocation6 + $0x220] sm:$0xff]
    %v184 = vld [vmem:[#allocation6 + $0x228] sm:$0xff]
    %v185 = vld [vmem:[#allocation6 + $0x230] sm:$0xff]
    %v186 = vld [vmem:[#allocation6 + $0x238] sm:$0xff]
    %v187 = vld [vmem:[#allocation6 + $0x240] sm:$0xff]
    %v188 = vld [vmem:[#allocation6 + $0x248] sm:$0xff]
    %v189 = vld [vmem:[#allocation6 + $0x250] sm:$0xff]
    %v190 = vld [vmem:[#allocation6 + $0x258] sm:$0xff]
    %v191 = vld [vmem:[#allocation6 + $0x260] sm:$0xff]
    %v192 = vld [vmem:[#allocation6 + $0x268] sm:$0xff]
    %v193 = vld [vmem:[#allocation6 + $0x270] sm:$0xff]
    %v194 = vld [vmem:[#allocation6 + $0x278] sm:$0xff]
    %v195 = vld [vmem:[#allocation6 + $0x280] sm:$0xff]
    %v196 = vld [vmem:[#allocation6 + $0x288] sm:$0xff]
    %v197 = vld [vmem:[#allocation6 + $0x290] sm:$0xff]
    %v198 = vld [vmem:[#allocation6 + $0x298] sm:$0xff]
    %v199 = vld [vmem:[#allocation6 + $0x2a0] sm:$0xff]
    %v200 = vld [vmem:[#allocation6 + $0x2a8] sm:$0xff]
    %v201 = vld [vmem:[#allocation6 + $0x2b0] sm:$0xff]
    %v202 = vld [vmem:[#allocation6 + $0x2b8] sm:$0xff]
    %v203 = vld [vmem:[#allocation6 + $0x2c0] sm:$0xff]
    %v204 = vld [vmem:[#allocation6 + $0x2c8] sm:$0xff]
    %v205 = vld [vmem:[#allocation6 + $0x2d0] sm:$0xff]
    %v206 = vld [vmem:[#allocation6 + $0x2d8] sm:$0xff]
    %v207 = vld [vmem:[#allocation6 + $0x2e0] sm:$0xff]
    %v208 = vld [vmem:[#allocation6 + $0x2e8] sm:$0xff]
    %v209 = vld [vmem:[#allocation6 + $0x2f0] sm:$0xff]
    %v210 = vld [vmem:[#allocation6 + $0x2f8] sm:$0xff]
    %v211 = vld [vmem:[#allocation6 + $0x300] sm:$0xff]
    %v212 = vld [vmem:[#allocation6 + $0x308] sm:$0xff]
    %v213 = vld [vmem:[#allocation6 + $0x310] sm:$0xff]
    %v214 = vld [vmem:[#allocation6 + $0x318] sm:$0xff]
    %v215 = vld [vmem:[#allocation6 + $0x320] sm:$0xff]
    %v216 = vld [vmem:[#allocation6 + $0x328] sm:$0xff]
    %v217 = vld [vmem:[#allocation6 + $0x330] sm:$0xff]
    %v218 = vld [vmem:[#allocation6 + $0x338] sm:$0xff]
    %v219 = vld [vmem:[#allocation6 + $0x340] sm:$0xff]
    %v220 = vld [vmem:[#allocation6 + $0x348] sm:$0xff]
    %v221 = vld [vmem:[#allocation6 + $0x350] sm:$0xff]
    %v222 = vld [vmem:[#allocation6 + $0x358] sm:$0xff]
    %v223 = vld [vmem:[#allocation6 + $0x360] sm:$0xff]
    %v224 = vld [vmem:[#allocation6 + $0x368] sm:$0xff]
    %v225 = vld [vmem:[#allocation6 + $0x370] sm:$0xff]
    %v226 = vld [vmem:[#allocation6 + $0x378] sm:$0xff]
    %v227 = vld [vmem:[#allocation6 + $0x380] sm:$0xff]
    %v228 = vld [vmem:[#allocation6 + $0x388] sm:$0xff]
    %v229 = vld [vmem:[#allocation6 + $0x390] sm:$0xff]
    %v230 = vld [vmem:[#allocation6 + $0x398] sm:$0xff]
    %v231 = vld [vmem:[#allocation6 + $0x3a0] sm:$0xff]
    %v232 = vld [vmem:[#allocation6 + $0x3a8] sm:$0xff]
    %v233 = vld [vmem:[#allocation6 + $0x3b0] sm:$0xff]
    %v234 = vld [vmem:[#allocation6 + $0x3b8] sm:$0xff]
    %v235 = vld [vmem:[#allocation6 + $0x3c0] sm:$0xff]
    %v236 = vld [vmem:[#allocation6 + $0x3c8] sm:$0xff]
    %v237 = vld [vmem:[#allocation6 + $0x3d0] sm:$0xff]
    %v238 = vld [vmem:[#allocation6 + $0x3d8] sm:$0xff]
    %v239 = vld [vmem:[#allocation6 + $0x3e0] sm:$0xff]
    %v240 = vld [vmem:[#allocation6 + $0x3e8] sm:$0xff]
    %v241 = vld [vmem:[#allocation6 + $0x3f0] sm:$0xff]
    %v242 = vld [vmem:[#allocation6 + $0x3f8] sm:$0xff]
    %v243 = vld [vmem:[#allocation8] sm:$0xff]
    %v245 = vlaneseq
    %v246 = vshrl.u32 %v245, 7
    %v247 = vsub.s32 0, %v246
    %v248 = vrot.slane %v243, %v247
    %v249 = vlaneseq
    %v250 = vshrl.u32 %v249, 7
    %v251 = vsub.s32 1, %v250
    %v252 = vrot.slane %v243, %v251
    %v253 = vlaneseq
    %v254 = vshrl.u32 %v253, 7
    %v255 = vsub.s32 2, %v254
    %v256 = vrot.slane %v243, %v255
    %v257 = vlaneseq
    %v258 = vshrl.u32 %v257, 7
    %v259 = vsub.s32 3, %v258
    %v260 = vrot.slane %v243, %v259
    %v261 = vlaneseq
    %v262 = vshrl.u32 %v261, 7
    %v263 = vsub.s32 4, %v262
    %v264 = vrot.slane %v243, %v263
    %v265 = vlaneseq
    %v266 = vshrl.u32 %v265, 7
    %v267 = vsub.s32 5, %v266
    %v268 = vrot.slane %v243, %v267
    %v269 = vlaneseq
    %v270 = vshrl.u32 %v269, 7
    %v271 = vsub.s32 6, %v270
    %v272 = vrot.slane %v243, %v271
    %v273 = vlaneseq
    %v274 = vshrl.u32 %v273, 7
    %v275 = vsub.s32 7, %v274
    %v276 = vrot.slane %v243, %v275
    %285 = vmatprep.subr.mxu0 %v116
    %286 = vmatpush1.msra.mxu0 %v115
    %287 = vmatprep.subr.mxu0 %v124
    %288 = vmatpush1.msra.mxu0 %v123
    %289 = vmatprep.subr.mxu0 %v132
    %290 = vmatpush1.msra.mxu0 %v131
    %291 = vmatprep.subr.mxu0 %v140
    %292 = vmatpush1.msra.mxu0 %v139
    %293 = vmatprep.subr.mxu0 %v148
    %294 = vmatpush1.msra.mxu0 %v147
    %295 = vmatprep.subr.mxu0 %v156
    %296 = vmatpush1.msra.mxu0 %v155
    %297 = vmatprep.subr.mxu0 %v164
    %298 = vmatpush1.msra.mxu0 %v163
    %299 = vmatprep.subr.mxu0 %v172
    %300 = vmatpush1.msra.mxu0 %v171
    %301 = vmatprep.subr.mxu0 %v180
    %302 = vmatpush1.msra.mxu0 %v179
    %303 = vmatprep.subr.mxu0 %v188
    %304 = vmatpush1.msra.mxu0 %v187
    %305 = vmatprep.subr.mxu0 %v196
    %306 = vmatpush1.msra.mxu0 %v195
    %307 = vmatprep.subr.mxu0 %v204
    %308 = vmatpush1.msra.mxu0 %v203
    %309 = vmatprep.subr.mxu0 %v212
    %310 = vmatpush1.msra.mxu0 %v211
    %311 = vmatprep.subr.mxu0 %v220
    %312 = vmatpush1.msra.mxu0 %v219
    %313 = vmatprep.subr.mxu0 %v228
    %314 = vmatpush1.msra.mxu0 %v227
    %315 = vmatprep.subr.mxu0 %v236
    %316 = vmatpush1.msra.mxu0 %v235
    %317 = vmatprep.subr.mxu0 0.0
    %318 = vmatpush1.msra.mxu0 0.0
    %319 = vmatprep.subr.mxu0 0.0
    %320 = vmatpush1.msra.mxu0 0.0
    %321 = vmatprep.subr.mxu0 0.0
    %322 = vmatpush1.msra.mxu0 0.0
    %323 = vmatprep.subr.mxu0 0.0
    %324 = vmatpush1.msra.mxu0 0.0
    %325 = vmatprep.subr.mxu0 0.0
    %326 = vmatpush1.msra.mxu0 0.0
    %327 = vmatprep.subr.mxu0 0.0
    %328 = vmatpush1.msra.mxu0 0.0
    %329 = vmatprep.subr.mxu0 0.0
    %330 = vmatpush1.msra.mxu0 0.0
    %331 = vmatprep.subr.mxu0 0.0
    %332 = vmatpush1.msra.mxu0 0.0
    %333 = vmatprep.subr.mxu0 0.0
    %334 = vmatpush1.msra.mxu0 0.0
    %335 = vmatprep.subr.mxu0 0.0
    %336 = vmatpush1.msra.mxu0 0.0
    %337 = vmatprep.subr.mxu0 0.0
    %338 = vmatpush1.msra.mxu0 0.0
    %339 = vmatprep.subr.mxu0 0.0
    %340 = vmatpush1.msra.mxu0 0.0
    %341 = vmatprep.subr.mxu0 0.0
    %342 = vmatpush1.msra.mxu0 0.0
    %343 = vmatprep.subr.mxu0 0.0
    %344 = vmatpush1.msra.mxu0 0.0
    %345 = vmatprep.subr.mxu0 0.0
    %346 = vmatpush1.msra.mxu0 0.0
    %347 = vmatprep.subr.mxu0 0.0
    %348 = vmatpush1.msra.mxu0 0.0
    %349 = vmatprep.mubr.f32.mxu0 0.0
    %350 = vmatmul.mubr.f32.gmra.mrb[0].mxu0 %v107
    %v351 = vpop.f32.mrb[0].mxu0
    %v352 = vadd.f32 %v248, %v351
    %v353 = vpop.f32.mrb[0].mxu0
    %v354 = vadd.f32 %v252, %v353
    %355 = vmatprep.mubr.f32.mxu0 0.0
    %356 = vmatmul.mubr.f32.gmra.mrb[0].mxu0 %v108
    %v357 = vpop.f32.mrb[0].mxu0
    %v358 = vadd.f32 %v248, %v357
    %v359 = vpop.f32.mrb[0].mxu0
    %v360 = vadd.f32 %v252, %v359
    %361 = vmatprep.mubr.f32.mxu0 0.0
    %362 = vmatmul.mubr.f32.gmra.mrb[0].mxu0 %v109
    %v363 = vpop.f32.mrb[0].mxu0
    %v364 = vadd.f32 %v248, %v363
    %v365 = vpop.f32.mrb[0].mxu0
    %v366 = vadd.f32 %v252, %v365
    %367 = vmatprep.mubr.f32.mxu0 0.0
    %368 = vmatmul.mubr.f32.gmra.mrb[0].mxu0 %v110
    %v369 = vpop.f32.mrb[0].mxu0
    %v370 = vadd.f32 %v248, %v369
    %v371 = vpop.f32.mrb[0].mxu0
    %v372 = vadd.f32 %v252, %v371
    %373 = vmatprep.mubr.f32.mxu0 0.0
    %374 = vmatmul.mubr.f32.gmra.mrb[0].mxu0 %v111
    %v375 = vpop.f32.mrb[0].mxu0
    %v376 = vadd.f32 %v248, %v375
    %v377 = vpop.f32.mrb[0].mxu0
    %v378 = vadd.f32 %v252, %v377
    %379 = vmatprep.mubr.f32.mxu0 0.0
    %380 = vmatmul.mubr.f32.gmra.mrb[0].mxu0 %v112
    %v381 = vpop.f32.mrb[0].mxu0
    %v382 = vadd.f32 %v248, %v381
    %v383 = vpop.f32.mrb[0].mxu0
    %v384 = vadd.f32 %v252, %v383
    %385 = vmatprep.mubr.f32.mxu0 0.0
    %386 = vmatmul.mubr.f32.gmra.mrb[0].mxu0 %v113
    %v387 = vpop.f32.mrb[0].mxu0
    %v388 = vadd.f32 %v248, %v387
    %v389 = vpop.f32.mrb[0].mxu0
    %v390 = vadd.f32 %v252, %v389
    %391 = vmatprep.mubr.f32.mxu0 0.0
    %392 = vmatmul.mubr.f32.gmra.mrb[0].mxu0 %v114
    %v393 = vpop.f32.mrb[0].mxu0
    %v394 = vadd.f32 %v248, %v393
    %v395 = vpop.f32.mrb[0].mxu0
    %v396 = vadd.f32 %v252, %v395
    %397 = vdwg.mxu0
    %398 = vmatprep.subr.mxu0 %v118
    %399 = vmatpush1.msra.mxu0 %v117
    %400 = vmatprep.subr.mxu0 %v126
    %401 = vmatpush1.msra.mxu0 %v125
    %402 = vmatprep.subr.mxu0 %v134
    %403 = vmatpush1.msra.mxu0 %v133
    %404 = vmatprep.subr.mxu0 %v142
    %405 = vmatpush1.msra.mxu0 %v141
    %406 = vmatprep.subr.mxu0 %v150
    %407 = vmatpush1.msra.mxu0 %v149
    %408 = vmatprep.subr.mxu0 %v158
    %409 = vmatpush1.msra.mxu0 %v157
    %410 = vmatprep.subr.mxu0 %v166
    %411 = vmatpush1.msra.mxu0 %v165
    %412 = vmatprep.subr.mxu0 %v174
    %413 = vmatpush1.msra.mxu0 %v173
    %414 = vmatprep.subr.mxu0 %v182
    %415 = vmatpush1.msra.mxu0 %v181
    %416 = vmatprep.subr.mxu0 %v190
    %417 = vmatpush1.msra.mxu0 %v189
    %418 = vmatprep.subr.mxu0 %v198
    %419 = vmatpush1.msra.mxu0 %v197
    %420 = vmatprep.subr.mxu0 %v206
    %421 = vmatpush1.msra.mxu0 %v205
    %422 = vmatprep.subr.mxu0 %v214
    %423 = vmatpush1.msra.mxu0 %v213
    %424 = vmatprep.subr.mxu0 %v222
    %425 = vmatpush1.msra.mxu0 %v221
    %426 = vmatprep.subr.mxu0 %v230
    %427 = vmatpush1.msra.mxu0 %v229
    %428 = vmatprep.subr.mxu0 %v238
    %429 = vmatpush1.msra.mxu0 %v237
    %430 = vmatprep.subr.mxu0 0.0
    %431 = vmatpush1.msra.mxu0 0.0
    %432 = vmatprep.subr.mxu0 0.0
    %433 = vmatpush1.msra.mxu0 0.0
    %434 = vmatprep.subr.mxu0 0.0
    %435 = vmatpush1.msra.mxu0 0.0
    %436 = vmatprep.subr.mxu0 0.0
    %437 = vmatpush1.msra.mxu0 0.0
    %438 = vmatprep.subr.mxu0 0.0
    %439 = vmatpush1.msra.mxu0 0.0
    %440 = vmatprep.subr.mxu0 0.0
    %441 = vmatpush1.msra.mxu0 0.0
    %442 = vmatprep.subr.mxu0 0.0
    %443 = vmatpush1.msra.mxu0 0.0
    %444 = vmatprep.subr.mxu0 0.0
    %445 = vmatpush1.msra.mxu0 0.0
    %446 = vmatprep.subr.mxu0 0.0
    %447 = vmatpush1.msra.mxu0 0.0
    %448 = vmatprep.subr.mxu0 0.0
    %449 = vmatpush1.msra.mxu0 0.0
    %450 = vmatprep.subr.mxu0 0.0
    %451 = vmatpush1.msra.mxu0 0.0
    %452 = vmatprep.subr.mxu0 0.0
    %453 = vmatpush1.msra.mxu0 0.0
    %454 = vmatprep.subr.mxu0 0.0
    %455 = vmatpush1.msra.mxu0 0.0
    %456 = vmatprep.subr.mxu0 0.0
    %457 = vmatpush1.msra.mxu0 0.0
    %458 = vmatprep.subr.mxu0 0.0
    %459 = vmatpush1.msra.mxu0 0.0
    %460 = vmatprep.subr.mxu0 0.0
    %461 = vmatpush1.msra.mxu0 0.0
    %462 = vmatprep.mubr.f32.mxu0 0.0
    %463 = vmatmul.mubr.f32.gmra.mrb[0].mxu0 %v107
    %v464 = vpop.f32.mrb[0].mxu0
    %v465 = vadd.f32 %v256, %v464
    %v466 = vpop.f32.mrb[0].mxu0
    %v467 = vadd.f32 %v260, %v466
    %468 = vmatprep.mubr.f32.mxu0 0.0
    %469 = vmatmul.mubr.f32.gmra.mrb[0].mxu0 %v108
    %v470 = vpop.f32.mrb[0].mxu0
    %v471 = vadd.f32 %v256, %v470
    %v472 = vpop.f32.mrb[0].mxu0
    %v473 = vadd.f32 %v260, %v472
    %474 = vmatprep.mubr.f32.mxu0 0.0
    %475 = vmatmul.mubr.f32.gmra.mrb[0].mxu0 %v109
    %v476 = vpop.f32.mrb[0].mxu0
    %v477 = vadd.f32 %v256, %v476
    %v478 = vpop.f32.mrb[0].mxu0
    %v479 = vadd.f32 %v260, %v478
    %480 = vmatprep.mubr.f32.mxu0 0.0
    %481 = vmatmul.mubr.f32.gmra.mrb[0].mxu0 %v110
    %v482 = vpop.f32.mrb[0].mxu0
    %v483 = vadd.f32 %v256, %v482
    %v484 = vpop.f32.mrb[0].mxu0
    %v485 = vadd.f32 %v260, %v484
    %486 = vmatprep.mubr.f32.mxu0 0.0
    %487 = vmatmul.mubr.f32.gmra.mrb[0].mxu0 %v111
    %v488 = vpop.f32.mrb[0].mxu0
    %v489 = vadd.f32 %v256, %v488
    %v490 = vpop.f32.mrb[0].mxu0
    %v491 = vadd.f32 %v260, %v490
    %492 = vmatprep.mubr.f32.mxu0 0.0
    %493 = vmatmul.mubr.f32.gmra.mrb[0].mxu0 %v112
    %v494 = vpop.f32.mrb[0].mxu0
    %v495 = vadd.f32 %v256, %v494
    %v496 = vpop.f32.mrb[0].mxu0
    %v497 = vadd.f32 %v260, %v496
    %498 = vmatprep.mubr.f32.mxu0 0.0
    %499 = vmatmul.mubr.f32.gmra.mrb[0].mxu0 %v113
    %v500 = vpop.f32.mrb[0].mxu0
    %v501 = vadd.f32 %v256, %v500
    %v502 = vpop.f32.mrb[0].mxu0
    %v503 = vadd.f32 %v260, %v502
    %504 = vmatprep.mubr.f32.mxu0 0.0
    %505 = vmatmul.mubr.f32.gmra.mrb[0].mxu0 %v114
    %v506 = vpop.f32.mrb[0].mxu0
    %v507 = vadd.f32 %v256, %v506
    %v508 = vpop.f32.mrb[0].mxu0
    %v509 = vadd.f32 %v260, %v508
    %510 = vdwg.mxu0
    %511 = vmatprep.subr.mxu0 %v120
    %512 = vmatpush1.msra.mxu0 %v119
    %513 = vmatprep.subr.mxu0 %v128
    %514 = vmatpush1.msra.mxu0 %v127
    %515 = vmatprep.subr.mxu0 %v136
    %516 = vmatpush1.msra.mxu0 %v135
    %517 = vmatprep.subr.mxu0 %v144
    %518 = vmatpush1.msra.mxu0 %v143
    %519 = vmatprep.subr.mxu0 %v152
    %520 = vmatpush1.msra.mxu0 %v151
    %521 = vmatprep.subr.mxu0 %v160
    %522 = vmatpush1.msra.mxu0 %v159
    %523 = vmatprep.subr.mxu0 %v168
    %524 = vmatpush1.msra.mxu0 %v167
    %525 = vmatprep.subr.mxu0 %v176
    %526 = vmatpush1.msra.mxu0 %v175
    %527 = vmatprep.subr.mxu0 %v184
    %528 = vmatpush1.msra.mxu0 %v183
    %529 = vmatprep.subr.mxu0 %v192
    %530 = vmatpush1.msra.mxu0 %v191
    %531 = vmatprep.subr.mxu0 %v200
    %532 = vmatpush1.msra.mxu0 %v199
    %533 = vmatprep.subr.mxu0 %v208
    %534 = vmatpush1.msra.mxu0 %v207
    %535 = vmatprep.subr.mxu0 %v216
    %536 = vmatpush1.msra.mxu0 %v215
    %537 = vmatprep.subr.mxu0 %v224
    %538 = vmatpush1.msra.mxu0 %v223
    %539 = vmatprep.subr.mxu0 %v232
    %540 = vmatpush1.msra.mxu0 %v231
    %541 = vmatprep.subr.mxu0 %v240
    %542 = vmatpush1.msra.mxu0 %v239
    %543 = vmatprep.subr.mxu0 0.0
    %544 = vmatpush1.msra.mxu0 0.0
    %545 = vmatprep.subr.mxu0 0.0
    %546 = vmatpush1.msra.mxu0 0.0
    %547 = vmatprep.subr.mxu0 0.0
    %548 = vmatpush1.msra.mxu0 0.0
    %549 = vmatprep.subr.mxu0 0.0
    %550 = vmatpush1.msra.mxu0 0.0
    %551 = vmatprep.subr.mxu0 0.0
    %552 = vmatpush1.msra.mxu0 0.0
    %553 = vmatprep.subr.mxu0 0.0
    %554 = vmatpush1.msra.mxu0 0.0
    %555 = vmatprep.subr.mxu0 0.0
    %556 = vmatpush1.msra.mxu0 0.0
    %557 = vmatprep.subr.mxu0 0.0
    %558 = vmatpush1.msra.mxu0 0.0
    %559 = vmatprep.subr.mxu0 0.0
    %560 = vmatpush1.msra.mxu0 0.0
    %561 = vmatprep.subr.mxu0 0.0
    %562 = vmatpush1.msra.mxu0 0.0
    %563 = vmatprep.subr.mxu0 0.0
    %564 = vmatpush1.msra.mxu0 0.0
    %565 = vmatprep.subr.mxu0 0.0
    %566 = vmatpush1.msra.mxu0 0.0
    %567 = vmatprep.subr.mxu0 0.0
    %568 = vmatpush1.msra.mxu0 0.0
    %569 = vmatprep.subr.mxu0 0.0
    %570 = vmatpush1.msra.mxu0 0.0
    %571 = vmatprep.subr.mxu0 0.0
    %572 = vmatpush1.msra.mxu0 0.0
    %573 = vmatprep.subr.mxu0 0.0
    %574 = vmatpush1.msra.mxu0 0.0
    %575 = vmatprep.mubr.f32.mxu0 0.0
    %576 = vmatmul.mubr.f32.gmra.mrb[0].mxu0 %v107
    %v577 = vpop.f32.mrb[0].mxu0
    %v578 = vadd.f32 %v264, %v577
    %v579 = vpop.f32.mrb[0].mxu0
    %v580 = vadd.f32 %v268, %v579
    %581 = vmatprep.mubr.f32.mxu0 0.0
    %582 = vmatmul.mubr.f32.gmra.mrb[0].mxu0 %v108
    %v583 = vpop.f32.mrb[0].mxu0
    %v584 = vadd.f32 %v264, %v583
    %v585 = vpop.f32.mrb[0].mxu0
    %v586 = vadd.f32 %v268, %v585
    %587 = vmatprep.mubr.f32.mxu0 0.0
    %588 = vmatmul.mubr.f32.gmra.mrb[0].mxu0 %v109
    %v589 = vpop.f32.mrb[0].mxu0
    %v590 = vadd.f32 %v264, %v589
    %v591 = vpop.f32.mrb[0].mxu0
    %v592 = vadd.f32 %v268, %v591
    %593 = vmatprep.mubr.f32.mxu0 0.0
    %594 = vmatmul.mubr.f32.gmra.mrb[0].mxu0 %v110
    %v595 = vpop.f32.mrb[0].mxu0
    %v596 = vadd.f32 %v264, %v595
    %v597 = vpop.f32.mrb[0].mxu0
    %v598 = vadd.f32 %v268, %v597
    %599 = vmatprep.mubr.f32.mxu0 0.0
    %600 = vmatmul.mubr.f32.gmra.mrb[0].mxu0 %v111
    %v601 = vpop.f32.mrb[0].mxu0
    %v602 = vadd.f32 %v264, %v601
    %v603 = vpop.f32.mrb[0].mxu0
    %v604 = vadd.f32 %v268, %v603
    %605 = vmatprep.mubr.f32.mxu0 0.0
    %606 = vmatmul.mubr.f32.gmra.mrb[0].mxu0 %v112
    %v607 = vpop.f32.mrb[0].mxu0
    %v608 = vadd.f32 %v264, %v607
    %v609 = vpop.f32.mrb[0].mxu0
    %v610 = vadd.f32 %v268, %v609
    %611 = vmatprep.mubr.f32.mxu0 0.0
    %612 = vmatmul.mubr.f32.gmra.mrb[0].mxu0 %v113
    %v613 = vpop.f32.mrb[0].mxu0
    %v614 = vadd.f32 %v264, %v613
    %v615 = vpop.f32.mrb[0].mxu0
    %v616 = vadd.f32 %v268, %v615
    %617 = vmatprep.mubr.f32.mxu0 0.0
    %618 = vmatmul.mubr.f32.gmra.mrb[0].mxu0 %v114
    %v619 = vpop.f32.mrb[0].mxu0
    %v620 = vadd.f32 %v264, %v619
    %v621 = vpop.f32.mrb[0].mxu0
    %v622 = vadd.f32 %v268, %v621
    %623 = vdwg.mxu0
    %624 = vmatprep.subr.mxu0 %v122
    %625 = vmatpush1.msra.mxu0 %v121
    %626 = vmatprep.subr.mxu0 %v130
    %627 = vmatpush1.msra.mxu0 %v129
    %628 = vmatprep.subr.mxu0 %v138
    %629 = vmatpush1.msra.mxu0 %v137
    %630 = vmatprep.subr.mxu0 %v146
    %631 = vmatpush1.msra.mxu0 %v145
    %632 = vmatprep.subr.mxu0 %v154
    %633 = vmatpush1.msra.mxu0 %v153
    %634 = vmatprep.subr.mxu0 %v162
    %635 = vmatpush1.msra.mxu0 %v161
    %636 = vmatprep.subr.mxu0 %v170
    %637 = vmatpush1.msra.mxu0 %v169
    %638 = vmatprep.subr.mxu0 %v178
    %639 = vmatpush1.msra.mxu0 %v177
    %640 = vmatprep.subr.mxu0 %v186
    %641 = vmatpush1.msra.mxu0 %v185
    %642 = vmatprep.subr.mxu0 %v194
    %643 = vmatpush1.msra.mxu0 %v193
    %644 = vmatprep.subr.mxu0 %v202
    %645 = vmatpush1.msra.mxu0 %v201
    %646 = vmatprep.subr.mxu0 %v210
    %647 = vmatpush1.msra.mxu0 %v209
    %648 = vmatprep.subr.mxu0 %v218
    %649 = vmatpush1.msra.mxu0 %v217
    %650 = vmatprep.subr.mxu0 %v226
    %651 = vmatpush1.msra.mxu0 %v225
    %652 = vmatprep.subr.mxu0 %v234
    %653 = vmatpush1.msra.mxu0 %v233
    %654 = vmatprep.subr.mxu0 %v242
    %655 = vmatpush1.msra.mxu0 %v241
    %656 = vmatprep.subr.mxu0 0.0
    %657 = vmatpush1.msra.mxu0 0.0
    %658 = vmatprep.subr.mxu0 0.0
    %659 = vmatpush1.msra.mxu0 0.0
    %660 = vmatprep.subr.mxu0 0.0
    %661 = vmatpush1.msra.mxu0 0.0
    %662 = vmatprep.subr.mxu0 0.0
    %663 = vmatpush1.msra.mxu0 0.0
    %664 = vmatprep.subr.mxu0 0.0
    %665 = vmatpush1.msra.mxu0 0.0
    %666 = vmatprep.subr.mxu0 0.0
    %667 = vmatpush1.msra.mxu0 0.0
    %668 = vmatprep.subr.mxu0 0.0
    %669 = vmatpush1.msra.mxu0 0.0
    %670 = vmatprep.subr.mxu0 0.0
    %671 = vmatpush1.msra.mxu0 0.0
    %672 = vmatprep.subr.mxu0 0.0
    %673 = vmatpush1.msra.mxu0 0.0
    %674 = vmatprep.subr.mxu0 0.0
    %675 = vmatpush1.msra.mxu0 0.0
    %676 = vmatprep.subr.mxu0 0.0
    %677 = vmatpush1.msra.mxu0 0.0
    %678 = vmatprep.subr.mxu0 0.0
    %679 = vmatpush1.msra.mxu0 0.0
    %680 = vmatprep.subr.mxu0 0.0
    %681 = vmatpush1.msra.mxu0 0.0
    %682 = vmatprep.subr.mxu0 0.0
    %683 = vmatpush1.msra.mxu0 0.0
    %684 = vmatprep.subr.mxu0 0.0
    %685 = vmatpush1.msra.mxu0 0.0
    %686 = vmatprep.subr.mxu0 0.0
    %687 = vmatpush1.msra.mxu0 0.0
    %688 = vmatprep.mubr.f32.mxu0 0.0
    %689 = vmatmul.mubr.f32.gmra.mrb[0].mxu0 %v107
    %v690 = vpop.f32.mrb[0].mxu0
    %v691 = vadd.f32 %v272, %v690
    %v692 = vpop.f32.mrb[0].mxu0
    %v693 = vadd.f32 %v276, %v692
    %694 = vmatprep.mubr.f32.mxu0 0.0
    %695 = vmatmul.mubr.f32.gmra.mrb[0].mxu0 %v108
    %v696 = vpop.f32.mrb[0].mxu0
    %v697 = vadd.f32 %v272, %v696
    %v698 = vpop.f32.mrb[0].mxu0
    %v699 = vadd.f32 %v276, %v698
    %700 = vmatprep.mubr.f32.mxu0 0.0
    %701 = vmatmul.mubr.f32.gmra.mrb[0].mxu0 %v109
    %v702 = vpop.f32.mrb[0].mxu0
    %v703 = vadd.f32 %v272, %v702
    %v704 = vpop.f32.mrb[0].mxu0
    %v705 = vadd.f32 %v276, %v704
    %706 = vmatprep.mubr.f32.mxu0 0.0
    %707 = vmatmul.mubr.f32.gmra.mrb[0].mxu0 %v110
    %v708 = vpop.f32.mrb[0].mxu0
    %v709 = vadd.f32 %v272, %v708
    %v710 = vpop.f32.mrb[0].mxu0
    %v711 = vadd.f32 %v276, %v710
    %712 = vmatprep.mubr.f32.mxu0 0.0
    %713 = vmatmul.mubr.f32.gmra.mrb[0].mxu0 %v111
    %v714 = vpop.f32.mrb[0].mxu0
    %v715 = vadd.f32 %v272, %v714
    %v716 = vpop.f32.mrb[0].mxu0
    %v717 = vadd.f32 %v276, %v716
    %718 = vmatprep.mubr.f32.mxu0 0.0
    %719 = vmatmul.mubr.f32.gmra.mrb[0].mxu0 %v112
    %v720 = vpop.f32.mrb[0].mxu0
    %v721 = vadd.f32 %v272, %v720
    %v722 = vpop.f32.mrb[0].mxu0
    %v723 = vadd.f32 %v276, %v722
    %724 = vmatprep.mubr.f32.mxu0 0.0
    %725 = vmatmul.mubr.f32.gmra.mrb[0].mxu0 %v113
    %v726 = vpop.f32.mrb[0].mxu0
    %v727 = vadd.f32 %v272, %v726
    %v728 = vpop.f32.mrb[0].mxu0
    %v729 = vadd.f32 %v276, %v728
    %730 = vmatprep.mubr.f32.mxu0 0.0
    %731 = vmatmul.mubr.f32.gmra.mrb[0].mxu0 %v114
    %v732 = vpop.f32.mrb[0].mxu0
    %v733 = vadd.f32 %v272, %v732
    %v734 = vpop.f32.mrb[0].mxu0
    %v735 = vadd.f32 %v276, %v734
    %736 = vdwg.mxu0
    %737 = vst [vmem:[#allocation2] sm:$0xff] %v352
    %738 = vst [vmem:[#allocation2 + $0x8] sm:$0xff] %v354
    %739 = vst [vmem:[#allocation2 + $0x10] sm:$0xff] %v465
    %740 = vst [vmem:[#allocation2 + $0x18] sm:$0xff] %v467
    %741 = vst [vmem:[#allocation2 + $0x20] sm:$0xff] %v578
    %742 = vst [vmem:[#allocation2 + $0x28] sm:$0xff] %v580
    %743 = vst [vmem:[#allocation2 + $0x30] sm:$0xff] %v691
    %744 = vst [vmem:[#allocation2 + $0x38] sm:$0xff] %v693
    %745 = vst [vmem:[#allocation2 + $0x40] sm:$0xff] %v358
    %746 = vst [vmem:[#allocation2 + $0x48] sm:$0xff] %v360
    %747 = vst [vmem:[#allocation2 + $0x50] sm:$0xff] %v471
    %748 = vst [vmem:[#allocation2 + $0x58] sm:$0xff] %v473
    %749 = vst [vmem:[#allocation2 + $0x60] sm:$0xff] %v584
    %750 = vst [vmem:[#allocation2 + $0x68] sm:$0xff] %v586
    %751 = vst [vmem:[#allocation2 + $0x70] sm:$0xff] %v697
    %752 = vst [vmem:[#allocation2 + $0x78] sm:$0xff] %v699
    %753 = vst [vmem:[#allocation2 + $0x80] sm:$0xff] %v364
    %754 = vst [vmem:[#allocation2 + $0x88] sm:$0xff] %v366
    %755 = vst [vmem:[#allocation2 + $0x90] sm:$0xff] %v477
    %756 = vst [vmem:[#allocation2 + $0x98] sm:$0xff] %v479
    %757 = vst [vmem:[#allocation2 + $0xa0] sm:$0xff] %v590
    %758 = vst [vmem:[#allocation2 + $0xa8] sm:$0xff] %v592
    %759 = vst [vmem:[#allocation2 + $0xb0] sm:$0xff] %v703
    %760 = vst [vmem:[#allocation2 + $0xb8] sm:$0xff] %v705
    %761 = vst [vmem:[#allocation2 + $0xc0] sm:$0xff] %v370
    %762 = vst [vmem:[#allocation2 + $0xc8] sm:$0xff] %v372
    %763 = vst [vmem:[#allocation2 + $0xd0] sm:$0xff] %v483
    %764 = vst [vmem:[#allocation2 + $0xd8] sm:$0xff] %v485
    %765 = vst [vmem:[#allocation2 + $0xe0] sm:$0xff] %v596
    %766 = vst [vmem:[#allocation2 + $0xe8] sm:$0xff] %v598
    %767 = vst [vmem:[#allocation2 + $0xf0] sm:$0xff] %v709
    %768 = vst [vmem:[#allocation2 + $0xf8] sm:$0xff] %v711
    %769 = vst [vmem:[#allocation2 + $0x100] sm:$0xff] %v376
    %770 = vst [vmem:[#allocation2 + $0x108] sm:$0xff] %v378
    %771 = vst [vmem:[#allocation2 + $0x110] sm:$0xff] %v489
    %772 = vst [vmem:[#allocation2 + $0x118] sm:$0xff] %v491
    %773 = vst [vmem:[#allocation2 + $0x120] sm:$0xff] %v602
    %774 = vst [vmem:[#allocation2 + $0x128] sm:$0xff] %v604
    %775 = vst [vmem:[#allocation2 + $0x130] sm:$0xff] %v715
    %776 = vst [vmem:[#allocation2 + $0x138] sm:$0xff] %v717
    %777 = vst [vmem:[#allocation2 + $0x140] sm:$0xff] %v382
    %778 = vst [vmem:[#allocation2 + $0x148] sm:$0xff] %v384
    %779 = vst [vmem:[#allocation2 + $0x150] sm:$0xff] %v495
    %780 = vst [vmem:[#allocation2 + $0x158] sm:$0xff] %v497
    %781 = vst [vmem:[#allocation2 + $0x160] sm:$0xff] %v608
    %782 = vst [vmem:[#allocation2 + $0x168] sm:$0xff] %v610
    %783 = vst [vmem:[#allocation2 + $0x170] sm:$0xff] %v721
    %784 = vst [vmem:[#allocation2 + $0x178] sm:$0xff] %v723
    %785 = vst [vmem:[#allocation2 + $0x180] sm:$0xff] %v388
    %786 = vst [vmem:[#allocation2 + $0x188] sm:$0xff] %v390
    %787 = vst [vmem:[#allocation2 + $0x190] sm:$0xff] %v501
    %788 = vst [vmem:[#allocation2 + $0x198] sm:$0xff] %v503
    %789 = vst [vmem:[#allocation2 + $0x1a0] sm:$0xff] %v614
    %790 = vst [vmem:[#allocation2 + $0x1a8] sm:$0xff] %v616
    %791 = vst [vmem:[#allocation2 + $0x1b0] sm:$0xff] %v727
    %792 = vst [vmem:[#allocation2 + $0x1b8] sm:$0xff] %v729
    %793 = vst [vmem:[#allocation2 + $0x1c0] sm:$0xff] %v394
    %794 = vst [vmem:[#allocation2 + $0x1c8] sm:$0xff] %v396
    %795 = vst [vmem:[#allocation2 + $0x1d0] sm:$0xff] %v507
    %796 = vst [vmem:[#allocation2 + $0x1d8] sm:$0xff] %v509
    %797 = vst [vmem:[#allocation2 + $0x1e0] sm:$0xff] %v620
    %798 = vst [vmem:[#allocation2 + $0x1e8] sm:$0xff] %v622
    %799 = vst [vmem:[#allocation2 + $0x1f0] sm:$0xff] %v733
    %800 = vst [vmem:[#allocation2 + $0x1f8] sm:$0xff] %v735
    %v801 = vld [vmem:[#allocation9] sm:$0xff]
    %v802 = vld [vmem:[#allocation9 + $0x8] sm:$0xff]
    %v803 = vld [vmem:[#allocation9 + $0x10] sm:$0xff]
    %v804 = vld [vmem:[#allocation9 + $0x18] sm:$0xff]
    %v805 = vld [vmem:[#allocation9 + $0x20] sm:$0xff]
    %v806 = vld [vmem:[#allocation9 + $0x28] sm:$0xff]
    %v807 = vld [vmem:[#allocation9 + $0x30] sm:$0xff]
    %v808 = vld [vmem:[#allocation9 + $0x38] sm:$0xff]
    %v809 = vld [vmem:[#allocation9 + $0x40] sm:$0xff]
    %v810 = vld [vmem:[#allocation9 + $0x48] sm:$0xff]
    %v811 = vld [vmem:[#allocation9 + $0x50] sm:$0xff]
    %v812 = vld [vmem:[#allocation9 + $0x58] sm:$0xff]
    %v813 = vld [vmem:[#allocation9 + $0x60] sm:$0xff]
    %v814 = vld [vmem:[#allocation9 + $0x68] sm:$0xff]
    %v815 = vld [vmem:[#allocation9 + $0x70] sm:$0xff]
    %v816 = vld [vmem:[#allocation9 + $0x78] sm:$0xff]
    %v817 = vld [vmem:[#allocation9 + $0x80] sm:$0xff]
    %v818 = vld [vmem:[#allocation9 + $0x88] sm:$0xff]
    %v819 = vld [vmem:[#allocation9 + $0x90] sm:$0xff]
    %v820 = vld [vmem:[#allocation9 + $0x98] sm:$0xff]
    %v821 = vld [vmem:[#allocation9 + $0xa0] sm:$0xff]
    %v822 = vld [vmem:[#allocation9 + $0xa8] sm:$0xff]
    %v823 = vld [vmem:[#allocation9 + $0xb0] sm:$0xff]
    %v824 = vld [vmem:[#allocation9 + $0xb8] sm:$0xff]
    %v825 = vld [vmem:[#allocation9 + $0xc0] sm:$0xff]
    %v826 = vld [vmem:[#allocation9 + $0xc8] sm:$0xff]
    %v827 = vld [vmem:[#allocation9 + $0xd0] sm:$0xff]
    %v828 = vld [vmem:[#allocation9 + $0xd8] sm:$0xff]
    %v829 = vld [vmem:[#allocation9 + $0xe0] sm:$0xff]
    %v830 = vld [vmem:[#allocation9 + $0xe8] sm:$0xff]
    %v831 = vld [vmem:[#allocation9 + $0xf0] sm:$0xff]
    %v832 = vld [vmem:[#allocation9 + $0xf8] sm:$0xff]
    %v833 = vld [vmem:[#allocation9 + $0x100] sm:$0xff]
    %v834 = vld [vmem:[#allocation9 + $0x108] sm:$0xff]
    %v835 = vld [vmem:[#allocation9 + $0x110] sm:$0xff]
    %v836 = vld [vmem:[#allocation9 + $0x118] sm:$0xff]
    %v837 = vld [vmem:[#allocation9 + $0x120] sm:$0xff]
    %v838 = vld [vmem:[#allocation9 + $0x128] sm:$0xff]
    %v839 = vld [vmem:[#allocation9 + $0x130] sm:$0xff]
    %v840 = vld [vmem:[#allocation9 + $0x138] sm:$0xff]
    %v841 = vld [vmem:[#allocation9 + $0x140] sm:$0xff]
    %v842 = vld [vmem:[#allocation9 + $0x148] sm:$0xff]
    %v843 = vld [vmem:[#allocation9 + $0x150] sm:$0xff]
    %v844 = vld [vmem:[#allocation9 + $0x158] sm:$0xff]
    %v845 = vld [vmem:[#allocation9 + $0x160] sm:$0xff]
    %v846 = vld [vmem:[#allocation9 + $0x168] sm:$0xff]
    %v847 = vld [vmem:[#allocation9 + $0x170] sm:$0xff]
    %v848 = vld [vmem:[#allocation9 + $0x178] sm:$0xff]
    %v849 = vld [vmem:[#allocation9 + $0x180] sm:$0xff]
    %v850 = vld [vmem:[#allocation9 + $0x188] sm:$0xff]
    %v851 = vld [vmem:[#allocation9 + $0x190] sm:$0xff]
    %v852 = vld [vmem:[#allocation9 + $0x198] sm:$0xff]
    %v853 = vld [vmem:[#allocation9 + $0x1a0] sm:$0xff]
    %v854 = vld [vmem:[#allocation9 + $0x1a8] sm:$0xff]
    %v855 = vld [vmem:[#allocation9 + $0x1b0] sm:$0xff]
    %v856 = vld [vmem:[#allocation9 + $0x1b8] sm:$0xff]
    %v857 = vld [vmem:[#allocation9 + $0x1c0] sm:$0xff]
    %v858 = vld [vmem:[#allocation9 + $0x1c8] sm:$0xff]
    %v859 = vld [vmem:[#allocation9 + $0x1d0] sm:$0xff]
    %v860 = vld [vmem:[#allocation9 + $0x1d8] sm:$0xff]
    %v861 = vld [vmem:[#allocation9 + $0x1e0] sm:$0xff]
    %v862 = vld [vmem:[#allocation9 + $0x1e8] sm:$0xff]
    %v863 = vld [vmem:[#allocation9 + $0x1f0] sm:$0xff]
    %v864 = vld [vmem:[#allocation9 + $0x1f8] sm:$0xff]
    %v865 = vld [vmem:[#allocation11] sm:$0xff]
    %v866 = vld [vmem:[#allocation11 + $0x8] sm:$0xff]
    %v867 = vld [vmem:[#allocation11 + $0x10] sm:$0xff]
    %v868 = vld [vmem:[#allocation11 + $0x18] sm:$0xff]
    %v869 = vld [vmem:[#allocation11 + $0x20] sm:$0xff]
    %v870 = vld [vmem:[#allocation11 + $0x28] sm:$0xff]
    %v871 = vld [vmem:[#allocation11 + $0x30] sm:$0xff]
    %v872 = vld [vmem:[#allocation11 + $0x38] sm:$0xff]
    %v873 = vld [vmem:[#allocation11 + $0x40] sm:$0xff]
    %v874 = vld [vmem:[#allocation11 + $0x48] sm:$0xff]
    %v875 = vld [vmem:[#allocation11 + $0x50] sm:$0xff]
    %v876 = vld [vmem:[#allocation11 + $0x58] sm:$0xff]
    %v877 = vld [vmem:[#allocation11 + $0x60] sm:$0xff]
    %v878 = vld [vmem:[#allocation11 + $0x68] sm:$0xff]
    %v879 = vld [vmem:[#allocation11 + $0x70] sm:$0xff]
    %v880 = vld [vmem:[#allocation11 + $0x78] sm:$0xff]
    %v881 = vld [vmem:[#allocation11 + $0x80] sm:$0xff]
    %v882 = vld [vmem:[#allocation11 + $0x88] sm:$0xff]
    %v883 = vld [vmem:[#allocation11 + $0x90] sm:$0xff]
    %v884 = vld [vmem:[#allocation11 + $0x98] sm:$0xff]
    %v885 = vld [vmem:[#allocation11 + $0xa0] sm:$0xff]
    %v886 = vld [vmem:[#allocation11 + $0xa8] sm:$0xff]
    %v887 = vld [vmem:[#allocation11 + $0xb0] sm:$0xff]
    %v888 = vld [vmem:[#allocation11 + $0xb8] sm:$0xff]
    %v889 = vld [vmem:[#allocation11 + $0xc0] sm:$0xff]
    %v890 = vld [vmem:[#allocation11 + $0xc8] sm:$0xff]
    %v891 = vld [vmem:[#allocation11 + $0xd0] sm:$0xff]
    %v892 = vld [vmem:[#allocation11 + $0xd8] sm:$0xff]
    %v893 = vld [vmem:[#allocation11 + $0xe0] sm:$0xff]
    %v894 = vld [vmem:[#allocation11 + $0xe8] sm:$0xff]
    %v895 = vld [vmem:[#allocation11 + $0xf0] sm:$0xff]
    %v896 = vld [vmem:[#allocation11 + $0xf8] sm:$0xff]
    %v897 = vld [vmem:[#allocation11 + $0x100] sm:$0xff]
    %v898 = vld [vmem:[#allocation11 + $0x108] sm:$0xff]
    %v899 = vld [vmem:[#allocation11 + $0x110] sm:$0xff]
    %v900 = vld [vmem:[#allocation11 + $0x118] sm:$0xff]
    %v901 = vld [vmem:[#allocation11 + $0x120] sm:$0xff]
    %v902 = vld [vmem:[#allocation11 + $0x128] sm:$0xff]
    %v903 = vld [vmem:[#allocation11 + $0x130] sm:$0xff]
    %v904 = vld [vmem:[#allocation11 + $0x138] sm:$0xff]
    %v905 = vld [vmem:[#allocation11 + $0x140] sm:$0xff]
    %v906 = vld [vmem:[#allocation11 + $0x148] sm:$0xff]
    %v907 = vld [vmem:[#allocation11 + $0x150] sm:$0xff]
    %v908 = vld [vmem:[#allocation11 + $0x158] sm:$0xff]
    %v909 = vld [vmem:[#allocation11 + $0x160] sm:$0xff]
    %v910 = vld [vmem:[#allocation11 + $0x168] sm:$0xff]
    %v911 = vld [vmem:[#allocation11 + $0x170] sm:$0xff]
    %v912 = vld [vmem:[#allocation11 + $0x178] sm:$0xff]
    %v913 = vld [vmem:[#allocation11 + $0x180] sm:$0xff]
    %v914 = vld [vmem:[#allocation11 + $0x188] sm:$0xff]
    %v915 = vld [vmem:[#allocation11 + $0x190] sm:$0xff]
    %v916 = vld [vmem:[#allocation11 + $0x198] sm:$0xff]
    %v917 = vld [vmem:[#allocation11 + $0x1a0] sm:$0xff]
    %v918 = vld [vmem:[#allocation11 + $0x1a8] sm:$0xff]
    %v919 = vld [vmem:[#allocation11 + $0x1b0] sm:$0xff]
    %v920 = vld [vmem:[#allocation11 + $0x1b8] sm:$0xff]
    %v921 = vld [vmem:[#allocation11 + $0x1c0] sm:$0xff]
    %v922 = vld [vmem:[#allocation11 + $0x1c8] sm:$0xff]
    %v923 = vld [vmem:[#allocation11 + $0x1d0] sm:$0xff]
    %v924 = vld [vmem:[#allocation11 + $0x1d8] sm:$0xff]
    %v925 = vld [vmem:[#allocation11 + $0x1e0] sm:$0xff]
    %v926 = vld [vmem:[#allocation11 + $0x1e8] sm:$0xff]
    %v927 = vld [vmem:[#allocation11 + $0x1f0] sm:$0xff]
    %v928 = vld [vmem:[#allocation11 + $0x1f8] sm:$0xff]
    %s929 = smul.u32 0, 8
    %s930 = smul.addr %s929, 8
    %s931 = scalar_lea.vmem [#allocation2], %s930
    %v932 = vld [vmem:[%s931] sm:$0xff]
    %v933 = vld [vmem:[%s931 + $0x8] sm:$0xff]
    %v934 = vld [vmem:[%s931 + $0x10] sm:$0xff]
    %v935 = vld [vmem:[%s931 + $0x18] sm:$0xff]
    %s936 = smul.u32 7, 8
    %s937 = smul.addr %s936, 8
    %s938 = scalar_lea.vmem [#allocation2], %s937
    %v939 = vld [vmem:[%s938 + $0x20] sm:$0xff]
    %v940 = vld [vmem:[%s938 + $0x28] sm:$0xff]
    %v941 = vld [vmem:[%s938 + $0x30] sm:$0xff]
    %v942 = vld [vmem:[%s938 + $0x38] sm:$0xff]
    %943 = vmatprep.subr.mxu0 %v802
    %944 = vmatpush1.msra.mxu0 %v801
    %945 = vmatprep.subr.mxu0 %v806
    %946 = vmatpush1.msra.mxu0 %v805
    %947 = vmatprep.subr.mxu0 %v810
    %948 = vmatpush1.msra.mxu0 %v809
    %949 = vmatprep.subr.mxu0 %v814
    %950 = vmatpush1.msra.mxu0 %v813
    %951 = vmatprep.subr.mxu0 %v818
    %952 = vmatpush1.msra.mxu0 %v817
    %953 = vmatprep.subr.mxu0 %v822
    %954 = vmatpush1.msra.mxu0 %v821
    %955 = vmatprep.subr.mxu0 %v826
    %956 = vmatpush1.msra.mxu0 %v825
    %957 = vmatprep.subr.mxu0 %v830
    %958 = vmatpush1.msra.mxu0 %v829
    %959 = vmatprep.subr.mxu0 %v834
    %960 = vmatpush1.msra.mxu0 %v833
    %961 = vmatprep.subr.mxu0 %v838
    %962 = vmatpush1.msra.mxu0 %v837
    %963 = vmatprep.subr.mxu0 %v842
    %964 = vmatpush1.msra.mxu0 %v841
    %965 = vmatprep.subr.mxu0 %v846
    %966 = vmatpush1.msra.mxu0 %v845
    %967 = vmatprep.subr.mxu0 %v850
    %968 = vmatpush1.msra.mxu0 %v849
    %969 = vmatprep.subr.mxu0 %v854
    %970 = vmatpush1.msra.mxu0 %v853
    %971 = vmatprep.subr.mxu0 %v858
    %972 = vmatpush1.msra.mxu0 %v857
    %973 = vmatprep.subr.mxu0 %v862
    %974 = vmatpush1.msra.mxu0 %v861
    %975 = vmatprep.subr.mxu0 0.0
    %976 = vmatpush1.msra.mxu0 0.0
    %977 = vmatprep.subr.mxu0 0.0
    %978 = vmatpush1.msra.mxu0 0.0
    %979 = vmatprep.subr.mxu0 0.0
    %980 = vmatpush1.msra.mxu0 0.0
    %981 = vmatprep.subr.mxu0 0.0
    %982 = vmatpush1.msra.mxu0 0.0
    %983 = vmatprep.subr.mxu0 0.0
    %984 = vmatpush1.msra.mxu0 0.0
    %985 = vmatprep.subr.mxu0 0.0
    %986 = vmatpush1.msra.mxu0 0.0
    %987 = vmatprep.subr.mxu0 0.0
    %988 = vmatpush1.msra.mxu0 0.0
    %989 = vmatprep.subr.mxu0 0.0
    %990 = vmatpush1.msra.mxu0 0.0
    %991 = vmatprep.subr.mxu0 0.0
    %992 = vmatpush1.msra.mxu0 0.0
    %993 = vmatprep.subr.mxu0 0.0
    %994 = vmatpush1.msra.mxu0 0.0
    %995 = vmatprep.subr.mxu0 0.0
    %996 = vmatpush1.msra.mxu0 0.0
    %997 = vmatprep.subr.mxu0 0.0
    %998 = vmatpush1.msra.mxu0 0.0
    %999 = vmatprep.subr.mxu0 0.0
    %1000 = vmatpush1.msra.mxu0 0.0
    %1001 = vmatprep.subr.mxu0 0.0
    %1002 = vmatpush1.msra.mxu0 0.0
    %1003 = vmatprep.subr.mxu0 0.0
    %1004 = vmatpush1.msra.mxu0 0.0
    %1005 = vmatprep.subr.mxu0 0.0
    %1006 = vmatpush1.msra.mxu0 0.0
    %1007 = vmatprep.mubr.f32.mxu0 0.0
    %1008 = vmatmul.mubr.f32.gmra.mrb[0].mxu0 0.0
    %v1009 = vpop.f32.mrb[0].mxu0
    %v1010 = vadd.f32 %v932, %v1009
    %v1011 = vpop.f32.mrb[0].mxu0
    %v1012 = vadd.f32 %v933, %v1011
    %1013 = vdwg.mxu0
    %1014 = vmatprep.subr.mxu0 %v804
    %1015 = vmatpush1.msra.mxu0 %v803
    %1016 = vmatprep.subr.mxu0 %v808
    %1017 = vmatpush1.msra.mxu0 %v807
    %1018 = vmatprep.subr.mxu0 %v812
    %1019 = vmatpush1.msra.mxu0 %v811
    %1020 = vmatprep.subr.mxu0 %v816
    %1021 = vmatpush1.msra.mxu0 %v815
    %1022 = vmatprep.subr.mxu0 %v820
    %1023 = vmatpush1.msra.mxu0 %v819
    %1024 = vmatprep.subr.mxu0 %v824
    %1025 = vmatpush1.msra.mxu0 %v823
    %1026 = vmatprep.subr.mxu0 %v828
    %1027 = vmatpush1.msra.mxu0 %v827
    %1028 = vmatprep.subr.mxu0 %v832
    %1029 = vmatpush1.msra.mxu0 %v831
    %1030 = vmatprep.subr.mxu0 %v836
    %1031 = vmatpush1.msra.mxu0 %v835
    %1032 = vmatprep.subr.mxu0 %v840
    %1033 = vmatpush1.msra.mxu0 %v839
    %1034 = vmatprep.subr.mxu0 %v844
    %1035 = vmatpush1.msra.mxu0 %v843
    %1036 = vmatprep.subr.mxu0 %v848
    %1037 = vmatpush1.msra.mxu0 %v847
    %1038 = vmatprep.subr.mxu0 %v852
    %1039 = vmatpush1.msra.mxu0 %v851
    %1040 = vmatprep.subr.mxu0 %v856
    %1041 = vmatpush1.msra.mxu0 %v855
    %1042 = vmatprep.subr.mxu0 %v860
    %1043 = vmatpush1.msra.mxu0 %v859
    %1044 = vmatprep.subr.mxu0 %v864
    %1045 = vmatpush1.msra.mxu0 %v863
    %1046 = vmatprep.subr.mxu0 0.0
    %1047 = vmatpush1.msra.mxu0 0.0
    %1048 = vmatprep.subr.mxu0 0.0
    %1049 = vmatpush1.msra.mxu0 0.0
    %1050 = vmatprep.subr.mxu0 0.0
    %1051 = vmatpush1.msra.mxu0 0.0
    %1052 = vmatprep.subr.mxu0 0.0
    %1053 = vmatpush1.msra.mxu0 0.0
    %1054 = vmatprep.subr.mxu0 0.0
    %1055 = vmatpush1.msra.mxu0 0.0
    %1056 = vmatprep.subr.mxu0 0.0
    %1057 = vmatpush1.msra.mxu0 0.0
    %1058 = vmatprep.subr.mxu0 0.0
    %1059 = vmatpush1.msra.mxu0 0.0
    %1060 = vmatprep.subr.mxu0 0.0
    %1061 = vmatpush1.msra.mxu0 0.0
    %1062 = vmatprep.subr.mxu0 0.0
    %1063 = vmatpush1.msra.mxu0 0.0
    %1064 = vmatprep.subr.mxu0 0.0
    %1065 = vmatpush1.msra.mxu0 0.0
    %1066 = vmatprep.subr.mxu0 0.0
    %1067 = vmatpush1.msra.mxu0 0.0
    %1068 = vmatprep.subr.mxu0 0.0
    %1069 = vmatpush1.msra.mxu0 0.0
    %1070 = vmatprep.subr.mxu0 0.0
    %1071 = vmatpush1.msra.mxu0 0.0
    %1072 = vmatprep.subr.mxu0 0.0
    %1073 = vmatpush1.msra.mxu0 0.0
    %1074 = vmatprep.subr.mxu0 0.0
    %1075 = vmatpush1.msra.mxu0 0.0
    %1076 = vmatprep.subr.mxu0 0.0
    %1077 = vmatpush1.msra.mxu0 0.0
    %1078 = vmatprep.mubr.f32.mxu0 0.0
    %1079 = vmatmul.mubr.f32.gmra.mrb[0].mxu0 0.0
    %v1080 = vpop.f32.mrb[0].mxu0
    %v1081 = vadd.f32 %v934, %v1080
    %v1082 = vpop.f32.mrb[0].mxu0
    %v1083 = vadd.f32 %v935, %v1082
    %1084 = vdwg.mxu0
    %1085 = vmatprep.subr.mxu0 %v866
    %1086 = vmatpush1.msra.mxu0 %v865
    %1087 = vmatprep.subr.mxu0 %v870
    %1088 = vmatpush1.msra.mxu0 %v869
    %1089 = vmatprep.subr.mxu0 %v874
    %1090 = vmatpush1.msra.mxu0 %v873
    %1091 = vmatprep.subr.mxu0 %v878
    %1092 = vmatpush1.msra.mxu0 %v877
    %1093 = vmatprep.subr.mxu0 %v882
    %1094 = vmatpush1.msra.mxu0 %v881
    %1095 = vmatprep.subr.mxu0 %v886
    %1096 = vmatpush1.msra.mxu0 %v885
    %1097 = vmatprep.subr.mxu0 %v890
    %1098 = vmatpush1.msra.mxu0 %v889
    %1099 = vmatprep.subr.mxu0 %v894
    %1100 = vmatpush1.msra.mxu0 %v893
    %1101 = vmatprep.subr.mxu0 %v898
    %1102 = vmatpush1.msra.mxu0 %v897
    %1103 = vmatprep.subr.mxu0 %v902
    %1104 = vmatpush1.msra.mxu0 %v901
    %1105 = vmatprep.subr.mxu0 %v906
    %1106 = vmatpush1.msra.mxu0 %v905
    %1107 = vmatprep.subr.mxu0 %v910
    %1108 = vmatpush1.msra.mxu0 %v909
    %1109 = vmatprep.subr.mxu0 %v914
    %1110 = vmatpush1.msra.mxu0 %v913
    %1111 = vmatprep.subr.mxu0 %v918
    %1112 = vmatpush1.msra.mxu0 %v917
    %1113 = vmatprep.subr.mxu0 %v922
    %1114 = vmatpush1.msra.mxu0 %v921
    %1115 = vmatprep.subr.mxu0 %v926
    %1116 = vmatpush1.msra.mxu0 %v925
    %1117 = vmatprep.subr.mxu0 0.0
    %1118 = vmatpush1.msra.mxu0 0.0
    %1119 = vmatprep.subr.mxu0 0.0
    %1120 = vmatpush1.msra.mxu0 0.0
    %1121 = vmatprep.subr.mxu0 0.0
    %1122 = vmatpush1.msra.mxu0 0.0
    %1123 = vmatprep.subr.mxu0 0.0
    %1124 = vmatpush1.msra.mxu0 0.0
    %1125 = vmatprep.subr.mxu0 0.0
    %1126 = vmatpush1.msra.mxu0 0.0
    %1127 = vmatprep.subr.mxu0 0.0
    %1128 = vmatpush1.msra.mxu0 0.0
    %1129 = vmatprep.subr.mxu0 0.0
    %1130 = vmatpush1.msra.mxu0 0.0
    %1131 = vmatprep.subr.mxu0 0.0
    %1132 = vmatpush1.msra.mxu0 0.0
    %1133 = vmatprep.subr.mxu0 0.0
    %1134 = vmatpush1.msra.mxu0 0.0
    %1135 = vmatprep.subr.mxu0 0.0
    %1136 = vmatpush1.msra.mxu0 0.0
    %1137 = vmatprep.subr.mxu0 0.0
    %1138 = vmatpush1.msra.mxu0 0.0
    %1139 = vmatprep.subr.mxu0 0.0
    %1140 = vmatpush1.msra.mxu0 0.0
    %1141 = vmatprep.subr.mxu0 0.0
    %1142 = vmatpush1.msra.mxu0 0.0
    %1143 = vmatprep.subr.mxu0 0.0
    %1144 = vmatpush1.msra.mxu0 0.0
    %1145 = vmatprep.subr.mxu0 0.0
    %1146 = vmatpush1.msra.mxu0 0.0
    %1147 = vmatprep.subr.mxu0 0.0
    %1148 = vmatpush1.msra.mxu0 0.0
    %1149 = vmatprep.mubr.f32.mxu0 0.0
    %1150 = vmatmul.mubr.f32.gmra.mrb[0].mxu0 0.0
    %v1151 = vpop.f32.mrb[0].mxu0
    %v1152 = vadd.f32 %v939, %v1151
    %v1153 = vpop.f32.mrb[0].mxu0
    %v1154 = vadd.f32 %v940, %v1153
    %1155 = vdwg.mxu0
    %1156 = vmatprep.subr.mxu0 %v868
    %1157 = vmatpush1.msra.mxu0 %v867
    %1158 = vmatprep.subr.mxu0 %v872
    %1159 = vmatpush1.msra.mxu0 %v871
    %1160 = vmatprep.subr.mxu0 %v876
    %1161 = vmatpush1.msra.mxu0 %v875
    %1162 = vmatprep.subr.mxu0 %v880
    %1163 = vmatpush1.msra.mxu0 %v879
    %1164 = vmatprep.subr.mxu0 %v884
    %1165 = vmatpush1.msra.mxu0 %v883
    %1166 = vmatprep.subr.mxu0 %v888
    %1167 = vmatpush1.msra.mxu0 %v887
    %1168 = vmatprep.subr.mxu0 %v892
    %1169 = vmatpush1.msra.mxu0 %v891
    %1170 = vmatprep.subr.mxu0 %v896
    %1171 = vmatpush1.msra.mxu0 %v895
    %1172 = vmatprep.subr.mxu0 %v900
    %1173 = vmatpush1.msra.mxu0 %v899
    %1174 = vmatprep.subr.mxu0 %v904
    %1175 = vmatpush1.msra.mxu0 %v903
    %1176 = vmatprep.subr.mxu0 %v908
    %1177 = vmatpush1.msra.mxu0 %v907
    %1178 = vmatprep.subr.mxu0 %v912
    %1179 = vmatpush1.msra.mxu0 %v911
    %1180 = vmatprep.subr.mxu0 %v916
    %1181 = vmatpush1.msra.mxu0 %v915
    %1182 = vmatprep.subr.mxu0 %v920
    %1183 = vmatpush1.msra.mxu0 %v919
    %1184 = vmatprep.subr.mxu0 %v924
    %1185 = vmatpush1.msra.mxu0 %v923
    %1186 = vmatprep.subr.mxu0 %v928
    %1187 = vmatpush1.msra.mxu0 %v927
    %1188 = vmatprep.subr.mxu0 0.0
    %1189 = vmatpush1.msra.mxu0 0.0
    %1190 = vmatprep.subr.mxu0 0.0
    %1191 = vmatpush1.msra.mxu0 0.0
    %1192 = vmatprep.subr.mxu0 0.0
    %1193 = vmatpush1.msra.mxu0 0.0
    %1194 = vmatprep.subr.mxu0 0.0
    %1195 = vmatpush1.msra.mxu0 0.0
    %1196 = vmatprep.subr.mxu0 0.0
    %1197 = vmatpush1.msra.mxu0 0.0
    %1198 = vmatprep.subr.mxu0 0.0
    %1199 = vmatpush1.msra.mxu0 0.0
    %1200 = vmatprep.subr.mxu0 0.0
    %1201 = vmatpush1.msra.mxu0 0.0
    %1202 = vmatprep.subr.mxu0 0.0
    %1203 = vmatpush1.msra.mxu0 0.0
    %1204 = vmatprep.subr.mxu0 0.0
    %1205 = vmatpush1.msra.mxu0 0.0
    %1206 = vmatprep.subr.mxu0 0.0
    %1207 = vmatpush1.msra.mxu0 0.0
    %1208 = vmatprep.subr.mxu0 0.0
    %1209 = vmatpush1.msra.mxu0 0.0
    %1210 = vmatprep.subr.mxu0 0.0
    %1211 = vmatpush1.msra.mxu0 0.0
    %1212 = vmatprep.subr.mxu0 0.0
    %1213 = vmatpush1.msra.mxu0 0.0
    %1214 = vmatprep.subr.mxu0 0.0
    %1215 = vmatpush1.msra.mxu0 0.0
    %1216 = vmatprep.subr.mxu0 0.0
    %1217 = vmatpush1.msra.mxu0 0.0
    %1218 = vmatprep.subr.mxu0 0.0
    %1219 = vmatpush1.msra.mxu0 0.0
    %1220 = vmatprep.mubr.f32.mxu0 0.0
    %1221 = vmatmul.mubr.f32.gmra.mrb[0].mxu0 0.0
    %v1222 = vpop.f32.mrb[0].mxu0
    %v1223 = vadd.f32 %v941, %v1222
    %v1224 = vpop.f32.mrb[0].mxu0
    %v1225 = vadd.f32 %v942, %v1224
    %1226 = vdwg.mxu0
    %v1227 = vxor.u32 %v1010, 2147483648
    %v1228 = vmul.f32 %v1227, 1.442695
    %v1229 = vpow.pop %v1228
    %v1230 = vadd.f32 %v1229, 1.0
    %v1231 = vrcp.pop %v1230
    %v1232 = vmul.f32 1.0, %v1231
    %v1233 = vxor.u32 %v1012, 2147483648
    %v1234 = vmul.f32 %v1233, 1.442695
    %v1235 = vpow.pop %v1234
    %v1236 = vadd.f32 %v1235, 1.0
    %v1237 = vrcp.pop %v1236
    %v1238 = vmul.f32 1.0, %v1237
    %v1239 = vtanh.pop %v1081
    %v1240 = vxor.u32 %v1083, 2147483648
    %v1241 = vmul.f32 %v1240, 1.442695
    %v1242 = vpow.pop %v1241
    %v1243 = vadd.f32 %v1242, 1.0
    %v1244 = vrcp.pop %v1243
    %v1245 = vmul.f32 1.0, %v1244
    %v1246 = vmul.f32 %v1238, 0.0
    %v1247 = vmul.f32 %v1232, %v1239
    %v1248 = vadd.f32 %v1246, %v1247
    %v1249 = vtanh.pop %v1248
    %v1250 = vmul.f32 %v1245, %v1249
    %v1251 = vxor.u32 %v1152, 2147483648
    %v1252 = vmul.f32 %v1251, 1.442695
    %v1253 = vpow.pop %v1252
    %v1254 = vadd.f32 %v1253, 1.0
    %v1255 = vrcp.pop %v1254
    %v1256 = vmul.f32 1.0, %v1255
    %v1257 = vxor.u32 %v1154, 2147483648
    %v1258 = vmul.f32 %v1257, 1.442695
    %v1259 = vpow.pop %v1258
    %v1260 = vadd.f32 %v1259, 1.0
    %v1261 = vrcp.pop %v1260
    %v1262 = vmul.f32 1.0, %v1261
    %v1263 = vtanh.pop %v1223
    %v1264 = vxor.u32 %v1225, 2147483648
    %v1265 = vmul.f32 %v1264, 1.442695
    %v1266 = vpow.pop %v1265
    %v1267 = vadd.f32 %v1266, 1.0
    %v1268 = vrcp.pop %v1267
    %v1269 = vmul.f32 1.0, %v1268
    %v1270 = vmul.f32 %v1262, 0.0
    %v1271 = vmul.f32 %v1256, %v1263
    %v1272 = vadd.f32 %v1270, %v1271
    %v1273 = vtanh.pop %v1272
    %v1274 = vmul.f32 %v1269, %v1273
    %s1275 = smul.u32 1, 8
    %s1276 = smul.addr %s1275, 8
    %s1277 = scalar_lea.vmem [#allocation2], %s1276
    %v1278 = vld [vmem:[%s1277] sm:$0xff]
    %v1279 = vld [vmem:[%s1277 + $0x8] sm:$0xff]
    %v1280 = vld [vmem:[%s1277 + $0x10] sm:$0xff]
    %v1281 = vld [vmem:[%s1277 + $0x18] sm:$0xff]
    %s1282 = smul.u32 6, 8
    %s1283 = smul.addr %s1282, 8
    %s1284 = scalar_lea.vmem [#allocation2], %s1283
    %v1285 = vld [vmem:[%s1284 + $0x20] sm:$0xff]
    %v1286 = vld [vmem:[%s1284 + $0x28] sm:$0xff]
    %v1287 = vld [vmem:[%s1284 + $0x30] sm:$0xff]
    %v1288 = vld [vmem:[%s1284 + $0x38] sm:$0xff]
    %1289 = vmatprep.subr.mxu0 %v802
    %1290 = vmatpush1.msra.mxu0 %v801
    %1291 = vmatprep.subr.mxu0 %v806
    %1292 = vmatpush1.msra.mxu0 %v805
    %1293 = vmatprep.subr.mxu0 %v810
    %1294 = vmatpush1.msra.mxu0 %v809
    %1295 = vmatprep.subr.mxu0 %v814
    %1296 = vmatpush1.msra.mxu0 %v813
    %1297 = vmatprep.subr.mxu0 %v818
    %1298 = vmatpush1.msra.mxu0 %v817
    %1299 = vmatprep.subr.mxu0 %v822
    %1300 = vmatpush1.msra.mxu0 %v821
    %1301 = vmatprep.subr.mxu0 %v826
    %1302 = vmatpush1.msra.mxu0 %v825
    %1303 = vmatprep.subr.mxu0 %v830
    %1304 = vmatpush1.msra.mxu0 %v829
    %1305 = vmatprep.subr.mxu0 %v834
    %1306 = vmatpush1.msra.mxu0 %v833
    %1307 = vmatprep.subr.mxu0 %v838
    %1308 = vmatpush1.msra.mxu0 %v837
    %1309 = vmatprep.subr.mxu0 %v842
    %1310 = vmatpush1.msra.mxu0 %v841
    %1311 = vmatprep.subr.mxu0 %v846
    %1312 = vmatpush1.msra.mxu0 %v845
    %1313 = vmatprep.subr.mxu0 %v850
    %1314 = vmatpush1.msra.mxu0 %v849
    %1315 = vmatprep.subr.mxu0 %v854
    %1316 = vmatpush1.msra.mxu0 %v853
    %1317 = vmatprep.subr.mxu0 %v858
    %1318 = vmatpush1.msra.mxu0 %v857
    %1319 = vmatprep.subr.mxu0 %v862
    %1320 = vmatpush1.msra.mxu0 %v861
    %1321 = vmatprep.subr.mxu0 0.0
    %1322 = vmatpush1.msra.mxu0 0.0
    %1323 = vmatprep.subr.mxu0 0.0
    %1324 = vmatpush1.msra.mxu0 0.0
    %1325 = vmatprep.subr.mxu0 0.0
    %1326 = vmatpush1.msra.mxu0 0.0
    %1327 = vmatprep.subr.mxu0 0.0
    %1328 = vmatpush1.msra.mxu0 0.0
    %1329 = vmatprep.subr.mxu0 0.0
    %1330 = vmatpush1.msra.mxu0 0.0
    %1331 = vmatprep.subr.mxu0 0.0
    %1332 = vmatpush1.msra.mxu0 0.0
    %1333 = vmatprep.subr.mxu0 0.0
    %1334 = vmatpush1.msra.mxu0 0.0
    %1335 = vmatprep.subr.mxu0 0.0
    %1336 = vmatpush1.msra.mxu0 0.0
    %1337 = vmatprep.subr.mxu0 0.0
    %1338 = vmatpush1.msra.mxu0 0.0
    %1339 = vmatprep.subr.mxu0 0.0
    %1340 = vmatpush1.msra.mxu0 0.0
    %1341 = vmatprep.subr.mxu0 0.0
    %1342 = vmatpush1.msra.mxu0 0.0
    %1343 = vmatprep.subr.mxu0 0.0
    %1344 = vmatpush1.msra.mxu0 0.0
    %1345 = vmatprep.subr.mxu0 0.0
    %1346 = vmatpush1.msra.mxu0 0.0
    %1347 = vmatprep.subr.mxu0 0.0
    %1348 = vmatpush1.msra.mxu0 0.0
    %1349 = vmatprep.subr.mxu0 0.0
    %1350 = vmatpush1.msra.mxu0 0.0
    %1351 = vmatprep.subr.mxu0 0.0
    %1352 = vmatpush1.msra.mxu0 0.0
    %1353 = vmatprep.mubr.f32.mxu0 0.0
    %1354 = vmatmul.mubr.f32.gmra.mrb[0].mxu0 %v1250
    %v1355 = vpop.f32.mrb[0].mxu0
    %v1356 = vadd.f32 %v1278, %v1355
    %v1357 = vpop.f32.mrb[0].mxu0
    %v1358 = vadd.f32 %v1279, %v1357
    %1359 = vdwg.mxu0
    %1360 = vmatprep.subr.mxu0 %v804
    %1361 = vmatpush1.msra.mxu0 %v803
    %1362 = vmatprep.subr.mxu0 %v808
    %1363 = vmatpush1.msra.mxu0 %v807
    %1364 = vmatprep.subr.mxu0 %v812
    %1365 = vmatpush1.msra.mxu0 %v811
    %1366 = vmatprep.subr.mxu0 %v816
    %1367 = vmatpush1.msra.mxu0 %v815
    %1368 = vmatprep.subr.mxu0 %v820
    %1369 = vmatpush1.msra.mxu0 %v819
    %1370 = vmatprep.subr.mxu0 %v824
    %1371 = vmatpush1.msra.mxu0 %v823
    %1372 = vmatprep.subr.mxu0 %v828
    %1373 = vmatpush1.msra.mxu0 %v827
    %1374 = vmatprep.subr.mxu0 %v832
    %1375 = vmatpush1.msra.mxu0 %v831
    %1376 = vmatprep.subr.mxu0 %v836
    %1377 = vmatpush1.msra.mxu0 %v835
    %1378 = vmatprep.subr.mxu0 %v840
    %1379 = vmatpush1.msra.mxu0 %v839
    %1380 = vmatprep.subr.mxu0 %v844
    %1381 = vmatpush1.msra.mxu0 %v843
    %1382 = vmatprep.subr.mxu0 %v848
    %1383 = vmatpush1.msra.mxu0 %v847
    %1384 = vmatprep.subr.mxu0 %v852
    %1385 = vmatpush1.msra.mxu0 %v851
    %1386 = vmatprep.subr.mxu0 %v856
    %1387 = vmatpush1.msra.mxu0 %v855
    %1388 = vmatprep.subr.mxu0 %v860
    %1389 = vmatpush1.msra.mxu0 %v859
    %1390 = vmatprep.subr.mxu0 %v864
    %1391 = vmatpush1.msra.mxu0 %v863
    %1392 = vmatprep.subr.mxu0 0.0
    %1393 = vmatpush1.msra.mxu0 0.0
    %1394 = vmatprep.subr.mxu0 0.0
    %1395 = vmatpush1.msra.mxu0 0.0
    %1396 = vmatprep.subr.mxu0 0.0
    %1397 = vmatpush1.msra.mxu0 0.0
    %1398 = vmatprep.subr.mxu0 0.0
    %1399 = vmatpush1.msra.mxu0 0.0
    %1400 = vmatprep.subr.mxu0 0.0
    %1401 = vmatpush1.msra.mxu0 0.0
    %1402 = vmatprep.subr.mxu0 0.0
    %1403 = vmatpush1.msra.mxu0 0.0
    %1404 = vmatprep.subr.mxu0 0.0
    %1405 = vmatpush1.msra.mxu0 0.0
    %1406 = vmatprep.subr.mxu0 0.0
    %1407 = vmatpush1.msra.mxu0 0.0
    %1408 = vmatprep.subr.mxu0 0.0
    %1409 = vmatpush1.msra.mxu0 0.0
    %1410 = vmatprep.subr.mxu0 0.0
    %1411 = vmatpush1.msra.mxu0 0.0
    %1412 = vmatprep.subr.mxu0 0.0
    %1413 = vmatpush1.msra.mxu0 0.0
    %1414 = vmatprep.subr.mxu0 0.0
    %1415 = vmatpush1.msra.mxu0 0.0
    %1416 = vmatprep.subr.mxu0 0.0
    %1417 = vmatpush1.msra.mxu0 0.0
    %1418 = vmatprep.subr.mxu0 0.0
    %1419 = vmatpush1.msra.mxu0 0.0
    %1420 = vmatprep.subr.mxu0 0.0
    %1421 = vmatpush1.msra.mxu0 0.0
    %1422 = vmatprep.subr.mxu0 0.0
    %1423 = vmatpush1.msra.mxu0 0.0
    %1424 = vmatprep.mubr.f32.mxu0 0.0
    %1425 = vmatmul.mubr.f32.gmra.mrb[0].mxu0 %v1250
    %v1426 = vpop.f32.mrb[0].mxu0
    %v1427 = vadd.f32 %v1280, %v1426
    %v1428 = vpop.f32.mrb[0].mxu0
    %v1429 = vadd.f32 %v1281, %v1428
    %1430 = vdwg.mxu0
    %1431 = vmatprep.subr.mxu0 %v866
    %1432 = vmatpush1.msra.mxu0 %v865
    %1433 = vmatprep.subr.mxu0 %v870
    %1434 = vmatpush1.msra.mxu0 %v869
    %1435 = vmatprep.subr.mxu0 %v874
    %1436 = vmatpush1.msra.mxu0 %v873
    %1437 = vmatprep.subr.mxu0 %v878
    %1438 = vmatpush1.msra.mxu0 %v877
    %1439 = vmatprep.subr.mxu0 %v882
    %1440 = vmatpush1.msra.mxu0 %v881
    %1441 = vmatprep.subr.mxu0 %v886
    %1442 = vmatpush1.msra.mxu0 %v885
    %1443 = vmatprep.subr.mxu0 %v890
    %1444 = vmatpush1.msra.mxu0 %v889
    %1445 = vmatprep.subr.mxu0 %v894
    %1446 = vmatpush1.msra.mxu0 %v893
    %1447 = vmatprep.subr.mxu0 %v898
    %1448 = vmatpush1.msra.mxu0 %v897
    %1449 = vmatprep.subr.mxu0 %v902
    %1450 = vmatpush1.msra.mxu0 %v901
    %1451 = vmatprep.subr.mxu0 %v906
    %1452 = vmatpush1.msra.mxu0 %v905
    %1453 = vmatprep.subr.mxu0 %v910
    %1454 = vmatpush1.msra.mxu0 %v909
    %1455 = vmatprep.subr.mxu0 %v914
    %1456 = vmatpush1.msra.mxu0 %v913
    %1457 = vmatprep.subr.mxu0 %v918
    %1458 = vmatpush1.msra.mxu0 %v917
    %1459 = vmatprep.subr.mxu0 %v922
    %1460 = vmatpush1.msra.mxu0 %v921
    %1461 = vmatprep.subr.mxu0 %v926
    %1462 = vmatpush1.msra.mxu0 %v925
    %1463 = vmatprep.subr.mxu0 0.0
    %1464 = vmatpush1.msra.mxu0 0.0
    %1465 = vmatprep.subr.mxu0 0.0
    %1466 = vmatpush1.msra.mxu0 0.0
    %1467 = vmatprep.subr.mxu0 0.0
    %1468 = vmatpush1.msra.mxu0 0.0
    %1469 = vmatprep.subr.mxu0 0.0
    %1470 = vmatpush1.msra.mxu0 0.0
    %1471 = vmatprep.subr.mxu0 0.0
    %1472 = vmatpush1.msra.mxu0 0.0
    %1473 = vmatprep.subr.mxu0 0.0
    %1474 = vmatpush1.msra.mxu0 0.0
    %1475 = vmatprep.subr.mxu0 0.0
    %1476 = vmatpush1.msra.mxu0 0.0
    %1477 = vmatprep.subr.mxu0 0.0
    %1478 = vmatpush1.msra.mxu0 0.0
    %1479 = vmatprep.subr.mxu0 0.0
    %1480 = vmatpush1.msra.mxu0 0.0
    %1481 = vmatprep.subr.mxu0 0.0
    %1482 = vmatpush1.msra.mxu0 0.0
    %1483 = vmatprep.subr.mxu0 0.0
    %1484 = vmatpush1.msra.mxu0 0.0
    %1485 = vmatprep.subr.mxu0 0.0
    %1486 = vmatpush1.msra.mxu0 0.0
    %1487 = vmatprep.subr.mxu0 0.0
    %1488 = vmatpush1.msra.mxu0 0.0
    %1489 = vmatprep.subr.mxu0 0.0
    %1490 = vmatpush1.msra.mxu0 0.0
    %1491 = vmatprep.subr.mxu0 0.0
    %1492 = vmatpush1.msra.mxu0 0.0
    %1493 = vmatprep.subr.mxu0 0.0
    %1494 = vmatpush1.msra.mxu0 0.0
    %1495 = vmatprep.mubr.f32.mxu0 0.0
    %1496 = vmatmul.mubr.f32.gmra.mrb[0].mxu0 %v1274
    %v1497 = vpop.f32.mrb[0].mxu0
    %v1498 = vadd.f32 %v1285, %v1497
    %v1499 = vpop.f32.mrb[0].mxu0
    %v1500 = vadd.f32 %v1286, %v1499
    %1501 = vdwg.mxu0
    %1502 = vmatprep.subr.mxu0 %v868
    %1503 = vmatpush1.msra.mxu0 %v867
    %1504 = vmatprep.subr.mxu0 %v872
    %1505 = vmatpush1.msra.mxu0 %v871
    %1506 = vmatprep.subr.mxu0 %v876
    %1507 = vmatpush1.msra.mxu0 %v875
    %1508 = vmatprep.subr.mxu0 %v880
    %1509 = vmatpush1.msra.mxu0 %v879
    %1510 = vmatprep.subr.mxu0 %v884
    %1511 = vmatpush1.msra.mxu0 %v883
    %1512 = vmatprep.subr.mxu0 %v888
    %1513 = vmatpush1.msra.mxu0 %v887
    %1514 = vmatprep.subr.mxu0 %v892
    %1515 = vmatpush1.msra.mxu0 %v891
    %1516 = vmatprep.subr.mxu0 %v896
    %1517 = vmatpush1.msra.mxu0 %v895
    %1518 = vmatprep.subr.mxu0 %v900
    %1519 = vmatpush1.msra.mxu0 %v899
    %1520 = vmatprep.subr.mxu0 %v904
    %1521 = vmatpush1.msra.mxu0 %v903
    %1522 = vmatprep.subr.mxu0 %v908
    %1523 = vmatpush1.msra.mxu0 %v907
    %1524 = vmatprep.subr.mxu0 %v912
    %1525 = vmatpush1.msra.mxu0 %v911
    %1526 = vmatprep.subr.mxu0 %v916
    %1527 = vmatpush1.msra.mxu0 %v915
    %1528 = vmatprep.subr.mxu0 %v920
    %1529 = vmatpush1.msra.mxu0 %v919
    %1530 = vmatprep.subr.mxu0 %v924
    %1531 = vmatpush1.msra.mxu0 %v923
    %1532 = vmatprep.subr.mxu0 %v928
    %1533 = vmatpush1.msra.mxu0 %v927
    %1534 = vmatprep.subr.mxu0 0.0
    %1535 = vmatpush1.msra.mxu0 0.0
    %1536 = vmatprep.subr.mxu0 0.0
    %1537 = vmatpush1.msra.mxu0 0.0
    %1538 = vmatprep.subr.mxu0 0.0
    %1539 = vmatpush1.msra.mxu0 0.0
    %1540 = vmatprep.subr.mxu0 0.0
    %1541 = vmatpush1.msra.mxu0 0.0
    %1542 = vmatprep.subr.mxu0 0.0
    %1543 = vmatpush1.msra.mxu0 0.0
    %1544 = vmatprep.subr.mxu0 0.0
    %1545 = vmatpush1.msra.mxu0 0.0
    %1546 = vmatprep.subr.mxu0 0.0
    %1547 = vmatpush1.msra.mxu0 0.0
    %1548 = vmatprep.subr.mxu0 0.0
    %1549 = vmatpush1.msra.mxu0 0.0
    %1550 = vmatprep.subr.mxu0 0.0
    %1551 = vmatpush1.msra.mxu0 0.0
    %1552 = vmatprep.subr.mxu0 0.0
    %1553 = vmatpush1.msra.mxu0 0.0
    %1554 = vmatprep.subr.mxu0 0.0
    %1555 = vmatpush1.msra.mxu0 0.0
    %1556 = vmatprep.subr.mxu0 0.0
    %1557 = vmatpush1.msra.mxu0 0.0
    %1558 = vmatprep.subr.mxu0 0.0
    %1559 = vmatpush1.msra.mxu0 0.0
    %1560 = vmatprep.subr.mxu0 0.0
    %1561 = vmatpush1.msra.mxu0 0.0
    %1562 = vmatprep.subr.mxu0 0.0
    %1563 = vmatpush1.msra.mxu0 0.0
    %1564 = vmatprep.subr.mxu0 0.0
    %1565 = vmatpush1.msra.mxu0 0.0
    %1566 = vmatprep.mubr.f32.mxu0 0.0
    %1567 = vmatmul.mubr.f32.gmra.mrb[0].mxu0 %v1274
    %v1568 = vpop.f32.mrb[0].mxu0
    %v1569 = vadd.f32 %v1287, %v1568
    %v1570 = vpop.f32.mrb[0].mxu0
    %v1571 = vadd.f32 %v1288, %v1570
    %1572 = vdwg.mxu0
    %v1573 = vxor.u32 %v1356, 2147483648
    %v1574 = vmul.f32 %v1573, 1.442695
    %v1575 = vpow.pop %v1574
    %v1576 = vadd.f32 %v1575, 1.0
    %v1577 = vrcp.pop %v1576
    %v1578 = vmul.f32 1.0, %v1577
    %v1579 = vxor.u32 %v1358, 2147483648
    %v1580 = vmul.f32 %v1579, 1.442695
    %v1581 = vpow.pop %v1580
    %v1582 = vadd.f32 %v1581, 1.0
    %v1583 = vrcp.pop %v1582
    %v1584 = vmul.f32 1.0, %v1583
    %v1585 = vtanh.pop %v1427
    %v1586 = vxor.u32 %v1429, 2147483648
    %v1587 = vmul.f32 %v1586, 1.442695
    %v1588 = vpow.pop %v1587
    %v1589 = vadd.f32 %v1588, 1.0
    %v1590 = vrcp.pop %v1589
    %v1591 = vmul.f32 1.0, %v1590
    %v1592 = vmul.f32 %v1584, %v1248
    %v1593 = vmul.f32 %v1578, %v1585
    %v1594 = vadd.f32 %v1592, %v1593
    %v1595 = vtanh.pop %v1594
    %v1596 = vmul.f32 %v1591, %v1595
    %v1597 = vxor.u32 %v1498, 2147483648
    %v1598 = vmul.f32 %v1597, 1.442695
    %v1599 = vpow.pop %v1598
    %v1600 = vadd.f32 %v1599, 1.0
    %v1601 = vrcp.pop %v1600
    %v1602 = vmul.f32 1.0, %v1601
    %v1603 = vxor.u32 %v1500, 2147483648
    %v1604 = vmul.f32 %v1603, 1.442695
    %v1605 = vpow.pop %v1604
    %v1606 = vadd.f32 %v1605, 1.0
    %v1607 = vrcp.pop %v1606
    %v1608 = vmul.f32 1.0, %v1607
    %v1609 = vtanh.pop %v1569
    %v1610 = vxor.u32 %v1571, 2147483648
    %v1611 = vmul.f32 %v1610, 1.442695
    %v1612 = vpow.pop %v1611
    %v1613 = vadd.f32 %v1612, 1.0
    %v1614 = vrcp.pop %v1613
    %v1615 = vmul.f32 1.0, %v1614
    %v1616 = vmul.f32 %v1608, %v1272
    %v1617 = vmul.f32 %v1602, %v1609
    %v1618 = vadd.f32 %v1616, %v1617
    %v1619 = vtanh.pop %v1618
    %v1620 = vmul.f32 %v1615, %v1619
    %s1621 = smul.u32 2, 8
    %s1622 = smul.addr %s1621, 8
    %s1623 = scalar_lea.vmem [#allocation2], %s1622
    %v1624 = vld [vmem:[%s1623] sm:$0xff]
    %v1625 = vld [vmem:[%s1623 + $0x8] sm:$0xff]
    %v1626 = vld [vmem:[%s1623 + $0x10] sm:$0xff]
    %v1627 = vld [vmem:[%s1623 + $0x18] sm:$0xff]
    %s1628 = smul.u32 5, 8
    %s1629 = smul.addr %s1628, 8
    %s1630 = scalar_lea.vmem [#allocation2], %s1629
    %v1631 = vld [vmem:[%s1630 + $0x20] sm:$0xff]
    %v1632 = vld [vmem:[%s1630 + $0x28] sm:$0xff]
    %v1633 = vld [vmem:[%s1630 + $0x30] sm:$0xff]
    %v1634 = vld [vmem:[%s1630 + $0x38] sm:$0xff]
    %1635 = vmatprep.subr.mxu0 %v802
    %1636 = vmatpush1.msra.mxu0 %v801
    %1637 = vmatprep.subr.mxu0 %v806
    %1638 = vmatpush1.msra.mxu0 %v805
    %1639 = vmatprep.subr.mxu0 %v810
    %1640 = vmatpush1.msra.mxu0 %v809
    %1641 = vmatprep.subr.mxu0 %v814
    %1642 = vmatpush1.msra.mxu0 %v813
    %1643 = vmatprep.subr.mxu0 %v818
    %1644 = vmatpush1.msra.mxu0 %v817
    %1645 = vmatprep.subr.mxu0 %v822
    %1646 = vmatpush1.msra.mxu0 %v821
    %1647 = vmatprep.subr.mxu0 %v826
    %1648 = vmatpush1.msra.mxu0 %v825
    %1649 = vmatprep.subr.mxu0 %v830
    %1650 = vmatpush1.msra.mxu0 %v829
    %1651 = vmatprep.subr.mxu0 %v834
    %1652 = vmatpush1.msra.mxu0 %v833
    %1653 = vmatprep.subr.mxu0 %v838
    %1654 = vmatpush1.msra.mxu0 %v837
    %1655 = vmatprep.subr.mxu0 %v842
    %1656 = vmatpush1.msra.mxu0 %v841
    %1657 = vmatprep.subr.mxu0 %v846
    %1658 = vmatpush1.msra.mxu0 %v845
    %1659 = vmatprep.subr.mxu0 %v850
    %1660 = vmatpush1.msra.mxu0 %v849
    %1661 = vmatprep.subr.mxu0 %v854
    %1662 = vmatpush1.msra.mxu0 %v853
    %1663 = vmatprep.subr.mxu0 %v858
    %1664 = vmatpush1.msra.mxu0 %v857
    %1665 = vmatprep.subr.mxu0 %v862
    %1666 = vmatpush1.msra.mxu0 %v861
    %1667 = vmatprep.subr.mxu0 0.0
    %1668 = vmatpush1.msra.mxu0 0.0
    %1669 = vmatprep.subr.mxu0 0.0
    %1670 = vmatpush1.msra.mxu0 0.0
    %1671 = vmatprep.subr.mxu0 0.0
    %1672 = vmatpush1.msra.mxu0 0.0
    %1673 = vmatprep.subr.mxu0 0.0
    %1674 = vmatpush1.msra.mxu0 0.0
    %1675 = vmatprep.subr.mxu0 0.0
    %1676 = vmatpush1.msra.mxu0 0.0
    %1677 = vmatprep.subr.mxu0 0.0
    %1678 = vmatpush1.msra.mxu0 0.0
    %1679 = vmatprep.subr.mxu0 0.0
    %1680 = vmatpush1.msra.mxu0 0.0
    %1681 = vmatprep.subr.mxu0 0.0
    %1682 = vmatpush1.msra.mxu0 0.0
    %1683 = vmatprep.subr.mxu0 0.0
    %1684 = vmatpush1.msra.mxu0 0.0
    %1685 = vmatprep.subr.mxu0 0.0
    %1686 = vmatpush1.msra.mxu0 0.0
    %1687 = vmatprep.subr.mxu0 0.0
    %1688 = vmatpush1.msra.mxu0 0.0
    %1689 = vmatprep.subr.mxu0 0.0
    %1690 = vmatpush1.msra.mxu0 0.0
    %1691 = vmatprep.subr.mxu0 0.0
    %1692 = vmatpush1.msra.mxu0 0.0
    %1693 = vmatprep.subr.mxu0 0.0
    %1694 = vmatpush1.msra.mxu0 0.0
    %1695 = vmatprep.subr.mxu0 0.0
    %1696 = vmatpush1.msra.mxu0 0.0
    %1697 = vmatprep.subr.mxu0 0.0
    %1698 = vmatpush1.msra.mxu0 0.0
    %1699 = vmatprep.mubr.f32.mxu0 0.0
    %1700 = vmatmul.mubr.f32.gmra.mrb[0].mxu0 %v1596
    %v1701 = vpop.f32.mrb[0].mxu0
    %v1702 = vadd.f32 %v1624, %v1701
    %v1703 = vpop.f32.mrb[0].mxu0
    %v1704 = vadd.f32 %v1625, %v1703
    %1705 = vdwg.mxu0
    %1706 = vmatprep.subr.mxu0 %v804
    %1707 = vmatpush1.msra.mxu0 %v803
    %1708 = vmatprep.subr.mxu0 %v808
    %1709 = vmatpush1.msra.mxu0 %v807
    %1710 = vmatprep.subr.mxu0 %v812
    %1711 = vmatpush1.msra.mxu0 %v811
    %1712 = vmatprep.subr.mxu0 %v816
    %1713 = vmatpush1.msra.mxu0 %v815
    %1714 = vmatprep.subr.mxu0 %v820
    %1715 = vmatpush1.msra.mxu0 %v819
    %1716 = vmatprep.subr.mxu0 %v824
    %1717 = vmatpush1.msra.mxu0 %v823
    %1718 = vmatprep.subr.mxu0 %v828
    %1719 = vmatpush1.msra.mxu0 %v827
    %1720 = vmatprep.subr.mxu0 %v832
    %1721 = vmatpush1.msra.mxu0 %v831
    %1722 = vmatprep.subr.mxu0 %v836
    %1723 = vmatpush1.msra.mxu0 %v835
    %1724 = vmatprep.subr.mxu0 %v840
    %1725 = vmatpush1.msra.mxu0 %v839
    %1726 = vmatprep.subr.mxu0 %v844
    %1727 = vmatpush1.msra.mxu0 %v843
    %1728 = vmatprep.subr.mxu0 %v848
    %1729 = vmatpush1.msra.mxu0 %v847
    %1730 = vmatprep.subr.mxu0 %v852
    %1731 = vmatpush1.msra.mxu0 %v851
    %1732 = vmatprep.subr.mxu0 %v856
    %1733 = vmatpush1.msra.mxu0 %v855
    %1734 = vmatprep.subr.mxu0 %v860
    %1735 = vmatpush1.msra.mxu0 %v859
    %1736 = vmatprep.subr.mxu0 %v864
    %1737 = vmatpush1.msra.mxu0 %v863
    %1738 = vmatprep.subr.mxu0 0.0
    %1739 = vmatpush1.msra.mxu0 0.0
    %1740 = vmatprep.subr.mxu0 0.0
    %1741 = vmatpush1.msra.mxu0 0.0
    %1742 = vmatprep.subr.mxu0 0.0
    %1743 = vmatpush1.msra.mxu0 0.0
    %1744 = vmatprep.subr.mxu0 0.0
    %1745 = vmatpush1.msra.mxu0 0.0
    %1746 = vmatprep.subr.mxu0 0.0
    %1747 = vmatpush1.msra.mxu0 0.0
    %1748 = vmatprep.subr.mxu0 0.0
    %1749 = vmatpush1.msra.mxu0 0.0
    %1750 = vmatprep.subr.mxu0 0.0
    %1751 = vmatpush1.msra.mxu0 0.0
    %1752 = vmatprep.subr.mxu0 0.0
    %1753 = vmatpush1.msra.mxu0 0.0
    %1754 = vmatprep.subr.mxu0 0.0
    %1755 = vmatpush1.msra.mxu0 0.0
    %1756 = vmatprep.subr.mxu0 0.0
    %1757 = vmatpush1.msra.mxu0 0.0
    %1758 = vmatprep.subr.mxu0 0.0
    %1759 = vmatpush1.msra.mxu0 0.0
    %1760 = vmatprep.subr.mxu0 0.0
    %1761 = vmatpush1.msra.mxu0 0.0
    %1762 = vmatprep.subr.mxu0 0.0
    %1763 = vmatpush1.msra.mxu0 0.0
    %1764 = vmatprep.subr.mxu0 0.0
    %1765 = vmatpush1.msra.mxu0 0.0
    %1766 = vmatprep.subr.mxu0 0.0
    %1767 = vmatpush1.msra.mxu0 0.0
    %1768 = vmatprep.subr.mxu0 0.0
    %1769 = vmatpush1.msra.mxu0 0.0
    %1770 = vmatprep.mubr.f32.mxu0 0.0
    %1771 = vmatmul.mubr.f32.gmra.mrb[0].mxu0 %v1596
    %v1772 = vpop.f32.mrb[0].mxu0
    %v1773 = vadd.f32 %v1626, %v1772
    %v1774 = vpop.f32.mrb[0].mxu0
    %v1775 = vadd.f32 %v1627, %v1774
    %1776 = vdwg.mxu0
    %1777 = vmatprep.subr.mxu0 %v866
    %1778 = vmatpush1.msra.mxu0 %v865
    %1779 = vmatprep.subr.mxu0 %v870
    %1780 = vmatpush1.msra.mxu0 %v869
    %1781 = vmatprep.subr.mxu0 %v874
    %1782 = vmatpush1.msra.mxu0 %v873
    %1783 = vmatprep.subr.mxu0 %v878
    %1784 = vmatpush1.msra.mxu0 %v877
    %1785 = vmatprep.subr.mxu0 %v882
    %1786 = vmatpush1.msra.mxu0 %v881
    %1787 = vmatprep.subr.mxu0 %v886
    %1788 = vmatpush1.msra.mxu0 %v885
    %1789 = vmatprep.subr.mxu0 %v890
    %1790 = vmatpush1.msra.mxu0 %v889
    %1791 = vmatprep.subr.mxu0 %v894
    %1792 = vmatpush1.msra.mxu0 %v893
    %1793 = vmatprep.subr.mxu0 %v898
    %1794 = vmatpush1.msra.mxu0 %v897
    %1795 = vmatprep.subr.mxu0 %v902
    %1796 = vmatpush1.msra.mxu0 %v901
    %1797 = vmatprep.subr.mxu0 %v906
    %1798 = vmatpush1.msra.mxu0 %v905
    %1799 = vmatprep.subr.mxu0 %v910
    %1800 = vmatpush1.msra.mxu0 %v909
    %1801 = vmatprep.subr.mxu0 %v914
    %1802 = vmatpush1.msra.mxu0 %v913
    %1803 = vmatprep.subr.mxu0 %v918
    %1804 = vmatpush1.msra.mxu0 %v917
    %1805 = vmatprep.subr.mxu0 %v922
    %1806 = vmatpush1.msra.mxu0 %v921
    %1807 = vmatprep.subr.mxu0 %v926
    %1808 = vmatpush1.msra.mxu0 %v925
    %1809 = vmatprep.subr.mxu0 0.0
    %1810 = vmatpush1.msra.mxu0 0.0
    %1811 = vmatprep.subr.mxu0 0.0
    %1812 = vmatpush1.msra.mxu0 0.0
    %1813 = vmatprep.subr.mxu0 0.0
    %1814 = vmatpush1.msra.mxu0 0.0
    %1815 = vmatprep.subr.mxu0 0.0
    %1816 = vmatpush1.msra.mxu0 0.0
    %1817 = vmatprep.subr.mxu0 0.0
    %1818 = vmatpush1.msra.mxu0 0.0
    %1819 = vmatprep.subr.mxu0 0.0
    %1820 = vmatpush1.msra.mxu0 0.0
    %1821 = vmatprep.subr.mxu0 0.0
    %1822 = vmatpush1.msra.mxu0 0.0
    %1823 = vmatprep.subr.mxu0 0.0
    %1824 = vmatpush1.msra.mxu0 0.0
    %1825 = vmatprep.subr.mxu0 0.0
    %1826 = vmatpush1.msra.mxu0 0.0
    %1827 = vmatprep.subr.mxu0 0.0
    %1828 = vmatpush1.msra.mxu0 0.0
    %1829 = vmatprep.subr.mxu0 0.0
    %1830 = vmatpush1.msra.mxu0 0.0
    %1831 = vmatprep.subr.mxu0 0.0
    %1832 = vmatpush1.msra.mxu0 0.0
    %1833 = vmatprep.subr.mxu0 0.0
    %1834 = vmatpush1.msra.mxu0 0.0
    %1835 = vmatprep.subr.mxu0 0.0
    %1836 = vmatpush1.msra.mxu0 0.0
    %1837 = vmatprep.subr.mxu0 0.0
    %1838 = vmatpush1.msra.mxu0 0.0
    %1839 = vmatprep.subr.mxu0 0.0
    %1840 = vmatpush1.msra.mxu0 0.0
    %1841 = vmatprep.mubr.f32.mxu0 0.0
    %1842 = vmatmul.mubr.f32.gmra.mrb[0].mxu0 %v1620
    %v1843 = vpop.f32.mrb[0].mxu0
    %v1844 = vadd.f32 %v1631, %v1843
    %v1845 = vpop.f32.mrb[0].mxu0
    %v1846 = vadd.f32 %v1632, %v1845
    %1847 = vdwg.mxu0
    %1848 = vmatprep.subr.mxu0 %v868
    %1849 = vmatpush1.msra.mxu0 %v867
    %1850 = vmatprep.subr.mxu0 %v872
    %1851 = vmatpush1.msra.mxu0 %v871
    %1852 = vmatprep.subr.mxu0 %v876
    %1853 = vmatpush1.msra.mxu0 %v875
    %1854 = vmatprep.subr.mxu0 %v880
    %1855 = vmatpush1.msra.mxu0 %v879
    %1856 = vmatprep.subr.mxu0 %v884
    %1857 = vmatpush1.msra.mxu0 %v883
    %1858 = vmatprep.subr.mxu0 %v888
    %1859 = vmatpush1.msra.mxu0 %v887
    %1860 = vmatprep.subr.mxu0 %v892
    %1861 = vmatpush1.msra.mxu0 %v891
    %1862 = vmatprep.subr.mxu0 %v896
    %1863 = vmatpush1.msra.mxu0 %v895
    %1864 = vmatprep.subr.mxu0 %v900
    %1865 = vmatpush1.msra.mxu0 %v899
    %1866 = vmatprep.subr.mxu0 %v904
    %1867 = vmatpush1.msra.mxu0 %v903
    %1868 = vmatprep.subr.mxu0 %v908
    %1869 = vmatpush1.msra.mxu0 %v907
    %1870 = vmatprep.subr.mxu0 %v912
    %1871 = vmatpush1.msra.mxu0 %v911
    %1872 = vmatprep.subr.mxu0 %v916
    %1873 = vmatpush1.msra.mxu0 %v915
    %1874 = vmatprep.subr.mxu0 %v920
    %1875 = vmatpush1.msra.mxu0 %v919
    %1876 = vmatprep.subr.mxu0 %v924
    %1877 = vmatpush1.msra.mxu0 %v923
    %1878 = vmatprep.subr.mxu0 %v928
    %1879 = vmatpush1.msra.mxu0 %v927
    %1880 = vmatprep.subr.mxu0 0.0
    %1881 = vmatpush1.msra.mxu0 0.0
    %1882 = vmatprep.subr.mxu0 0.0
    %1883 = vmatpush1.msra.mxu0 0.0
    %1884 = vmatprep.subr.mxu0 0.0
    %1885 = vmatpush1.msra.mxu0 0.0
    %1886 = vmatprep.subr.mxu0 0.0
    %1887 = vmatpush1.msra.mxu0 0.0
    %1888 = vmatprep.subr.mxu0 0.0
    %1889 = vmatpush1.msra.mxu0 0.0
    %1890 = vmatprep.subr.mxu0 0.0
    %1891 = vmatpush1.msra.mxu0 0.0
    %1892 = vmatprep.subr.mxu0 0.0
    %1893 = vmatpush1.msra.mxu0 0.0
    %1894 = vmatprep.subr.mxu0 0.0
    %1895 = vmatpush1.msra.mxu0 0.0
    %1896 = vmatprep.subr.mxu0 0.0
    %1897 = vmatpush1.msra.mxu0 0.0
    %1898 = vmatprep.subr.mxu0 0.0
    %1899 = vmatpush1.msra.mxu0 0.0
    %1900 = vmatprep.subr.mxu0 0.0
    %1901 = vmatpush1.msra.mxu0 0.0
    %1902 = vmatprep.subr.mxu0 0.0
    %1903 = vmatpush1.msra.mxu0 0.0
    %1904 = vmatprep.subr.mxu0 0.0
    %1905 = vmatpush1.msra.mxu0 0.0
    %1906 = vmatprep.subr.mxu0 0.0
    %1907 = vmatpush1.msra.mxu0 0.0
    %1908 = vmatprep.subr.mxu0 0.0
    %1909 = vmatpush1.msra.mxu0 0.0
    %1910 = vmatprep.subr.mxu0 0.0
    %1911 = vmatpush1.msra.mxu0 0.0
    %1912 = vmatprep.mubr.f32.mxu0 0.0
    %1913 = vmatmul.mubr.f32.gmra.mrb[0].mxu0 %v1620
    %v1914 = vpop.f32.mrb[0].mxu0
    %v1915 = vadd.f32 %v1633, %v1914
    %v1916 = vpop.f32.mrb[0].mxu0
    %v1917 = vadd.f32 %v1634, %v1916
    %1918 = vdwg.mxu0
    %v1919 = vxor.u32 %v1702, 2147483648
    %v1920 = vmul.f32 %v1919, 1.442695
    %v1921 = vpow.pop %v1920
    %v1922 = vadd.f32 %v1921, 1.0
    %v1923 = vrcp.pop %v1922
    %v1924 = vmul.f32 1.0, %v1923
    %v1925 = vxor.u32 %v1704, 2147483648
    %v1926 = vmul.f32 %v1925, 1.442695
    %v1927 = vpow.pop %v1926
    %v1928 = vadd.f32 %v1927, 1.0
    %v1929 = vrcp.pop %v1928
    %v1930 = vmul.f32 1.0, %v1929
    %v1931 = vtanh.pop %v1773
    %v1932 = vxor.u32 %v1775, 2147483648
    %v1933 = vmul.f32 %v1932, 1.442695
    %v1934 = vpow.pop %v1933
    %v1935 = vadd.f32 %v1934, 1.0
    %v1936 = vrcp.pop %v1935
    %v1937 = vmul.f32 1.0, %v1936
    %v1938 = vmul.f32 %v1930, %v1594
    %v1939 = vmul.f32 %v1924, %v1931
    %v1940 = vadd.f32 %v1938, %v1939
    %v1941 = vtanh.pop %v1940
    %v1942 = vmul.f32 %v1937, %v1941
    %v1943 = vxor.u32 %v1844, 2147483648
    %v1944 = vmul.f32 %v1943, 1.442695
    %v1945 = vpow.pop %v1944
    %v1946 = vadd.f32 %v1945, 1.0
    %v1947 = vrcp.pop %v1946
    %v1948 = vmul.f32 1.0, %v1947
    %v1949 = vxor.u32 %v1846, 2147483648
    %v1950 = vmul.f32 %v1949, 1.442695
    %v1951 = vpow.pop %v1950
    %v1952 = vadd.f32 %v1951, 1.0
    %v1953 = vrcp.pop %v1952
    %v1954 = vmul.f32 1.0, %v1953
    %v1955 = vtanh.pop %v1915
    %v1956 = vxor.u32 %v1917, 2147483648
    %v1957 = vmul.f32 %v1956, 1.442695
    %v1958 = vpow.pop %v1957
    %v1959 = vadd.f32 %v1958, 1.0
    %v1960 = vrcp.pop %v1959
    %v1961 = vmul.f32 1.0, %v1960
    %v1962 = vmul.f32 %v1954, %v1618
    %v1963 = vmul.f32 %v1948, %v1955
    %v1964 = vadd.f32 %v1962, %v1963
    %v1965 = vtanh.pop %v1964
    %v1966 = vmul.f32 %v1961, %v1965
    %s1967 = smul.u32 3, 8
    %s1968 = smul.addr %s1967, 8
    %s1969 = scalar_lea.vmem [#allocation2], %s1968
    %v1970 = vld [vmem:[%s1969] sm:$0xff]
    %v1971 = vld [vmem:[%s1969 + $0x8] sm:$0xff]
    %v1972 = vld [vmem:[%s1969 + $0x10] sm:$0xff]
    %v1973 = vld [vmem:[%s1969 + $0x18] sm:$0xff]
    %s1974 = smul.u32 4, 8
    %s1975 = smul.addr %s1974, 8
    %s1976 = scalar_lea.vmem [#allocation2], %s1975
    %v1977 = vld [vmem:[%s1976 + $0x20] sm:$0xff]
    %v1978 = vld [vmem:[%s1976 + $0x28] sm:$0xff]
    %v1979 = vld [vmem:[%s1976 + $0x30] sm:$0xff]
    %v1980 = vld [vmem:[%s1976 + $0x38] sm:$0xff]
    %1981 = vmatprep.subr.mxu0 %v802
    %1982 = vmatpush1.msra.mxu0 %v801
    %1983 = vmatprep.subr.mxu0 %v806
    %1984 = vmatpush1.msra.mxu0 %v805
    %1985 = vmatprep.subr.mxu0 %v810
    %1986 = vmatpush1.msra.mxu0 %v809
    %1987 = vmatprep.subr.mxu0 %v814
    %1988 = vmatpush1.msra.mxu0 %v813
    %1989 = vmatprep.subr.mxu0 %v818
    %1990 = vmatpush1.msra.mxu0 %v817
    %1991 = vmatprep.subr.mxu0 %v822
    %1992 = vmatpush1.msra.mxu0 %v821
    %1993 = vmatprep.subr.mxu0 %v826
    %1994 = vmatpush1.msra.mxu0 %v825
    %1995 = vmatprep.subr.mxu0 %v830
    %1996 = vmatpush1.msra.mxu0 %v829
    %1997 = vmatprep.subr.mxu0 %v834
    %1998 = vmatpush1.msra.mxu0 %v833
    %1999 = vmatprep.subr.mxu0 %v838
    %2000 = vmatpush1.msra.mxu0 %v837
    %2001 = vmatprep.subr.mxu0 %v842
    %2002 = vmatpush1.msra.mxu0 %v841
    %2003 = vmatprep.subr.mxu0 %v846
    %2004 = vmatpush1.msra.mxu0 %v845
    %2005 = vmatprep.subr.mxu0 %v850
    %2006 = vmatpush1.msra.mxu0 %v849
    %2007 = vmatprep.subr.mxu0 %v854
    %2008 = vmatpush1.msra.mxu0 %v853
    %2009 = vmatprep.subr.mxu0 %v858
    %2010 = vmatpush1.msra.mxu0 %v857
    %2011 = vmatprep.subr.mxu0 %v862
    %2012 = vmatpush1.msra.mxu0 %v861
    %2013 = vmatprep.subr.mxu0 0.0
    %2014 = vmatpush1.msra.mxu0 0.0
    %2015 = vmatprep.subr.mxu0 0.0
    %2016 = vmatpush1.msra.mxu0 0.0
    %2017 = vmatprep.subr.mxu0 0.0
    %2018 = vmatpush1.msra.mxu0 0.0
    %2019 = vmatprep.subr.mxu0 0.0
    %2020 = vmatpush1.msra.mxu0 0.0
    %2021 = vmatprep.subr.mxu0 0.0
    %2022 = vmatpush1.msra.mxu0 0.0
    %2023 = vmatprep.subr.mxu0 0.0
    %2024 = vmatpush1.msra.mxu0 0.0
    %2025 = vmatprep.subr.mxu0 0.0
    %2026 = vmatpush1.msra.mxu0 0.0
    %2027 = vmatprep.subr.mxu0 0.0
    %2028 = vmatpush1.msra.mxu0 0.0
    %2029 = vmatprep.subr.mxu0 0.0
    %2030 = vmatpush1.msra.mxu0 0.0
    %2031 = vmatprep.subr.mxu0 0.0
    %2032 = vmatpush1.msra.mxu0 0.0
    %2033 = vmatprep.subr.mxu0 0.0
    %2034 = vmatpush1.msra.mxu0 0.0
    %2035 = vmatprep.subr.mxu0 0.0
    %2036 = vmatpush1.msra.mxu0 0.0
    %2037 = vmatprep.subr.mxu0 0.0
    %2038 = vmatpush1.msra.mxu0 0.0
    %2039 = vmatprep.subr.mxu0 0.0
    %2040 = vmatpush1.msra.mxu0 0.0
    %2041 = vmatprep.subr.mxu0 0.0
    %2042 = vmatpush1.msra.mxu0 0.0
    %2043 = vmatprep.subr.mxu0 0.0
    %2044 = vmatpush1.msra.mxu0 0.0
    %2045 = vmatprep.mubr.f32.mxu0 0.0
    %2046 = vmatmul.mubr.f32.gmra.mrb[0].mxu0 %v1942
    %v2047 = vpop.f32.mrb[0].mxu0
    %v2048 = vadd.f32 %v1970, %v2047
    %v2049 = vpop.f32.mrb[0].mxu0
    %v2050 = vadd.f32 %v1971, %v2049
    %2051 = vdwg.mxu0
    %2052 = vmatprep.subr.mxu0 %v804
    %2053 = vmatpush1.msra.mxu0 %v803
    %2054 = vmatprep.subr.mxu0 %v808
    %2055 = vmatpush1.msra.mxu0 %v807
    %2056 = vmatprep.subr.mxu0 %v812
    %2057 = vmatpush1.msra.mxu0 %v811
    %2058 = vmatprep.subr.mxu0 %v816
    %2059 = vmatpush1.msra.mxu0 %v815
    %2060 = vmatprep.subr.mxu0 %v820
    %2061 = vmatpush1.msra.mxu0 %v819
    %2062 = vmatprep.subr.mxu0 %v824
    %2063 = vmatpush1.msra.mxu0 %v823
    %2064 = vmatprep.subr.mxu0 %v828
    %2065 = vmatpush1.msra.mxu0 %v827
    %2066 = vmatprep.subr.mxu0 %v832
    %2067 = vmatpush1.msra.mxu0 %v831
    %2068 = vmatprep.subr.mxu0 %v836
    %2069 = vmatpush1.msra.mxu0 %v835
    %2070 = vmatprep.subr.mxu0 %v840
    %2071 = vmatpush1.msra.mxu0 %v839
    %2072 = vmatprep.subr.mxu0 %v844
    %2073 = vmatpush1.msra.mxu0 %v843
    %2074 = vmatprep.subr.mxu0 %v848
    %2075 = vmatpush1.msra.mxu0 %v847
    %2076 = vmatprep.subr.mxu0 %v852
    %2077 = vmatpush1.msra.mxu0 %v851
    %2078 = vmatprep.subr.mxu0 %v856
    %2079 = vmatpush1.msra.mxu0 %v855
    %2080 = vmatprep.subr.mxu0 %v860
    %2081 = vmatpush1.msra.mxu0 %v859
    %2082 = vmatprep.subr.mxu0 %v864
    %2083 = vmatpush1.msra.mxu0 %v863
    %2084 = vmatprep.subr.mxu0 0.0
    %2085 = vmatpush1.msra.mxu0 0.0
    %2086 = vmatprep.subr.mxu0 0.0
    %2087 = vmatpush1.msra.mxu0 0.0
    %2088 = vmatprep.subr.mxu0 0.0
    %2089 = vmatpush1.msra.mxu0 0.0
    %2090 = vmatprep.subr.mxu0 0.0
    %2091 = vmatpush1.msra.mxu0 0.0
    %2092 = vmatprep.subr.mxu0 0.0
    %2093 = vmatpush1.msra.mxu0 0.0
    %2094 = vmatprep.subr.mxu0 0.0
    %2095 = vmatpush1.msra.mxu0 0.0
    %2096 = vmatprep.subr.mxu0 0.0
    %2097 = vmatpush1.msra.mxu0 0.0
    %2098 = vmatprep.subr.mxu0 0.0
    %2099 = vmatpush1.msra.mxu0 0.0
    %2100 = vmatprep.subr.mxu0 0.0
    %2101 = vmatpush1.msra.mxu0 0.0
    %2102 = vmatprep.subr.mxu0 0.0
    %2103 = vmatpush1.msra.mxu0 0.0
    %2104 = vmatprep.subr.mxu0 0.0
    %2105 = vmatpush1.msra.mxu0 0.0
    %2106 = vmatprep.subr.mxu0 0.0
    %2107 = vmatpush1.msra.mxu0 0.0
    %2108 = vmatprep.subr.mxu0 0.0
    %2109 = vmatpush1.msra.mxu0 0.0
    %2110 = vmatprep.subr.mxu0 0.0
    %2111 = vmatpush1.msra.mxu0 0.0
    %2112 = vmatprep.subr.mxu0 0.0
    %2113 = vmatpush1.msra.mxu0 0.0
    %2114 = vmatprep.subr.mxu0 0.0
    %2115 = vmatpush1.msra.mxu0 0.0
    %2116 = vmatprep.mubr.f32.mxu0 0.0
    %2117 = vmatmul.mubr.f32.gmra.mrb[0].mxu0 %v1942
    %v2118 = vpop.f32.mrb[0].mxu0
    %v2119 = vadd.f32 %v1972, %v2118
    %v2120 = vpop.f32.mrb[0].mxu0
    %v2121 = vadd.f32 %v1973, %v2120
    %2122 = vdwg.mxu0
    %2123 = vmatprep.subr.mxu0 %v866
    %2124 = vmatpush1.msra.mxu0 %v865
    %2125 = vmatprep.subr.mxu0 %v870
    %2126 = vmatpush1.msra.mxu0 %v869
    %2127 = vmatprep.subr.mxu0 %v874
    %2128 = vmatpush1.msra.mxu0 %v873
    %2129 = vmatprep.subr.mxu0 %v878
    %2130 = vmatpush1.msra.mxu0 %v877
    %2131 = vmatprep.subr.mxu0 %v882
    %2132 = vmatpush1.msra.mxu0 %v881
    %2133 = vmatprep.subr.mxu0 %v886
    %2134 = vmatpush1.msra.mxu0 %v885
    %2135 = vmatprep.subr.mxu0 %v890
    %2136 = vmatpush1.msra.mxu0 %v889
    %2137 = vmatprep.subr.mxu0 %v894
    %2138 = vmatpush1.msra.mxu0 %v893
    %2139 = vmatprep.subr.mxu0 %v898
    %2140 = vmatpush1.msra.mxu0 %v897
    %2141 = vmatprep.subr.mxu0 %v902
    %2142 = vmatpush1.msra.mxu0 %v901
    %2143 = vmatprep.subr.mxu0 %v906
    %2144 = vmatpush1.msra.mxu0 %v905
    %2145 = vmatprep.subr.mxu0 %v910
    %2146 = vmatpush1.msra.mxu0 %v909
    %2147 = vmatprep.subr.mxu0 %v914
    %2148 = vmatpush1.msra.mxu0 %v913
    %2149 = vmatprep.subr.mxu0 %v918
    %2150 = vmatpush1.msra.mxu0 %v917
    %2151 = vmatprep.subr.mxu0 %v922
    %2152 = vmatpush1.msra.mxu0 %v921
    %2153 = vmatprep.subr.mxu0 %v926
    %2154 = vmatpush1.msra.mxu0 %v925
    %2155 = vmatprep.subr.mxu0 0.0
    %2156 = vmatpush1.msra.mxu0 0.0
    %2157 = vmatprep.subr.mxu0 0.0
    %2158 = vmatpush1.msra.mxu0 0.0
    %2159 = vmatprep.subr.mxu0 0.0
    %2160 = vmatpush1.msra.mxu0 0.0
    %2161 = vmatprep.subr.mxu0 0.0
    %2162 = vmatpush1.msra.mxu0 0.0
    %2163 = vmatprep.subr.mxu0 0.0
    %2164 = vmatpush1.msra.mxu0 0.0
    %2165 = vmatprep.subr.mxu0 0.0
    %2166 = vmatpush1.msra.mxu0 0.0
    %2167 = vmatprep.subr.mxu0 0.0
    %2168 = vmatpush1.msra.mxu0 0.0
    %2169 = vmatprep.subr.mxu0 0.0
    %2170 = vmatpush1.msra.mxu0 0.0
    %2171 = vmatprep.subr.mxu0 0.0
    %2172 = vmatpush1.msra.mxu0 0.0
    %2173 = vmatprep.subr.mxu0 0.0
    %2174 = vmatpush1.msra.mxu0 0.0
    %2175 = vmatprep.subr.mxu0 0.0
    %2176 = vmatpush1.msra.mxu0 0.0
    %2177 = vmatprep.subr.mxu0 0.0
    %2178 = vmatpush1.msra.mxu0 0.0
    %2179 = vmatprep.subr.mxu0 0.0
    %2180 = vmatpush1.msra.mxu0 0.0
    %2181 = vmatprep.subr.mxu0 0.0
    %2182 = vmatpush1.msra.mxu0 0.0
    %2183 = vmatprep.subr.mxu0 0.0
    %2184 = vmatpush1.msra.mxu0 0.0
    %2185 = vmatprep.subr.mxu0 0.0
    %2186 = vmatpush1.msra.mxu0 0.0
    %2187 = vmatprep.mubr.f32.mxu0 0.0
    %2188 = vmatmul.mubr.f32.gmra.mrb[0].mxu0 %v1966
    %v2189 = vpop.f32.mrb[0].mxu0
    %v2190 = vadd.f32 %v1977, %v2189
    %v2191 = vpop.f32.mrb[0].mxu0
    %v2192 = vadd.f32 %v1978, %v2191
    %2193 = vdwg.mxu0
    %2194 = vmatprep.subr.mxu0 %v868
    %2195 = vmatpush1.msra.mxu0 %v867
    %2196 = vmatprep.subr.mxu0 %v872
    %2197 = vmatpush1.msra.mxu0 %v871
    %2198 = vmatprep.subr.mxu0 %v876
    %2199 = vmatpush1.msra.mxu0 %v875
    %2200 = vmatprep.subr.mxu0 %v880
    %2201 = vmatpush1.msra.mxu0 %v879
    %2202 = vmatprep.subr.mxu0 %v884
    %2203 = vmatpush1.msra.mxu0 %v883
    %2204 = vmatprep.subr.mxu0 %v888
    %2205 = vmatpush1.msra.mxu0 %v887
    %2206 = vmatprep.subr.mxu0 %v892
    %2207 = vmatpush1.msra.mxu0 %v891
    %2208 = vmatprep.subr.mxu0 %v896
    %2209 = vmatpush1.msra.mxu0 %v895
    %2210 = vmatprep.subr.mxu0 %v900
    %2211 = vmatpush1.msra.mxu0 %v899
    %2212 = vmatprep.subr.mxu0 %v904
    %2213 = vmatpush1.msra.mxu0 %v903
    %2214 = vmatprep.subr.mxu0 %v908
    %2215 = vmatpush1.msra.mxu0 %v907
    %2216 = vmatprep.subr.mxu0 %v912
    %2217 = vmatpush1.msra.mxu0 %v911
    %2218 = vmatprep.subr.mxu0 %v916
    %2219 = vmatpush1.msra.mxu0 %v915
    %2220 = vmatprep.subr.mxu0 %v920
    %2221 = vmatpush1.msra.mxu0 %v919
    %2222 = vmatprep.subr.mxu0 %v924
    %2223 = vmatpush1.msra.mxu0 %v923
    %2224 = vmatprep.subr.mxu0 %v928
    %2225 = vmatpush1.msra.mxu0 %v927
    %2226 = vmatprep.subr.mxu0 0.0
    %2227 = vmatpush1.msra.mxu0 0.0
    %2228 = vmatprep.subr.mxu0 0.0
    %2229 = vmatpush1.msra.mxu0 0.0
    %2230 = vmatprep.subr.mxu0 0.0
    %2231 = vmatpush1.msra.mxu0 0.0
    %2232 = vmatprep.subr.mxu0 0.0
    %2233 = vmatpush1.msra.mxu0 0.0
    %2234 = vmatprep.subr.mxu0 0.0
    %2235 = vmatpush1.msra.mxu0 0.0
    %2236 = vmatprep.subr.mxu0 0.0
    %2237 = vmatpush1.msra.mxu0 0.0
    %2238 = vmatprep.subr.mxu0 0.0
    %2239 = vmatpush1.msra.mxu0 0.0
    %2240 = vmatprep.subr.mxu0 0.0
    %2241 = vmatpush1.msra.mxu0 0.0
    %2242 = vmatprep.subr.mxu0 0.0
    %2243 = vmatpush1.msra.mxu0 0.0
    %2244 = vmatprep.subr.mxu0 0.0
    %2245 = vmatpush1.msra.mxu0 0.0
    %2246 = vmatprep.subr.mxu0 0.0
    %2247 = vmatpush1.msra.mxu0 0.0
    %2248 = vmatprep.subr.mxu0 0.0
    %2249 = vmatpush1.msra.mxu0 0.0
    %2250 = vmatprep.subr.mxu0 0.0
    %2251 = vmatpush1.msra.mxu0 0.0
    %2252 = vmatprep.subr.mxu0 0.0
    %2253 = vmatpush1.msra.mxu0 0.0
    %2254 = vmatprep.subr.mxu0 0.0
    %2255 = vmatpush1.msra.mxu0 0.0
    %2256 = vmatprep.subr.mxu0 0.0
    %2257 = vmatpush1.msra.mxu0 0.0
    %2258 = vmatprep.mubr.f32.mxu0 0.0
    %2259 = vmatmul.mubr.f32.gmra.mrb[0].mxu0 %v1966
    %v2260 = vpop.f32.mrb[0].mxu0
    %v2261 = vadd.f32 %v1979, %v2260
    %v2262 = vpop.f32.mrb[0].mxu0
    %v2263 = vadd.f32 %v1980, %v2262
    %2264 = vdwg.mxu0
    %v2265 = vxor.u32 %v2048, 2147483648
    %v2266 = vmul.f32 %v2265, 1.442695
    %v2267 = vpow.pop %v2266
    %v2268 = vadd.f32 %v2267, 1.0
    %v2269 = vrcp.pop %v2268
    %v2270 = vmul.f32 1.0, %v2269
    %v2271 = vxor.u32 %v2050, 2147483648
    %v2272 = vmul.f32 %v2271, 1.442695
    %v2273 = vpow.pop %v2272
    %v2274 = vadd.f32 %v2273, 1.0
    %v2275 = vrcp.pop %v2274
    %v2276 = vmul.f32 1.0, %v2275
    %v2277 = vtanh.pop %v2119
    %v2278 = vxor.u32 %v2121, 2147483648
    %v2279 = vmul.f32 %v2278, 1.442695
    %v2280 = vpow.pop %v2279
    %v2281 = vadd.f32 %v2280, 1.0
    %v2282 = vrcp.pop %v2281
    %v2283 = vmul.f32 1.0, %v2282
    %v2284 = vmul.f32 %v2276, %v1940
    %v2285 = vmul.f32 %v2270, %v2277
    %v2286 = vadd.f32 %v2284, %v2285
    %v2287 = vtanh.pop %v2286
    %v2288 = vmul.f32 %v2283, %v2287
    %v2289 = vxor.u32 %v2190, 2147483648
    %v2290 = vmul.f32 %v2289, 1.442695
    %v2291 = vpow.pop %v2290
    %v2292 = vadd.f32 %v2291, 1.0
    %v2293 = vrcp.pop %v2292
    %v2294 = vmul.f32 1.0, %v2293
    %v2295 = vxor.u32 %v2192, 2147483648
    %v2296 = vmul.f32 %v2295, 1.442695
    %v2297 = vpow.pop %v2296
    %v2298 = vadd.f32 %v2297, 1.0
    %v2299 = vrcp.pop %v2298
    %v2300 = vmul.f32 1.0, %v2299
    %v2301 = vtanh.pop %v2261
    %v2302 = vxor.u32 %v2263, 2147483648
    %v2303 = vmul.f32 %v2302, 1.442695
    %v2304 = vpow.pop %v2303
    %v2305 = vadd.f32 %v2304, 1.0
    %v2306 = vrcp.pop %v2305
    %v2307 = vmul.f32 1.0, %v2306
    %v2308 = vmul.f32 %v2300, %v1964
    %v2309 = vmul.f32 %v2294, %v2301
    %v2310 = vadd.f32 %v2308, %v2309
    %v2311 = vtanh.pop %v2310
    %v2312 = vmul.f32 %v2307, %v2311
    %v2313 = vld [vmem:[%s1976] sm:$0xff]
    %v2314 = vld [vmem:[%s1976 + $0x8] sm:$0xff]
    %v2315 = vld [vmem:[%s1976 + $0x10] sm:$0xff]
    %v2316 = vld [vmem:[%s1976 + $0x18] sm:$0xff]
    %v2317 = vld [vmem:[%s1969 + $0x20] sm:$0xff]
    %v2318 = vld [vmem:[%s1969 + $0x28] sm:$0xff]
    %v2319 = vld [vmem:[%s1969 + $0x30] sm:$0xff]
    %v2320 = vld [vmem:[%s1969 + $0x38] sm:$0xff]
    %2321 = vmatprep.subr.mxu0 %v802
    %2322 = vmatpush1.msra.mxu0 %v801
    %2323 = vmatprep.subr.mxu0 %v806
    %2324 = vmatpush1.msra.mxu0 %v805
    %2325 = vmatprep.subr.mxu0 %v810
    %2326 = vmatpush1.msra.mxu0 %v809
    %2327 = vmatprep.subr.mxu0 %v814
    %2328 = vmatpush1.msra.mxu0 %v813
    %2329 = vmatprep.subr.mxu0 %v818
    %2330 = vmatpush1.msra.mxu0 %v817
    %2331 = vmatprep.subr.mxu0 %v822
    %2332 = vmatpush1.msra.mxu0 %v821
    %2333 = vmatprep.subr.mxu0 %v826
    %2334 = vmatpush1.msra.mxu0 %v825
    %2335 = vmatprep.subr.mxu0 %v830
    %2336 = vmatpush1.msra.mxu0 %v829
    %2337 = vmatprep.subr.mxu0 %v834
    %2338 = vmatpush1.msra.mxu0 %v833
    %2339 = vmatprep.subr.mxu0 %v838
    %2340 = vmatpush1.msra.mxu0 %v837
    %2341 = vmatprep.subr.mxu0 %v842
    %2342 = vmatpush1.msra.mxu0 %v841
    %2343 = vmatprep.subr.mxu0 %v846
    %2344 = vmatpush1.msra.mxu0 %v845
    %2345 = vmatprep.subr.mxu0 %v850
    %2346 = vmatpush1.msra.mxu0 %v849
    %2347 = vmatprep.subr.mxu0 %v854
    %2348 = vmatpush1.msra.mxu0 %v853
    %2349 = vmatprep.subr.mxu0 %v858
    %2350 = vmatpush1.msra.mxu0 %v857
    %2351 = vmatprep.subr.mxu0 %v862
    %2352 = vmatpush1.msra.mxu0 %v861
    %2353 = vmatprep.subr.mxu0 0.0
    %2354 = vmatpush1.msra.mxu0 0.0
    %2355 = vmatprep.subr.mxu0 0.0
    %2356 = vmatpush1.msra.mxu0 0.0
    %2357 = vmatprep.subr.mxu0 0.0
    %2358 = vmatpush1.msra.mxu0 0.0
    %2359 = vmatprep.subr.mxu0 0.0
    %2360 = vmatpush1.msra.mxu0 0.0
    %2361 = vmatprep.subr.mxu0 0.0
    %2362 = vmatpush1.msra.mxu0 0.0
    %2363 = vmatprep.subr.mxu0 0.0
    %2364 = vmatpush1.msra.mxu0 0.0
    %2365 = vmatprep.subr.mxu0 0.0
    %2366 = vmatpush1.msra.mxu0 0.0
    %2367 = vmatprep.subr.mxu0 0.0
    %2368 = vmatpush1.msra.mxu0 0.0
    %2369 = vmatprep.subr.mxu0 0.0
    %2370 = vmatpush1.msra.mxu0 0.0
    %2371 = vmatprep.subr.mxu0 0.0
    %2372 = vmatpush1.msra.mxu0 0.0
    %2373 = vmatprep.subr.mxu0 0.0
    %2374 = vmatpush1.msra.mxu0 0.0
    %2375 = vmatprep.subr.mxu0 0.0
    %2376 = vmatpush1.msra.mxu0 0.0
    %2377 = vmatprep.subr.mxu0 0.0
    %2378 = vmatpush1.msra.mxu0 0.0
    %2379 = vmatprep.subr.mxu0 0.0
    %2380 = vmatpush1.msra.mxu0 0.0
    %2381 = vmatprep.subr.mxu0 0.0
    %2382 = vmatpush1.msra.mxu0 0.0
    %2383 = vmatprep.subr.mxu0 0.0
    %2384 = vmatpush1.msra.mxu0 0.0
    %2385 = vmatprep.mubr.f32.mxu0 0.0
    %2386 = vmatmul.mubr.f32.gmra.mrb[0].mxu0 %v2288
    %v2387 = vpop.f32.mrb[0].mxu0
    %v2388 = vadd.f32 %v2313, %v2387
    %v2389 = vpop.f32.mrb[0].mxu0
    %v2390 = vadd.f32 %v2314, %v2389
    %2391 = vdwg.mxu0
    %2392 = vmatprep.subr.mxu0 %v804
    %2393 = vmatpush1.msra.mxu0 %v803
    %2394 = vmatprep.subr.mxu0 %v808
    %2395 = vmatpush1.msra.mxu0 %v807
    %2396 = vmatprep.subr.mxu0 %v812
    %2397 = vmatpush1.msra.mxu0 %v811
    %2398 = vmatprep.subr.mxu0 %v816
    %2399 = vmatpush1.msra.mxu0 %v815
    %2400 = vmatprep.subr.mxu0 %v820
    %2401 = vmatpush1.msra.mxu0 %v819
    %2402 = vmatprep.subr.mxu0 %v824
    %2403 = vmatpush1.msra.mxu0 %v823
    %2404 = vmatprep.subr.mxu0 %v828
    %2405 = vmatpush1.msra.mxu0 %v827
    %2406 = vmatprep.subr.mxu0 %v832
    %2407 = vmatpush1.msra.mxu0 %v831
    %2408 = vmatprep.subr.mxu0 %v836
    %2409 = vmatpush1.msra.mxu0 %v835
    %2410 = vmatprep.subr.mxu0 %v840
    %2411 = vmatpush1.msra.mxu0 %v839
    %2412 = vmatprep.subr.mxu0 %v844
    %2413 = vmatpush1.msra.mxu0 %v843
    %2414 = vmatprep.subr.mxu0 %v848
    %2415 = vmatpush1.msra.mxu0 %v847
    %2416 = vmatprep.subr.mxu0 %v852
    %2417 = vmatpush1.msra.mxu0 %v851
    %2418 = vmatprep.subr.mxu0 %v856
    %2419 = vmatpush1.msra.mxu0 %v855
    %2420 = vmatprep.subr.mxu0 %v860
    %2421 = vmatpush1.msra.mxu0 %v859
    %2422 = vmatprep.subr.mxu0 %v864
    %2423 = vmatpush1.msra.mxu0 %v863
    %2424 = vmatprep.subr.mxu0 0.0
    %2425 = vmatpush1.msra.mxu0 0.0
    %2426 = vmatprep.subr.mxu0 0.0
    %2427 = vmatpush1.msra.mxu0 0.0
    %2428 = vmatprep.subr.mxu0 0.0
    %2429 = vmatpush1.msra.mxu0 0.0
    %2430 = vmatprep.subr.mxu0 0.0
    %2431 = vmatpush1.msra.mxu0 0.0
    %2432 = vmatprep.subr.mxu0 0.0
    %2433 = vmatpush1.msra.mxu0 0.0
    %2434 = vmatprep.subr.mxu0 0.0
    %2435 = vmatpush1.msra.mxu0 0.0
    %2436 = vmatprep.subr.mxu0 0.0
    %2437 = vmatpush1.msra.mxu0 0.0
    %2438 = vmatprep.subr.mxu0 0.0
    %2439 = vmatpush1.msra.mxu0 0.0
    %2440 = vmatprep.subr.mxu0 0.0
    %2441 = vmatpush1.msra.mxu0 0.0
    %2442 = vmatprep.subr.mxu0 0.0
    %2443 = vmatpush1.msra.mxu0 0.0
    %2444 = vmatprep.subr.mxu0 0.0
    %2445 = vmatpush1.msra.mxu0 0.0
    %2446 = vmatprep.subr.mxu0 0.0
    %2447 = vmatpush1.msra.mxu0 0.0
    %2448 = vmatprep.subr.mxu0 0.0
    %2449 = vmatpush1.msra.mxu0 0.0
    %2450 = vmatprep.subr.mxu0 0.0
    %2451 = vmatpush1.msra.mxu0 0.0
    %2452 = vmatprep.subr.mxu0 0.0
    %2453 = vmatpush1.msra.mxu0 0.0
    %2454 = vmatprep.subr.mxu0 0.0
    %2455 = vmatpush1.msra.mxu0 0.0
    %2456 = vmatprep.mubr.f32.mxu0 0.0
    %2457 = vmatmul.mubr.f32.gmra.mrb[0].mxu0 %v2288
    %v2458 = vpop.f32.mrb[0].mxu0
    %v2459 = vadd.f32 %v2315, %v2458
    %v2460 = vpop.f32.mrb[0].mxu0
    %v2461 = vadd.f32 %v2316, %v2460
    %2462 = vdwg.mxu0
    %2463 = vmatprep.subr.mxu0 %v866
    %2464 = vmatpush1.msra.mxu0 %v865
    %2465 = vmatprep.subr.mxu0 %v870
    %2466 = vmatpush1.msra.mxu0 %v869
    %2467 = vmatprep.subr.mxu0 %v874
    %2468 = vmatpush1.msra.mxu0 %v873
    %2469 = vmatprep.subr.mxu0 %v878
    %2470 = vmatpush1.msra.mxu0 %v877
    %2471 = vmatprep.subr.mxu0 %v882
    %2472 = vmatpush1.msra.mxu0 %v881
    %2473 = vmatprep.subr.mxu0 %v886
    %2474 = vmatpush1.msra.mxu0 %v885
    %2475 = vmatprep.subr.mxu0 %v890
    %2476 = vmatpush1.msra.mxu0 %v889
    %2477 = vmatprep.subr.mxu0 %v894
    %2478 = vmatpush1.msra.mxu0 %v893
    %2479 = vmatprep.subr.mxu0 %v898
    %2480 = vmatpush1.msra.mxu0 %v897
    %2481 = vmatprep.subr.mxu0 %v902
    %2482 = vmatpush1.msra.mxu0 %v901
    %2483 = vmatprep.subr.mxu0 %v906
    %2484 = vmatpush1.msra.mxu0 %v905
    %2485 = vmatprep.subr.mxu0 %v910
    %2486 = vmatpush1.msra.mxu0 %v909
    %2487 = vmatprep.subr.mxu0 %v914
    %2488 = vmatpush1.msra.mxu0 %v913
    %2489 = vmatprep.subr.mxu0 %v918
    %2490 = vmatpush1.msra.mxu0 %v917
    %2491 = vmatprep.subr.mxu0 %v922
    %2492 = vmatpush1.msra.mxu0 %v921
    %2493 = vmatprep.subr.mxu0 %v926
    %2494 = vmatpush1.msra.mxu0 %v925
    %2495 = vmatprep.subr.mxu0 0.0
    %2496 = vmatpush1.msra.mxu0 0.0
    %2497 = vmatprep.subr.mxu0 0.0
    %2498 = vmatpush1.msra.mxu0 0.0
    %2499 = vmatprep.subr.mxu0 0.0
    %2500 = vmatpush1.msra.mxu0 0.0
    %2501 = vmatprep.subr.mxu0 0.0
    %2502 = vmatpush1.msra.mxu0 0.0
    %2503 = vmatprep.subr.mxu0 0.0
    %2504 = vmatpush1.msra.mxu0 0.0
    %2505 = vmatprep.subr.mxu0 0.0
    %2506 = vmatpush1.msra.mxu0 0.0
    %2507 = vmatprep.subr.mxu0 0.0
    %2508 = vmatpush1.msra.mxu0 0.0
    %2509 = vmatprep.subr.mxu0 0.0
    %2510 = vmatpush1.msra.mxu0 0.0
    %2511 = vmatprep.subr.mxu0 0.0
    %2512 = vmatpush1.msra.mxu0 0.0
    %2513 = vmatprep.subr.mxu0 0.0
    %2514 = vmatpush1.msra.mxu0 0.0
    %2515 = vmatprep.subr.mxu0 0.0
    %2516 = vmatpush1.msra.mxu0 0.0
    %2517 = vmatprep.subr.mxu0 0.0
    %2518 = vmatpush1.msra.mxu0 0.0
    %2519 = vmatprep.subr.mxu0 0.0
    %2520 = vmatpush1.msra.mxu0 0.0
    %2521 = vmatprep.subr.mxu0 0.0
    %2522 = vmatpush1.msra.mxu0 0.0
    %2523 = vmatprep.subr.mxu0 0.0
    %2524 = vmatpush1.msra.mxu0 0.0
    %2525 = vmatprep.subr.mxu0 0.0
    %2526 = vmatpush1.msra.mxu0 0.0
    %2527 = vmatprep.mubr.f32.mxu0 0.0
    %2528 = vmatmul.mubr.f32.gmra.mrb[0].mxu0 %v2312
    %v2529 = vpop.f32.mrb[0].mxu0
    %v2530 = vadd.f32 %v2317, %v2529
    %v2531 = vpop.f32.mrb[0].mxu0
    %v2532 = vadd.f32 %v2318, %v2531
    %2533 = vdwg.mxu0
    %2534 = vmatprep.subr.mxu0 %v868
    %2535 = vmatpush1.msra.mxu0 %v867
    %2536 = vmatprep.subr.mxu0 %v872
    %2537 = vmatpush1.msra.mxu0 %v871
    %2538 = vmatprep.subr.mxu0 %v876
    %2539 = vmatpush1.msra.mxu0 %v875
    %2540 = vmatprep.subr.mxu0 %v880
    %2541 = vmatpush1.msra.mxu0 %v879
    %2542 = vmatprep.subr.mxu0 %v884
    %2543 = vmatpush1.msra.mxu0 %v883
    %2544 = vmatprep.subr.mxu0 %v888
    %2545 = vmatpush1.msra.mxu0 %v887
    %2546 = vmatprep.subr.mxu0 %v892
    %2547 = vmatpush1.msra.mxu0 %v891
    %2548 = vmatprep.subr.mxu0 %v896
    %2549 = vmatpush1.msra.mxu0 %v895
    %2550 = vmatprep.subr.mxu0 %v900
    %2551 = vmatpush1.msra.mxu0 %v899
    %2552 = vmatprep.subr.mxu0 %v904
    %2553 = vmatpush1.msra.mxu0 %v903
    %2554 = vmatprep.subr.mxu0 %v908
    %2555 = vmatpush1.msra.mxu0 %v907
    %2556 = vmatprep.subr.mxu0 %v912
    %2557 = vmatpush1.msra.mxu0 %v911
    %2558 = vmatprep.subr.mxu0 %v916
    %2559 = vmatpush1.msra.mxu0 %v915
    %2560 = vmatprep.subr.mxu0 %v920
    %2561 = vmatpush1.msra.mxu0 %v919
    %2562 = vmatprep.subr.mxu0 %v924
    %2563 = vmatpush1.msra.mxu0 %v923
    %2564 = vmatprep.subr.mxu0 %v928
    %2565 = vmatpush1.msra.mxu0 %v927
    %2566 = vmatprep.subr.mxu0 0.0
    %2567 = vmatpush1.msra.mxu0 0.0
    %2568 = vmatprep.subr.mxu0 0.0
    %2569 = vmatpush1.msra.mxu0 0.0
    %2570 = vmatprep.subr.mxu0 0.0
    %2571 = vmatpush1.msra.mxu0 0.0
    %2572 = vmatprep.subr.mxu0 0.0
    %2573 = vmatpush1.msra.mxu0 0.0
    %2574 = vmatprep.subr.mxu0 0.0
    %2575 = vmatpush1.msra.mxu0 0.0
    %2576 = vmatprep.subr.mxu0 0.0
    %2577 = vmatpush1.msra.mxu0 0.0
    %2578 = vmatprep.subr.mxu0 0.0
    %2579 = vmatpush1.msra.mxu0 0.0
    %2580 = vmatprep.subr.mxu0 0.0
    %2581 = vmatpush1.msra.mxu0 0.0
    %2582 = vmatprep.subr.mxu0 0.0
    %2583 = vmatpush1.msra.mxu0 0.0
    %2584 = vmatprep.subr.mxu0 0.0
    %2585 = vmatpush1.msra.mxu0 0.0
    %2586 = vmatprep.subr.mxu0 0.0
    %2587 = vmatpush1.msra.mxu0 0.0
    %2588 = vmatprep.subr.mxu0 0.0
    %2589 = vmatpush1.msra.mxu0 0.0
    %2590 = vmatprep.subr.mxu0 0.0
    %2591 = vmatpush1.msra.mxu0 0.0
    %2592 = vmatprep.subr.mxu0 0.0
    %2593 = vmatpush1.msra.mxu0 0.0
    %2594 = vmatprep.subr.mxu0 0.0
    %2595 = vmatpush1.msra.mxu0 0.0
    %2596 = vmatprep.subr.mxu0 0.0
    %2597 = vmatpush1.msra.mxu0 0.0
    %2598 = vmatprep.mubr.f32.mxu0 0.0
    %2599 = vmatmul.mubr.f32.gmra.mrb[0].mxu0 %v2312
    %v2600 = vpop.f32.mrb[0].mxu0
    %v2601 = vadd.f32 %v2319, %v2600
    %v2602 = vpop.f32.mrb[0].mxu0
    %v2603 = vadd.f32 %v2320, %v2602
    %2604 = vdwg.mxu0
    %v2605 = vxor.u32 %v2388, 2147483648
    %v2606 = vmul.f32 %v2605, 1.442695
    %v2607 = vpow.pop %v2606
    %v2608 = vadd.f32 %v2607, 1.0
    %v2609 = vrcp.pop %v2608
    %v2610 = vmul.f32 1.0, %v2609
    %v2611 = vxor.u32 %v2390, 2147483648
    %v2612 = vmul.f32 %v2611, 1.442695
    %v2613 = vpow.pop %v2612
    %v2614 = vadd.f32 %v2613, 1.0
    %v2615 = vrcp.pop %v2614
    %v2616 = vmul.f32 1.0, %v2615
    %v2617 = vtanh.pop %v2459
    %v2618 = vxor.u32 %v2461, 2147483648
    %v2619 = vmul.f32 %v2618, 1.442695
    %v2620 = vpow.pop %v2619
    %v2621 = vadd.f32 %v2620, 1.0
    %v2622 = vrcp.pop %v2621
    %v2623 = vmul.f32 1.0, %v2622
    %v2624 = vmul.f32 %v2616, %v2286
    %v2625 = vmul.f32 %v2610, %v2617
    %v2626 = vadd.f32 %v2624, %v2625
    %v2627 = vtanh.pop %v2626
    %v2628 = vmul.f32 %v2623, %v2627
    %v2629 = vxor.u32 %v2530, 2147483648
    %v2630 = vmul.f32 %v2629, 1.442695
    %v2631 = vpow.pop %v2630
    %v2632 = vadd.f32 %v2631, 1.0
    %v2633 = vrcp.pop %v2632
    %v2634 = vmul.f32 1.0, %v2633
    %v2635 = vxor.u32 %v2532, 2147483648
    %v2636 = vmul.f32 %v2635, 1.442695
    %v2637 = vpow.pop %v2636
    %v2638 = vadd.f32 %v2637, 1.0
    %v2639 = vrcp.pop %v2638
    %v2640 = vmul.f32 1.0, %v2639
    %v2641 = vtanh.pop %v2601
    %v2642 = vxor.u32 %v2603, 2147483648
    %v2643 = vmul.f32 %v2642, 1.442695
    %v2644 = vpow.pop %v2643
    %v2645 = vadd.f32 %v2644, 1.0
    %v2646 = vrcp.pop %v2645
    %v2647 = vmul.f32 1.0, %v2646
    %v2648 = vmul.f32 %v2640, %v2310
    %v2649 = vmul.f32 %v2634, %v2641
    %v2650 = vadd.f32 %v2648, %v2649
    %v2651 = vtanh.pop %v2650
    %v2652 = vmul.f32 %v2647, %v2651
    %v2653 = vld [vmem:[%s1630] sm:$0xff]
    %v2654 = vld [vmem:[%s1630 + $0x8] sm:$0xff]
    %v2655 = vld [vmem:[%s1630 + $0x10] sm:$0xff]
    %v2656 = vld [vmem:[%s1630 + $0x18] sm:$0xff]
    %v2657 = vld [vmem:[%s1623 + $0x20] sm:$0xff]
    %v2658 = vld [vmem:[%s1623 + $0x28] sm:$0xff]
    %v2659 = vld [vmem:[%s1623 + $0x30] sm:$0xff]
    %v2660 = vld [vmem:[%s1623 + $0x38] sm:$0xff]
    %2661 = vmatprep.subr.mxu0 %v802
    %2662 = vmatpush1.msra.mxu0 %v801
    %2663 = vmatprep.subr.mxu0 %v806
    %2664 = vmatpush1.msra.mxu0 %v805
    %2665 = vmatprep.subr.mxu0 %v810
    %2666 = vmatpush1.msra.mxu0 %v809
    %2667 = vmatprep.subr.mxu0 %v814
    %2668 = vmatpush1.msra.mxu0 %v813
    %2669 = vmatprep.subr.mxu0 %v818
    %2670 = vmatpush1.msra.mxu0 %v817
    %2671 = vmatprep.subr.mxu0 %v822
    %2672 = vmatpush1.msra.mxu0 %v821
    %2673 = vmatprep.subr.mxu0 %v826
    %2674 = vmatpush1.msra.mxu0 %v825
    %2675 = vmatprep.subr.mxu0 %v830
    %2676 = vmatpush1.msra.mxu0 %v829
    %2677 = vmatprep.subr.mxu0 %v834
    %2678 = vmatpush1.msra.mxu0 %v833
    %2679 = vmatprep.subr.mxu0 %v838
    %2680 = vmatpush1.msra.mxu0 %v837
    %2681 = vmatprep.subr.mxu0 %v842
    %2682 = vmatpush1.msra.mxu0 %v841
    %2683 = vmatprep.subr.mxu0 %v846
    %2684 = vmatpush1.msra.mxu0 %v845
    %2685 = vmatprep.subr.mxu0 %v850
    %2686 = vmatpush1.msra.mxu0 %v849
    %2687 = vmatprep.subr.mxu0 %v854
    %2688 = vmatpush1.msra.mxu0 %v853
    %2689 = vmatprep.subr.mxu0 %v858
    %2690 = vmatpush1.msra.mxu0 %v857
    %2691 = vmatprep.subr.mxu0 %v862
    %2692 = vmatpush1.msra.mxu0 %v861
    %2693 = vmatprep.subr.mxu0 0.0
    %2694 = vmatpush1.msra.mxu0 0.0
    %2695 = vmatprep.subr.mxu0 0.0
    %2696 = vmatpush1.msra.mxu0 0.0
    %2697 = vmatprep.subr.mxu0 0.0
    %2698 = vmatpush1.msra.mxu0 0.0
    %2699 = vmatprep.subr.mxu0 0.0
    %2700 = vmatpush1.msra.mxu0 0.0
    %2701 = vmatprep.subr.mxu0 0.0
    %2702 = vmatpush1.msra.mxu0 0.0
    %2703 = vmatprep.subr.mxu0 0.0
    %2704 = vmatpush1.msra.mxu0 0.0
    %2705 = vmatprep.subr.mxu0 0.0
    %2706 = vmatpush1.msra.mxu0 0.0
    %2707 = vmatprep.subr.mxu0 0.0
    %2708 = vmatpush1.msra.mxu0 0.0
    %2709 = vmatprep.subr.mxu0 0.0
    %2710 = vmatpush1.msra.mxu0 0.0
    %2711 = vmatprep.subr.mxu0 0.0
    %2712 = vmatpush1.msra.mxu0 0.0
    %2713 = vmatprep.subr.mxu0 0.0
    %2714 = vmatpush1.msra.mxu0 0.0
    %2715 = vmatprep.subr.mxu0 0.0
    %2716 = vmatpush1.msra.mxu0 0.0
    %2717 = vmatprep.subr.mxu0 0.0
    %2718 = vmatpush1.msra.mxu0 0.0
    %2719 = vmatprep.subr.mxu0 0.0
    %2720 = vmatpush1.msra.mxu0 0.0
    %2721 = vmatprep.subr.mxu0 0.0
    %2722 = vmatpush1.msra.mxu0 0.0
    %2723 = vmatprep.subr.mxu0 0.0
    %2724 = vmatpush1.msra.mxu0 0.0
    %2725 = vmatprep.mubr.f32.mxu0 0.0
    %2726 = vmatmul.mubr.f32.gmra.mrb[0].mxu0 %v2628
    %v2727 = vpop.f32.mrb[0].mxu0
    %v2728 = vadd.f32 %v2653, %v2727
    %v2729 = vpop.f32.mrb[0].mxu0
    %v2730 = vadd.f32 %v2654, %v2729
    %2731 = vdwg.mxu0
    %2732 = vmatprep.subr.mxu0 %v804
    %2733 = vmatpush1.msra.mxu0 %v803
    %2734 = vmatprep.subr.mxu0 %v808
    %2735 = vmatpush1.msra.mxu0 %v807
    %2736 = vmatprep.subr.mxu0 %v812
    %2737 = vmatpush1.msra.mxu0 %v811
    %2738 = vmatprep.subr.mxu0 %v816
    %2739 = vmatpush1.msra.mxu0 %v815
    %2740 = vmatprep.subr.mxu0 %v820
    %2741 = vmatpush1.msra.mxu0 %v819
    %2742 = vmatprep.subr.mxu0 %v824
    %2743 = vmatpush1.msra.mxu0 %v823
    %2744 = vmatprep.subr.mxu0 %v828
    %2745 = vmatpush1.msra.mxu0 %v827
    %2746 = vmatprep.subr.mxu0 %v832
    %2747 = vmatpush1.msra.mxu0 %v831
    %2748 = vmatprep.subr.mxu0 %v836
    %2749 = vmatpush1.msra.mxu0 %v835
    %2750 = vmatprep.subr.mxu0 %v840
    %2751 = vmatpush1.msra.mxu0 %v839
    %2752 = vmatprep.subr.mxu0 %v844
    %2753 = vmatpush1.msra.mxu0 %v843
    %2754 = vmatprep.subr.mxu0 %v848
    %2755 = vmatpush1.msra.mxu0 %v847
    %2756 = vmatprep.subr.mxu0 %v852
    %2757 = vmatpush1.msra.mxu0 %v851
    %2758 = vmatprep.subr.mxu0 %v856
    %2759 = vmatpush1.msra.mxu0 %v855
    %2760 = vmatprep.subr.mxu0 %v860
    %2761 = vmatpush1.msra.mxu0 %v859
    %2762 = vmatprep.subr.mxu0 %v864
    %2763 = vmatpush1.msra.mxu0 %v863
    %2764 = vmatprep.subr.mxu0 0.0
    %2765 = vmatpush1.msra.mxu0 0.0
    %2766 = vmatprep.subr.mxu0 0.0
    %2767 = vmatpush1.msra.mxu0 0.0
    %2768 = vmatprep.subr.mxu0 0.0
    %2769 = vmatpush1.msra.mxu0 0.0
    %2770 = vmatprep.subr.mxu0 0.0
    %2771 = vmatpush1.msra.mxu0 0.0
    %2772 = vmatprep.subr.mxu0 0.0
    %2773 = vmatpush1.msra.mxu0 0.0
    %2774 = vmatprep.subr.mxu0 0.0
    %2775 = vmatpush1.msra.mxu0 0.0
    %2776 = vmatprep.subr.mxu0 0.0
    %2777 = vmatpush1.msra.mxu0 0.0
    %2778 = vmatprep.subr.mxu0 0.0
    %2779 = vmatpush1.msra.mxu0 0.0
    %2780 = vmatprep.subr.mxu0 0.0
    %2781 = vmatpush1.msra.mxu0 0.0
    %2782 = vmatprep.subr.mxu0 0.0
    %2783 = vmatpush1.msra.mxu0 0.0
    %2784 = vmatprep.subr.mxu0 0.0
    %2785 = vmatpush1.msra.mxu0 0.0
    %2786 = vmatprep.subr.mxu0 0.0
    %2787 = vmatpush1.msra.mxu0 0.0
    %2788 = vmatprep.subr.mxu0 0.0
    %2789 = vmatpush1.msra.mxu0 0.0
    %2790 = vmatprep.subr.mxu0 0.0
    %2791 = vmatpush1.msra.mxu0 0.0
    %2792 = vmatprep.subr.mxu0 0.0
    %2793 = vmatpush1.msra.mxu0 0.0
    %2794 = vmatprep.subr.mxu0 0.0
    %2795 = vmatpush1.msra.mxu0 0.0
    %2796 = vmatprep.mubr.f32.mxu0 0.0
    %2797 = vmatmul.mubr.f32.gmra.mrb[0].mxu0 %v2628
    %v2798 = vpop.f32.mrb[0].mxu0
    %v2799 = vadd.f32 %v2655, %v2798
    %v2800 = vpop.f32.mrb[0].mxu0
    %v2801 = vadd.f32 %v2656, %v2800
    %2802 = vdwg.mxu0
    %2803 = vmatprep.subr.mxu0 %v866
    %2804 = vmatpush1.msra.mxu0 %v865
    %2805 = vmatprep.subr.mxu0 %v870
    %2806 = vmatpush1.msra.mxu0 %v869
    %2807 = vmatprep.subr.mxu0 %v874
    %2808 = vmatpush1.msra.mxu0 %v873
    %2809 = vmatprep.subr.mxu0 %v878
    %2810 = vmatpush1.msra.mxu0 %v877
    %2811 = vmatprep.subr.mxu0 %v882
    %2812 = vmatpush1.msra.mxu0 %v881
    %2813 = vmatprep.subr.mxu0 %v886
    %2814 = vmatpush1.msra.mxu0 %v885
    %2815 = vmatprep.subr.mxu0 %v890
    %2816 = vmatpush1.msra.mxu0 %v889
    %2817 = vmatprep.subr.mxu0 %v894
    %2818 = vmatpush1.msra.mxu0 %v893
    %2819 = vmatprep.subr.mxu0 %v898
    %2820 = vmatpush1.msra.mxu0 %v897
    %2821 = vmatprep.subr.mxu0 %v902
    %2822 = vmatpush1.msra.mxu0 %v901
    %2823 = vmatprep.subr.mxu0 %v906
    %2824 = vmatpush1.msra.mxu0 %v905
    %2825 = vmatprep.subr.mxu0 %v910
    %2826 = vmatpush1.msra.mxu0 %v909
    %2827 = vmatprep.subr.mxu0 %v914
    %2828 = vmatpush1.msra.mxu0 %v913
    %2829 = vmatprep.subr.mxu0 %v918
    %2830 = vmatpush1.msra.mxu0 %v917
    %2831 = vmatprep.subr.mxu0 %v922
    %2832 = vmatpush1.msra.mxu0 %v921
    %2833 = vmatprep.subr.mxu0 %v926
    %2834 = vmatpush1.msra.mxu0 %v925
    %2835 = vmatprep.subr.mxu0 0.0
    %2836 = vmatpush1.msra.mxu0 0.0
    %2837 = vmatprep.subr.mxu0 0.0
    %2838 = vmatpush1.msra.mxu0 0.0
    %2839 = vmatprep.subr.mxu0 0.0
    %2840 = vmatpush1.msra.mxu0 0.0
    %2841 = vmatprep.subr.mxu0 0.0
    %2842 = vmatpush1.msra.mxu0 0.0
    %2843 = vmatprep.subr.mxu0 0.0
    %2844 = vmatpush1.msra.mxu0 0.0
    %2845 = vmatprep.subr.mxu0 0.0
    %2846 = vmatpush1.msra.mxu0 0.0
    %2847 = vmatprep.subr.mxu0 0.0
    %2848 = vmatpush1.msra.mxu0 0.0
    %2849 = vmatprep.subr.mxu0 0.0
    %2850 = vmatpush1.msra.mxu0 0.0
    %2851 = vmatprep.subr.mxu0 0.0
    %2852 = vmatpush1.msra.mxu0 0.0
    %2853 = vmatprep.subr.mxu0 0.0
    %2854 = vmatpush1.msra.mxu0 0.0
    %2855 = vmatprep.subr.mxu0 0.0
    %2856 = vmatpush1.msra.mxu0 0.0
    %2857 = vmatprep.subr.mxu0 0.0
    %2858 = vmatpush1.msra.mxu0 0.0
    %2859 = vmatprep.subr.mxu0 0.0
    %2860 = vmatpush1.msra.mxu0 0.0
    %2861 = vmatprep.subr.mxu0 0.0
    %2862 = vmatpush1.msra.mxu0 0.0
    %2863 = vmatprep.subr.mxu0 0.0
    %2864 = vmatpush1.msra.mxu0 0.0
    %2865 = vmatprep.subr.mxu0 0.0
    %2866 = vmatpush1.msra.mxu0 0.0
    %2867 = vmatprep.mubr.f32.mxu0 0.0
    %2868 = vmatmul.mubr.f32.gmra.mrb[0].mxu0 %v2652
    %v2869 = vpop.f32.mrb[0].mxu0
    %v2870 = vadd.f32 %v2657, %v2869
    %v2871 = vpop.f32.mrb[0].mxu0
    %v2872 = vadd.f32 %v2658, %v2871
    %2873 = vdwg.mxu0
    %2874 = vmatprep.subr.mxu0 %v868
    %2875 = vmatpush1.msra.mxu0 %v867
    %2876 = vmatprep.subr.mxu0 %v872
    %2877 = vmatpush1.msra.mxu0 %v871
    %2878 = vmatprep.subr.mxu0 %v876
    %2879 = vmatpush1.msra.mxu0 %v875
    %2880 = vmatprep.subr.mxu0 %v880
    %2881 = vmatpush1.msra.mxu0 %v879
    %2882 = vmatprep.subr.mxu0 %v884
    %2883 = vmatpush1.msra.mxu0 %v883
    %2884 = vmatprep.subr.mxu0 %v888
    %2885 = vmatpush1.msra.mxu0 %v887
    %2886 = vmatprep.subr.mxu0 %v892
    %2887 = vmatpush1.msra.mxu0 %v891
    %2888 = vmatprep.subr.mxu0 %v896
    %2889 = vmatpush1.msra.mxu0 %v895
    %2890 = vmatprep.subr.mxu0 %v900
    %2891 = vmatpush1.msra.mxu0 %v899
    %2892 = vmatprep.subr.mxu0 %v904
    %2893 = vmatpush1.msra.mxu0 %v903
    %2894 = vmatprep.subr.mxu0 %v908
    %2895 = vmatpush1.msra.mxu0 %v907
    %2896 = vmatprep.subr.mxu0 %v912
    %2897 = vmatpush1.msra.mxu0 %v911
    %2898 = vmatprep.subr.mxu0 %v916
    %2899 = vmatpush1.msra.mxu0 %v915
    %2900 = vmatprep.subr.mxu0 %v920
    %2901 = vmatpush1.msra.mxu0 %v919
    %2902 = vmatprep.subr.mxu0 %v924
    %2903 = vmatpush1.msra.mxu0 %v923
    %2904 = vmatprep.subr.mxu0 %v928
    %2905 = vmatpush1.msra.mxu0 %v927
    %2906 = vmatprep.subr.mxu0 0.0
    %2907 = vmatpush1.msra.mxu0 0.0
    %2908 = vmatprep.subr.mxu0 0.0
    %2909 = vmatpush1.msra.mxu0 0.0
    %2910 = vmatprep.subr.mxu0 0.0
    %2911 = vmatpush1.msra.mxu0 0.0
    %2912 = vmatprep.subr.mxu0 0.0
    %2913 = vmatpush1.msra.mxu0 0.0
    %2914 = vmatprep.subr.mxu0 0.0
    %2915 = vmatpush1.msra.mxu0 0.0
    %2916 = vmatprep.subr.mxu0 0.0
    %2917 = vmatpush1.msra.mxu0 0.0
    %2918 = vmatprep.subr.mxu0 0.0
    %2919 = vmatpush1.msra.mxu0 0.0
    %2920 = vmatprep.subr.mxu0 0.0
    %2921 = vmatpush1.msra.mxu0 0.0
    %2922 = vmatprep.subr.mxu0 0.0
    %2923 = vmatpush1.msra.mxu0 0.0
    %2924 = vmatprep.subr.mxu0 0.0
    %2925 = vmatpush1.msra.mxu0 0.0
    %2926 = vmatprep.subr.mxu0 0.0
    %2927 = vmatpush1.msra.mxu0 0.0
    %2928 = vmatprep.subr.mxu0 0.0
    %2929 = vmatpush1.msra.mxu0 0.0
    %2930 = vmatprep.subr.mxu0 0.0
    %2931 = vmatpush1.msra.mxu0 0.0
    %2932 = vmatprep.subr.mxu0 0.0
    %2933 = vmatpush1.msra.mxu0 0.0
    %2934 = vmatprep.subr.mxu0 0.0
    %2935 = vmatpush1.msra.mxu0 0.0
    %2936 = vmatprep.subr.mxu0 0.0
    %2937 = vmatpush1.msra.mxu0 0.0
    %2938 = vmatprep.mubr.f32.mxu0 0.0
    %2939 = vmatmul.mubr.f32.gmra.mrb[0].mxu0 %v2652
    %v2940 = vpop.f32.mrb[0].mxu0
    %v2941 = vadd.f32 %v2659, %v2940
    %v2942 = vpop.f32.mrb[0].mxu0
    %v2943 = vadd.f32 %v2660, %v2942
    %2944 = vdwg.mxu0
    %v2945 = vxor.u32 %v2728, 2147483648
    %v2946 = vmul.f32 %v2945, 1.442695
    %v2947 = vpow.pop %v2946
    %v2948 = vadd.f32 %v2947, 1.0
    %v2949 = vrcp.pop %v2948
    %v2950 = vmul.f32 1.0, %v2949
    %v2951 = vxor.u32 %v2730, 2147483648
    %v2952 = vmul.f32 %v2951, 1.442695
    %v2953 = vpow.pop %v2952
    %v2954 = vadd.f32 %v2953, 1.0
    %v2955 = vrcp.pop %v2954
    %v2956 = vmul.f32 1.0, %v2955
    %v2957 = vtanh.pop %v2799
    %v2958 = vxor.u32 %v2801, 2147483648
    %v2959 = vmul.f32 %v2958, 1.442695
    %v2960 = vpow.pop %v2959
    %v2961 = vadd.f32 %v2960, 1.0
    %v2962 = vrcp.pop %v2961
    %v2963 = vmul.f32 1.0, %v2962
    %v2964 = vmul.f32 %v2956, %v2626
    %v2965 = vmul.f32 %v2950, %v2957
    %v2966 = vadd.f32 %v2964, %v2965
    %v2967 = vtanh.pop %v2966
    %v2968 = vmul.f32 %v2963, %v2967
    %v2969 = vxor.u32 %v2870, 2147483648
    %v2970 = vmul.f32 %v2969, 1.442695
    %v2971 = vpow.pop %v2970
    %v2972 = vadd.f32 %v2971, 1.0
    %v2973 = vrcp.pop %v2972
    %v2974 = vmul.f32 1.0, %v2973
    %v2975 = vxor.u32 %v2872, 2147483648
    %v2976 = vmul.f32 %v2975, 1.442695
    %v2977 = vpow.pop %v2976
    %v2978 = vadd.f32 %v2977, 1.0
    %v2979 = vrcp.pop %v2978
    %v2980 = vmul.f32 1.0, %v2979
    %v2981 = vtanh.pop %v2941
    %v2982 = vxor.u32 %v2943, 2147483648
    %v2983 = vmul.f32 %v2982, 1.442695
    %v2984 = vpow.pop %v2983
    %v2985 = vadd.f32 %v2984, 1.0
    %v2986 = vrcp.pop %v2985
    %v2987 = vmul.f32 1.0, %v2986
    %v2988 = vmul.f32 %v2980, %v2650
    %v2989 = vmul.f32 %v2974, %v2981
    %v2990 = vadd.f32 %v2988, %v2989
    %v2991 = vtanh.pop %v2990
    %v2992 = vmul.f32 %v2987, %v2991
    %v2993 = vld [vmem:[%s1284] sm:$0xff]
    %v2994 = vld [vmem:[%s1284 + $0x8] sm:$0xff]
    %v2995 = vld [vmem:[%s1284 + $0x10] sm:$0xff]
    %v2996 = vld [vmem:[%s1284 + $0x18] sm:$0xff]
    %v2997 = vld [vmem:[%s1277 + $0x20] sm:$0xff]
    %v2998 = vld [vmem:[%s1277 + $0x28] sm:$0xff]
    %v2999 = vld [vmem:[%s1277 + $0x30] sm:$0xff]
    %v3000 = vld [vmem:[%s1277 + $0x38] sm:$0xff]
    %3001 = vmatprep.subr.mxu0 %v802
    %3002 = vmatpush1.msra.mxu0 %v801
    %3003 = vmatprep.subr.mxu0 %v806
    %3004 = vmatpush1.msra.mxu0 %v805
    %3005 = vmatprep.subr.mxu0 %v810
    %3006 = vmatpush1.msra.mxu0 %v809
    %3007 = vmatprep.subr.mxu0 %v814
    %3008 = vmatpush1.msra.mxu0 %v813
    %3009 = vmatprep.subr.mxu0 %v818
    %3010 = vmatpush1.msra.mxu0 %v817
    %3011 = vmatprep.subr.mxu0 %v822
    %3012 = vmatpush1.msra.mxu0 %v821
    %3013 = vmatprep.subr.mxu0 %v826
    %3014 = vmatpush1.msra.mxu0 %v825
    %3015 = vmatprep.subr.mxu0 %v830
    %3016 = vmatpush1.msra.mxu0 %v829
    %3017 = vmatprep.subr.mxu0 %v834
    %3018 = vmatpush1.msra.mxu0 %v833
    %3019 = vmatprep.subr.mxu0 %v838
    %3020 = vmatpush1.msra.mxu0 %v837
    %3021 = vmatprep.subr.mxu0 %v842
    %3022 = vmatpush1.msra.mxu0 %v841
    %3023 = vmatprep.subr.mxu0 %v846
    %3024 = vmatpush1.msra.mxu0 %v845
    %3025 = vmatprep.subr.mxu0 %v850
    %3026 = vmatpush1.msra.mxu0 %v849
    %3027 = vmatprep.subr.mxu0 %v854
    %3028 = vmatpush1.msra.mxu0 %v853
    %3029 = vmatprep.subr.mxu0 %v858
    %3030 = vmatpush1.msra.mxu0 %v857
    %3031 = vmatprep.subr.mxu0 %v862
    %3032 = vmatpush1.msra.mxu0 %v861
    %3033 = vmatprep.subr.mxu0 0.0
    %3034 = vmatpush1.msra.mxu0 0.0
    %3035 = vmatprep.subr.mxu0 0.0
    %3036 = vmatpush1.msra.mxu0 0.0
    %3037 = vmatprep.subr.mxu0 0.0
    %3038 = vmatpush1.msra.mxu0 0.0
    %3039 = vmatprep.subr.mxu0 0.0
    %3040 = vmatpush1.msra.mxu0 0.0
    %3041 = vmatprep.subr.mxu0 0.0
    %3042 = vmatpush1.msra.mxu0 0.0
    %3043 = vmatprep.subr.mxu0 0.0
    %3044 = vmatpush1.msra.mxu0 0.0
    %3045 = vmatprep.subr.mxu0 0.0
    %3046 = vmatpush1.msra.mxu0 0.0
    %3047 = vmatprep.subr.mxu0 0.0
    %3048 = vmatpush1.msra.mxu0 0.0
    %3049 = vmatprep.subr.mxu0 0.0
    %3050 = vmatpush1.msra.mxu0 0.0
    %3051 = vmatprep.subr.mxu0 0.0
    %3052 = vmatpush1.msra.mxu0 0.0
    %3053 = vmatprep.subr.mxu0 0.0
    %3054 = vmatpush1.msra.mxu0 0.0
    %3055 = vmatprep.subr.mxu0 0.0
    %3056 = vmatpush1.msra.mxu0 0.0
    %3057 = vmatprep.subr.mxu0 0.0
    %3058 = vmatpush1.msra.mxu0 0.0
    %3059 = vmatprep.subr.mxu0 0.0
    %3060 = vmatpush1.msra.mxu0 0.0
    %3061 = vmatprep.subr.mxu0 0.0
    %3062 = vmatpush1.msra.mxu0 0.0
    %3063 = vmatprep.subr.mxu0 0.0
    %3064 = vmatpush1.msra.mxu0 0.0
    %3065 = vmatprep.mubr.f32.mxu0 0.0
    %3066 = vmatmul.mubr.f32.gmra.mrb[0].mxu0 %v2968
    %v3067 = vpop.f32.mrb[0].mxu0
    %v3068 = vadd.f32 %v2993, %v3067
    %v3069 = vpop.f32.mrb[0].mxu0
    %v3070 = vadd.f32 %v2994, %v3069
    %3071 = vdwg.mxu0
    %3072 = vmatprep.subr.mxu0 %v804
    %3073 = vmatpush1.msra.mxu0 %v803
    %3074 = vmatprep.subr.mxu0 %v808
    %3075 = vmatpush1.msra.mxu0 %v807
    %3076 = vmatprep.subr.mxu0 %v812
    %3077 = vmatpush1.msra.mxu0 %v811
    %3078 = vmatprep.subr.mxu0 %v816
    %3079 = vmatpush1.msra.mxu0 %v815
    %3080 = vmatprep.subr.mxu0 %v820
    %3081 = vmatpush1.msra.mxu0 %v819
    %3082 = vmatprep.subr.mxu0 %v824
    %3083 = vmatpush1.msra.mxu0 %v823
    %3084 = vmatprep.subr.mxu0 %v828
    %3085 = vmatpush1.msra.mxu0 %v827
    %3086 = vmatprep.subr.mxu0 %v832
    %3087 = vmatpush1.msra.mxu0 %v831
    %3088 = vmatprep.subr.mxu0 %v836
    %3089 = vmatpush1.msra.mxu0 %v835
    %3090 = vmatprep.subr.mxu0 %v840
    %3091 = vmatpush1.msra.mxu0 %v839
    %3092 = vmatprep.subr.mxu0 %v844
    %3093 = vmatpush1.msra.mxu0 %v843
    %3094 = vmatprep.subr.mxu0 %v848
    %3095 = vmatpush1.msra.mxu0 %v847
    %3096 = vmatprep.subr.mxu0 %v852
    %3097 = vmatpush1.msra.mxu0 %v851
    %3098 = vmatprep.subr.mxu0 %v856
    %3099 = vmatpush1.msra.mxu0 %v855
    %3100 = vmatprep.subr.mxu0 %v860
    %3101 = vmatpush1.msra.mxu0 %v859
    %3102 = vmatprep.subr.mxu0 %v864
    %3103 = vmatpush1.msra.mxu0 %v863
    %3104 = vmatprep.subr.mxu0 0.0
    %3105 = vmatpush1.msra.mxu0 0.0
    %3106 = vmatprep.subr.mxu0 0.0
    %3107 = vmatpush1.msra.mxu0 0.0
    %3108 = vmatprep.subr.mxu0 0.0
    %3109 = vmatpush1.msra.mxu0 0.0
    %3110 = vmatprep.subr.mxu0 0.0
    %3111 = vmatpush1.msra.mxu0 0.0
    %3112 = vmatprep.subr.mxu0 0.0
    %3113 = vmatpush1.msra.mxu0 0.0
    %3114 = vmatprep.subr.mxu0 0.0
    %3115 = vmatpush1.msra.mxu0 0.0
    %3116 = vmatprep.subr.mxu0 0.0
    %3117 = vmatpush1.msra.mxu0 0.0
    %3118 = vmatprep.subr.mxu0 0.0
    %3119 = vmatpush1.msra.mxu0 0.0
    %3120 = vmatprep.subr.mxu0 0.0
    %3121 = vmatpush1.msra.mxu0 0.0
    %3122 = vmatprep.subr.mxu0 0.0
    %3123 = vmatpush1.msra.mxu0 0.0
    %3124 = vmatprep.subr.mxu0 0.0
    %3125 = vmatpush1.msra.mxu0 0.0
    %3126 = vmatprep.subr.mxu0 0.0
    %3127 = vmatpush1.msra.mxu0 0.0
    %3128 = vmatprep.subr.mxu0 0.0
    %3129 = vmatpush1.msra.mxu0 0.0
    %3130 = vmatprep.subr.mxu0 0.0
    %3131 = vmatpush1.msra.mxu0 0.0
    %3132 = vmatprep.subr.mxu0 0.0
    %3133 = vmatpush1.msra.mxu0 0.0
    %3134 = vmatprep.subr.mxu0 0.0
    %3135 = vmatpush1.msra.mxu0 0.0
    %3136 = vmatprep.mubr.f32.mxu0 0.0
    %3137 = vmatmul.mubr.f32.gmra.mrb[0].mxu0 %v2968
    %v3138 = vpop.f32.mrb[0].mxu0
    %v3139 = vadd.f32 %v2995, %v3138
    %v3140 = vpop.f32.mrb[0].mxu0
    %v3141 = vadd.f32 %v2996, %v3140
    %3142 = vdwg.mxu0
    %3143 = vmatprep.subr.mxu0 %v866
    %3144 = vmatpush1.msra.mxu0 %v865
    %3145 = vmatprep.subr.mxu0 %v870
    %3146 = vmatpush1.msra.mxu0 %v869
    %3147 = vmatprep.subr.mxu0 %v874
    %3148 = vmatpush1.msra.mxu0 %v873
    %3149 = vmatprep.subr.mxu0 %v878
    %3150 = vmatpush1.msra.mxu0 %v877
    %3151 = vmatprep.subr.mxu0 %v882
    %3152 = vmatpush1.msra.mxu0 %v881
    %3153 = vmatprep.subr.mxu0 %v886
    %3154 = vmatpush1.msra.mxu0 %v885
    %3155 = vmatprep.subr.mxu0 %v890
    %3156 = vmatpush1.msra.mxu0 %v889
    %3157 = vmatprep.subr.mxu0 %v894
    %3158 = vmatpush1.msra.mxu0 %v893
    %3159 = vmatprep.subr.mxu0 %v898
    %3160 = vmatpush1.msra.mxu0 %v897
    %3161 = vmatprep.subr.mxu0 %v902
    %3162 = vmatpush1.msra.mxu0 %v901
    %3163 = vmatprep.subr.mxu0 %v906
    %3164 = vmatpush1.msra.mxu0 %v905
    %3165 = vmatprep.subr.mxu0 %v910
    %3166 = vmatpush1.msra.mxu0 %v909
    %3167 = vmatprep.subr.mxu0 %v914
    %3168 = vmatpush1.msra.mxu0 %v913
    %3169 = vmatprep.subr.mxu0 %v918
    %3170 = vmatpush1.msra.mxu0 %v917
    %3171 = vmatprep.subr.mxu0 %v922
    %3172 = vmatpush1.msra.mxu0 %v921
    %3173 = vmatprep.subr.mxu0 %v926
    %3174 = vmatpush1.msra.mxu0 %v925
    %3175 = vmatprep.subr.mxu0 0.0
    %3176 = vmatpush1.msra.mxu0 0.0
    %3177 = vmatprep.subr.mxu0 0.0
    %3178 = vmatpush1.msra.mxu0 0.0
    %3179 = vmatprep.subr.mxu0 0.0
    %3180 = vmatpush1.msra.mxu0 0.0
    %3181 = vmatprep.subr.mxu0 0.0
    %3182 = vmatpush1.msra.mxu0 0.0
    %3183 = vmatprep.subr.mxu0 0.0
    %3184 = vmatpush1.msra.mxu0 0.0
    %3185 = vmatprep.subr.mxu0 0.0
    %3186 = vmatpush1.msra.mxu0 0.0
    %3187 = vmatprep.subr.mxu0 0.0
    %3188 = vmatpush1.msra.mxu0 0.0
    %3189 = vmatprep.subr.mxu0 0.0
    %3190 = vmatpush1.msra.mxu0 0.0
    %3191 = vmatprep.subr.mxu0 0.0
    %3192 = vmatpush1.msra.mxu0 0.0
    %3193 = vmatprep.subr.mxu0 0.0
    %3194 = vmatpush1.msra.mxu0 0.0
    %3195 = vmatprep.subr.mxu0 0.0
    %3196 = vmatpush1.msra.mxu0 0.0
    %3197 = vmatprep.subr.mxu0 0.0
    %3198 = vmatpush1.msra.mxu0 0.0
    %3199 = vmatprep.subr.mxu0 0.0
    %3200 = vmatpush1.msra.mxu0 0.0
    %3201 = vmatprep.subr.mxu0 0.0
    %3202 = vmatpush1.msra.mxu0 0.0
    %3203 = vmatprep.subr.mxu0 0.0
    %3204 = vmatpush1.msra.mxu0 0.0
    %3205 = vmatprep.subr.mxu0 0.0
    %3206 = vmatpush1.msra.mxu0 0.0
    %3207 = vmatprep.mubr.f32.mxu0 0.0
    %3208 = vmatmul.mubr.f32.gmra.mrb[0].mxu0 %v2992
    %v3209 = vpop.f32.mrb[0].mxu0
    %v3210 = vadd.f32 %v2997, %v3209
    %v3211 = vpop.f32.mrb[0].mxu0
    %v3212 = vadd.f32 %v2998, %v3211
    %3213 = vdwg.mxu0
    %3214 = vmatprep.subr.mxu0 %v868
    %3215 = vmatpush1.msra.mxu0 %v867
    %3216 = vmatprep.subr.mxu0 %v872
    %3217 = vmatpush1.msra.mxu0 %v871
    %3218 = vmatprep.subr.mxu0 %v876
    %3219 = vmatpush1.msra.mxu0 %v875
    %3220 = vmatprep.subr.mxu0 %v880
    %3221 = vmatpush1.msra.mxu0 %v879
    %3222 = vmatprep.subr.mxu0 %v884
    %3223 = vmatpush1.msra.mxu0 %v883
    %3224 = vmatprep.subr.mxu0 %v888
    %3225 = vmatpush1.msra.mxu0 %v887
    %3226 = vmatprep.subr.mxu0 %v892
    %3227 = vmatpush1.msra.mxu0 %v891
    %3228 = vmatprep.subr.mxu0 %v896
    %3229 = vmatpush1.msra.mxu0 %v895
    %3230 = vmatprep.subr.mxu0 %v900
    %3231 = vmatpush1.msra.mxu0 %v899
    %3232 = vmatprep.subr.mxu0 %v904
    %3233 = vmatpush1.msra.mxu0 %v903
    %3234 = vmatprep.subr.mxu0 %v908
    %3235 = vmatpush1.msra.mxu0 %v907
    %3236 = vmatprep.subr.mxu0 %v912
    %3237 = vmatpush1.msra.mxu0 %v911
    %3238 = vmatprep.subr.mxu0 %v916
    %3239 = vmatpush1.msra.mxu0 %v915
    %3240 = vmatprep.subr.mxu0 %v920
    %3241 = vmatpush1.msra.mxu0 %v919
    %3242 = vmatprep.subr.mxu0 %v924
    %3243 = vmatpush1.msra.mxu0 %v923
    %3244 = vmatprep.subr.mxu0 %v928
    %3245 = vmatpush1.msra.mxu0 %v927
    %3246 = vmatprep.subr.mxu0 0.0
    %3247 = vmatpush1.msra.mxu0 0.0
    %3248 = vmatprep.subr.mxu0 0.0
    %3249 = vmatpush1.msra.mxu0 0.0
    %3250 = vmatprep.subr.mxu0 0.0
    %3251 = vmatpush1.msra.mxu0 0.0
    %3252 = vmatprep.subr.mxu0 0.0
    %3253 = vmatpush1.msra.mxu0 0.0
    %3254 = vmatprep.subr.mxu0 0.0
    %3255 = vmatpush1.msra.mxu0 0.0
    %3256 = vmatprep.subr.mxu0 0.0
    %3257 = vmatpush1.msra.mxu0 0.0
    %3258 = vmatprep.subr.mxu0 0.0
    %3259 = vmatpush1.msra.mxu0 0.0
    %3260 = vmatprep.subr.mxu0 0.0
    %3261 = vmatpush1.msra.mxu0 0.0
    %3262 = vmatprep.subr.mxu0 0.0
    %3263 = vmatpush1.msra.mxu0 0.0
    %3264 = vmatprep.subr.mxu0 0.0
    %3265 = vmatpush1.msra.mxu0 0.0
    %3266 = vmatprep.subr.mxu0 0.0
    %3267 = vmatpush1.msra.mxu0 0.0
    %3268 = vmatprep.subr.mxu0 0.0
    %3269 = vmatpush1.msra.mxu0 0.0
    %3270 = vmatprep.subr.mxu0 0.0
    %3271 = vmatpush1.msra.mxu0 0.0
    %3272 = vmatprep.subr.mxu0 0.0
    %3273 = vmatpush1.msra.mxu0 0.0
    %3274 = vmatprep.subr.mxu0 0.0
    %3275 = vmatpush1.msra.mxu0 0.0
    %3276 = vmatprep.subr.mxu0 0.0
    %3277 = vmatpush1.msra.mxu0 0.0
    %3278 = vmatprep.mubr.f32.mxu0 0.0
    %3279 = vmatmul.mubr.f32.gmra.mrb[0].mxu0 %v2992
    %v3280 = vpop.f32.mrb[0].mxu0
    %v3281 = vadd.f32 %v2999, %v3280
    %v3282 = vpop.f32.mrb[0].mxu0
    %v3283 = vadd.f32 %v3000, %v3282
    %3284 = vdwg.mxu0
    %v3285 = vxor.u32 %v3068, 2147483648
    %v3286 = vmul.f32 %v3285, 1.442695
    %v3287 = vpow.pop %v3286
    %v3288 = vadd.f32 %v3287, 1.0
    %v3289 = vrcp.pop %v3288
    %v3290 = vmul.f32 1.0, %v3289
    %v3291 = vxor.u32 %v3070, 2147483648
    %v3292 = vmul.f32 %v3291, 1.442695
    %v3293 = vpow.pop %v3292
    %v3294 = vadd.f32 %v3293, 1.0
    %v3295 = vrcp.pop %v3294
    %v3296 = vmul.f32 1.0, %v3295
    %v3297 = vtanh.pop %v3139
    %v3298 = vxor.u32 %v3141, 2147483648
    %v3299 = vmul.f32 %v3298, 1.442695
    %v3300 = vpow.pop %v3299
    %v3301 = vadd.f32 %v3300, 1.0
    %v3302 = vrcp.pop %v3301
    %v3303 = vmul.f32 1.0, %v3302
    %v3304 = vmul.f32 %v3296, %v2966
    %v3305 = vmul.f32 %v3290, %v3297
    %v3306 = vadd.f32 %v3304, %v3305
    %v3307 = vtanh.pop %v3306
    %v3308 = vmul.f32 %v3303, %v3307
    %v3309 = vxor.u32 %v3210, 2147483648
    %v3310 = vmul.f32 %v3309, 1.442695
    %v3311 = vpow.pop %v3310
    %v3312 = vadd.f32 %v3311, 1.0
    %v3313 = vrcp.pop %v3312
    %v3314 = vmul.f32 1.0, %v3313
    %v3315 = vxor.u32 %v3212, 2147483648
    %v3316 = vmul.f32 %v3315, 1.442695
    %v3317 = vpow.pop %v3316
    %v3318 = vadd.f32 %v3317, 1.0
    %v3319 = vrcp.pop %v3318
    %v3320 = vmul.f32 1.0, %v3319
    %v3321 = vtanh.pop %v3281
    %v3322 = vxor.u32 %v3283, 2147483648
    %v3323 = vmul.f32 %v3322, 1.442695
    %v3324 = vpow.pop %v3323
    %v3325 = vadd.f32 %v3324, 1.0
    %v3326 = vrcp.pop %v3325
    %v3327 = vmul.f32 1.0, %v3326
    %v3328 = vmul.f32 %v3320, %v2990
    %v3329 = vmul.f32 %v3314, %v3321
    %v3330 = vadd.f32 %v3328, %v3329
    %v3331 = vtanh.pop %v3330
    %v3332 = vmul.f32 %v3327, %v3331
    %v3333 = vld [vmem:[%s938] sm:$0xff]
    %v3334 = vld [vmem:[%s938 + $0x8] sm:$0xff]
    %v3335 = vld [vmem:[%s938 + $0x10] sm:$0xff]
    %v3336 = vld [vmem:[%s938 + $0x18] sm:$0xff]
    %v3337 = vld [vmem:[%s931 + $0x20] sm:$0xff]
    %v3338 = vld [vmem:[%s931 + $0x28] sm:$0xff]
    %v3339 = vld [vmem:[%s931 + $0x30] sm:$0xff]
    %v3340 = vld [vmem:[%s931 + $0x38] sm:$0xff]
    %3341 = vmatprep.subr.mxu0 %v802
    %3342 = vmatpush1.msra.mxu0 %v801
    %3343 = vmatprep.subr.mxu0 %v806
    %3344 = vmatpush1.msra.mxu0 %v805
    %3345 = vmatprep.subr.mxu0 %v810
    %3346 = vmatpush1.msra.mxu0 %v809
    %3347 = vmatprep.subr.mxu0 %v814
    %3348 = vmatpush1.msra.mxu0 %v813
    %3349 = vmatprep.subr.mxu0 %v818
    %3350 = vmatpush1.msra.mxu0 %v817
    %3351 = vmatprep.subr.mxu0 %v822
    %3352 = vmatpush1.msra.mxu0 %v821
    %3353 = vmatprep.subr.mxu0 %v826
    %3354 = vmatpush1.msra.mxu0 %v825
    %3355 = vmatprep.subr.mxu0 %v830
    %3356 = vmatpush1.msra.mxu0 %v829
    %3357 = vmatprep.subr.mxu0 %v834
    %3358 = vmatpush1.msra.mxu0 %v833
    %3359 = vmatprep.subr.mxu0 %v838
    %3360 = vmatpush1.msra.mxu0 %v837
    %3361 = vmatprep.subr.mxu0 %v842
    %3362 = vmatpush1.msra.mxu0 %v841
    %3363 = vmatprep.subr.mxu0 %v846
    %3364 = vmatpush1.msra.mxu0 %v845
    %3365 = vmatprep.subr.mxu0 %v850
    %3366 = vmatpush1.msra.mxu0 %v849
    %3367 = vmatprep.subr.mxu0 %v854
    %3368 = vmatpush1.msra.mxu0 %v853
    %3369 = vmatprep.subr.mxu0 %v858
    %3370 = vmatpush1.msra.mxu0 %v857
    %3371 = vmatprep.subr.mxu0 %v862
    %3372 = vmatpush1.msra.mxu0 %v861
    %3373 = vmatprep.subr.mxu0 0.0
    %3374 = vmatpush1.msra.mxu0 0.0
    %3375 = vmatprep.subr.mxu0 0.0
    %3376 = vmatpush1.msra.mxu0 0.0
    %3377 = vmatprep.subr.mxu0 0.0
    %3378 = vmatpush1.msra.mxu0 0.0
    %3379 = vmatprep.subr.mxu0 0.0
    %3380 = vmatpush1.msra.mxu0 0.0
    %3381 = vmatprep.subr.mxu0 0.0
    %3382 = vmatpush1.msra.mxu0 0.0
    %3383 = vmatprep.subr.mxu0 0.0
    %3384 = vmatpush1.msra.mxu0 0.0
    %3385 = vmatprep.subr.mxu0 0.0
    %3386 = vmatpush1.msra.mxu0 0.0
    %3387 = vmatprep.subr.mxu0 0.0
    %3388 = vmatpush1.msra.mxu0 0.0
    %3389 = vmatprep.subr.mxu0 0.0
    %3390 = vmatpush1.msra.mxu0 0.0
    %3391 = vmatprep.subr.mxu0 0.0
    %3392 = vmatpush1.msra.mxu0 0.0
    %3393 = vmatprep.subr.mxu0 0.0
    %3394 = vmatpush1.msra.mxu0 0.0
    %3395 = vmatprep.subr.mxu0 0.0
    %3396 = vmatpush1.msra.mxu0 0.0
    %3397 = vmatprep.subr.mxu0 0.0
    %3398 = vmatpush1.msra.mxu0 0.0
    %3399 = vmatprep.subr.mxu0 0.0
    %3400 = vmatpush1.msra.mxu0 0.0
    %3401 = vmatprep.subr.mxu0 0.0
    %3402 = vmatpush1.msra.mxu0 0.0
    %3403 = vmatprep.subr.mxu0 0.0
    %3404 = vmatpush1.msra.mxu0 0.0
    %3405 = vmatprep.mubr.f32.mxu0 0.0
    %3406 = vmatmul.mubr.f32.gmra.mrb[0].mxu0 %v3308
    %v3407 = vpop.f32.mrb[0].mxu0
    %v3408 = vadd.f32 %v3333, %v3407
    %v3409 = vpop.f32.mrb[0].mxu0
    %v3410 = vadd.f32 %v3334, %v3409
    %3411 = vdwg.mxu0
    %3412 = vmatprep.subr.mxu0 %v804
    %3413 = vmatpush1.msra.mxu0 %v803
    %3414 = vmatprep.subr.mxu0 %v808
    %3415 = vmatpush1.msra.mxu0 %v807
    %3416 = vmatprep.subr.mxu0 %v812
    %3417 = vmatpush1.msra.mxu0 %v811
    %3418 = vmatprep.subr.mxu0 %v816
    %3419 = vmatpush1.msra.mxu0 %v815
    %3420 = vmatprep.subr.mxu0 %v820
    %3421 = vmatpush1.msra.mxu0 %v819
    %3422 = vmatprep.subr.mxu0 %v824
    %3423 = vmatpush1.msra.mxu0 %v823
    %3424 = vmatprep.subr.mxu0 %v828
    %3425 = vmatpush1.msra.mxu0 %v827
    %3426 = vmatprep.subr.mxu0 %v832
    %3427 = vmatpush1.msra.mxu0 %v831
    %3428 = vmatprep.subr.mxu0 %v836
    %3429 = vmatpush1.msra.mxu0 %v835
    %3430 = vmatprep.subr.mxu0 %v840
    %3431 = vmatpush1.msra.mxu0 %v839
    %3432 = vmatprep.subr.mxu0 %v844
    %3433 = vmatpush1.msra.mxu0 %v843
    %3434 = vmatprep.subr.mxu0 %v848
    %3435 = vmatpush1.msra.mxu0 %v847
    %3436 = vmatprep.subr.mxu0 %v852
    %3437 = vmatpush1.msra.mxu0 %v851
    %3438 = vmatprep.subr.mxu0 %v856
    %3439 = vmatpush1.msra.mxu0 %v855
    %3440 = vmatprep.subr.mxu0 %v860
    %3441 = vmatpush1.msra.mxu0 %v859
    %3442 = vmatprep.subr.mxu0 %v864
    %3443 = vmatpush1.msra.mxu0 %v863
    %3444 = vmatprep.subr.mxu0 0.0
    %3445 = vmatpush1.msra.mxu0 0.0
    %3446 = vmatprep.subr.mxu0 0.0
    %3447 = vmatpush1.msra.mxu0 0.0
    %3448 = vmatprep.subr.mxu0 0.0
    %3449 = vmatpush1.msra.mxu0 0.0
    %3450 = vmatprep.subr.mxu0 0.0
    %3451 = vmatpush1.msra.mxu0 0.0
    %3452 = vmatprep.subr.mxu0 0.0
    %3453 = vmatpush1.msra.mxu0 0.0
    %3454 = vmatprep.subr.mxu0 0.0
    %3455 = vmatpush1.msra.mxu0 0.0
    %3456 = vmatprep.subr.mxu0 0.0
    %3457 = vmatpush1.msra.mxu0 0.0
    %3458 = vmatprep.subr.mxu0 0.0
    %3459 = vmatpush1.msra.mxu0 0.0
    %3460 = vmatprep.subr.mxu0 0.0
    %3461 = vmatpush1.msra.mxu0 0.0
    %3462 = vmatprep.subr.mxu0 0.0
    %3463 = vmatpush1.msra.mxu0 0.0
    %3464 = vmatprep.subr.mxu0 0.0
    %3465 = vmatpush1.msra.mxu0 0.0
    %3466 = vmatprep.subr.mxu0 0.0
    %3467 = vmatpush1.msra.mxu0 0.0
    %3468 = vmatprep.subr.mxu0 0.0
    %3469 = vmatpush1.msra.mxu0 0.0
    %3470 = vmatprep.subr.mxu0 0.0
    %3471 = vmatpush1.msra.mxu0 0.0
    %3472 = vmatprep.subr.mxu0 0.0
    %3473 = vmatpush1.msra.mxu0 0.0
    %3474 = vmatprep.subr.mxu0 0.0
    %3475 = vmatpush1.msra.mxu0 0.0
    %3476 = vmatprep.mubr.f32.mxu0 0.0
    %3477 = vmatmul.mubr.f32.gmra.mrb[0].mxu0 %v3308
    %v3478 = vpop.f32.mrb[0].mxu0
    %v3479 = vadd.f32 %v3335, %v3478
    %v3480 = vpop.f32.mrb[0].mxu0
    %v3481 = vadd.f32 %v3336, %v3480
    %3482 = vdwg.mxu0
    %3483 = vmatprep.subr.mxu0 %v866
    %3484 = vmatpush1.msra.mxu0 %v865
    %3485 = vmatprep.subr.mxu0 %v870
    %3486 = vmatpush1.msra.mxu0 %v869
    %3487 = vmatprep.subr.mxu0 %v874
    %3488 = vmatpush1.msra.mxu0 %v873
    %3489 = vmatprep.subr.mxu0 %v878
    %3490 = vmatpush1.msra.mxu0 %v877
    %3491 = vmatprep.subr.mxu0 %v882
    %3492 = vmatpush1.msra.mxu0 %v881
    %3493 = vmatprep.subr.mxu0 %v886
    %3494 = vmatpush1.msra.mxu0 %v885
    %3495 = vmatprep.subr.mxu0 %v890
    %3496 = vmatpush1.msra.mxu0 %v889
    %3497 = vmatprep.subr.mxu0 %v894
    %3498 = vmatpush1.msra.mxu0 %v893
    %3499 = vmatprep.subr.mxu0 %v898
    %3500 = vmatpush1.msra.mxu0 %v897
    %3501 = vmatprep.subr.mxu0 %v902
    %3502 = vmatpush1.msra.mxu0 %v901
    %3503 = vmatprep.subr.mxu0 %v906
    %3504 = vmatpush1.msra.mxu0 %v905
    %3505 = vmatprep.subr.mxu0 %v910
    %3506 = vmatpush1.msra.mxu0 %v909
    %3507 = vmatprep.subr.mxu0 %v914
    %3508 = vmatpush1.msra.mxu0 %v913
    %3509 = vmatprep.subr.mxu0 %v918
    %3510 = vmatpush1.msra.mxu0 %v917
    %3511 = vmatprep.subr.mxu0 %v922
    %3512 = vmatpush1.msra.mxu0 %v921
    %3513 = vmatprep.subr.mxu0 %v926
    %3514 = vmatpush1.msra.mxu0 %v925
    %3515 = vmatprep.subr.mxu0 0.0
    %3516 = vmatpush1.msra.mxu0 0.0
    %3517 = vmatprep.subr.mxu0 0.0
    %3518 = vmatpush1.msra.mxu0 0.0
    %3519 = vmatprep.subr.mxu0 0.0
    %3520 = vmatpush1.msra.mxu0 0.0
    %3521 = vmatprep.subr.mxu0 0.0
    %3522 = vmatpush1.msra.mxu0 0.0
    %3523 = vmatprep.subr.mxu0 0.0
    %3524 = vmatpush1.msra.mxu0 0.0
    %3525 = vmatprep.subr.mxu0 0.0
    %3526 = vmatpush1.msra.mxu0 0.0
    %3527 = vmatprep.subr.mxu0 0.0
    %3528 = vmatpush1.msra.mxu0 0.0
    %3529 = vmatprep.subr.mxu0 0.0
    %3530 = vmatpush1.msra.mxu0 0.0
    %3531 = vmatprep.subr.mxu0 0.0
    %3532 = vmatpush1.msra.mxu0 0.0
    %3533 = vmatprep.subr.mxu0 0.0
    %3534 = vmatpush1.msra.mxu0 0.0
    %3535 = vmatprep.subr.mxu0 0.0
    %3536 = vmatpush1.msra.mxu0 0.0
    %3537 = vmatprep.subr.mxu0 0.0
    %3538 = vmatpush1.msra.mxu0 0.0
    %3539 = vmatprep.subr.mxu0 0.0
    %3540 = vmatpush1.msra.mxu0 0.0
    %3541 = vmatprep.subr.mxu0 0.0
    %3542 = vmatpush1.msra.mxu0 0.0
    %3543 = vmatprep.subr.mxu0 0.0
    %3544 = vmatpush1.msra.mxu0 0.0
    %3545 = vmatprep.subr.mxu0 0.0
    %3546 = vmatpush1.msra.mxu0 0.0
    %3547 = vmatprep.mubr.f32.mxu0 0.0
    %3548 = vmatmul.mubr.f32.gmra.mrb[0].mxu0 %v3332
    %v3549 = vpop.f32.mrb[0].mxu0
    %v3550 = vadd.f32 %v3337, %v3549
    %v3551 = vpop.f32.mrb[0].mxu0
    %v3552 = vadd.f32 %v3338, %v3551
    %3553 = vdwg.mxu0
    %3554 = vmatprep.subr.mxu0 %v868
    %3555 = vmatpush1.msra.mxu0 %v867
    %3556 = vmatprep.subr.mxu0 %v872
    %3557 = vmatpush1.msra.mxu0 %v871
    %3558 = vmatprep.subr.mxu0 %v876
    %3559 = vmatpush1.msra.mxu0 %v875
    %3560 = vmatprep.subr.mxu0 %v880
    %3561 = vmatpush1.msra.mxu0 %v879
    %3562 = vmatprep.subr.mxu0 %v884
    %3563 = vmatpush1.msra.mxu0 %v883
    %3564 = vmatprep.subr.mxu0 %v888
    %3565 = vmatpush1.msra.mxu0 %v887
    %3566 = vmatprep.subr.mxu0 %v892
    %3567 = vmatpush1.msra.mxu0 %v891
    %3568 = vmatprep.subr.mxu0 %v896
    %3569 = vmatpush1.msra.mxu0 %v895
    %3570 = vmatprep.subr.mxu0 %v900
    %3571 = vmatpush1.msra.mxu0 %v899
    %3572 = vmatprep.subr.mxu0 %v904
    %3573 = vmatpush1.msra.mxu0 %v903
    %3574 = vmatprep.subr.mxu0 %v908
    %3575 = vmatpush1.msra.mxu0 %v907
    %3576 = vmatprep.subr.mxu0 %v912
    %3577 = vmatpush1.msra.mxu0 %v911
    %3578 = vmatprep.subr.mxu0 %v916
    %3579 = vmatpush1.msra.mxu0 %v915
    %3580 = vmatprep.subr.mxu0 %v920
    %3581 = vmatpush1.msra.mxu0 %v919
    %3582 = vmatprep.subr.mxu0 %v924
    %3583 = vmatpush1.msra.mxu0 %v923
    %3584 = vmatprep.subr.mxu0 %v928
    %3585 = vmatpush1.msra.mxu0 %v927
    %3586 = vmatprep.subr.mxu0 0.0
    %3587 = vmatpush1.msra.mxu0 0.0
    %3588 = vmatprep.subr.mxu0 0.0
    %3589 = vmatpush1.msra.mxu0 0.0
    %3590 = vmatprep.subr.mxu0 0.0
    %3591 = vmatpush1.msra.mxu0 0.0
    %3592 = vmatprep.subr.mxu0 0.0
    %3593 = vmatpush1.msra.mxu0 0.0
    %3594 = vmatprep.subr.mxu0 0.0
    %3595 = vmatpush1.msra.mxu0 0.0
    %3596 = vmatprep.subr.mxu0 0.0
    %3597 = vmatpush1.msra.mxu0 0.0
    %3598 = vmatprep.subr.mxu0 0.0
    %3599 = vmatpush1.msra.mxu0 0.0
    %3600 = vmatprep.subr.mxu0 0.0
    %3601 = vmatpush1.msra.mxu0 0.0
    %3602 = vmatprep.subr.mxu0 0.0
    %3603 = vmatpush1.msra.mxu0 0.0
    %3604 = vmatprep.subr.mxu0 0.0
    %3605 = vmatpush1.msra.mxu0 0.0
    %3606 = vmatprep.subr.mxu0 0.0
    %3607 = vmatpush1.msra.mxu0 0.0
    %3608 = vmatprep.subr.mxu0 0.0
    %3609 = vmatpush1.msra.mxu0 0.0
    %3610 = vmatprep.subr.mxu0 0.0
    %3611 = vmatpush1.msra.mxu0 0.0
    %3612 = vmatprep.subr.mxu0 0.0
    %3613 = vmatpush1.msra.mxu0 0.0
    %3614 = vmatprep.subr.mxu0 0.0
    %3615 = vmatpush1.msra.mxu0 0.0
    %3616 = vmatprep.subr.mxu0 0.0
    %3617 = vmatpush1.msra.mxu0 0.0
    %3618 = vmatprep.mubr.f32.mxu0 0.0
    %3619 = vmatmul.mubr.f32.gmra.mrb[0].mxu0 %v3332
    %v3620 = vpop.f32.mrb[0].mxu0
    %v3621 = vadd.f32 %v3339, %v3620
    %v3622 = vpop.f32.mrb[0].mxu0
    %v3623 = vadd.f32 %v3340, %v3622
    %3624 = vdwg.mxu0
    %v3625 = vxor.u32 %v3408, 2147483648
    %v3626 = vmul.f32 %v3625, 1.442695
    %v3627 = vpow.pop %v3626
    %v3628 = vadd.f32 %v3627, 1.0
    %v3629 = vrcp.pop %v3628
    %v3630 = vmul.f32 1.0, %v3629
    %v3631 = vxor.u32 %v3410, 2147483648
    %v3632 = vmul.f32 %v3631, 1.442695
    %v3633 = vpow.pop %v3632
    %v3634 = vadd.f32 %v3633, 1.0
    %v3635 = vrcp.pop %v3634
    %v3636 = vmul.f32 1.0, %v3635
    %v3637 = vtanh.pop %v3479
    %v3638 = vxor.u32 %v3481, 2147483648
    %v3639 = vmul.f32 %v3638, 1.442695
    %v3640 = vpow.pop %v3639
    %v3641 = vadd.f32 %v3640, 1.0
    %v3642 = vrcp.pop %v3641
    %v3643 = vmul.f32 1.0, %v3642
    %v3644 = vmul.f32 %v3636, %v3306
    %v3645 = vmul.f32 %v3630, %v3637
    %v3646 = vadd.f32 %v3644, %v3645
    %v3647 = vtanh.pop %v3646
    %v3648 = vmul.f32 %v3643, %v3647
    %v3649 = vxor.u32 %v3550, 2147483648
    %v3650 = vmul.f32 %v3649, 1.442695
    %v3651 = vpow.pop %v3650
    %v3652 = vadd.f32 %v3651, 1.0
    %v3653 = vrcp.pop %v3652
    %v3654 = vmul.f32 1.0, %v3653
    %v3655 = vxor.u32 %v3552, 2147483648
    %v3656 = vmul.f32 %v3655, 1.442695
    %v3657 = vpow.pop %v3656
    %v3658 = vadd.f32 %v3657, 1.0
    %v3659 = vrcp.pop %v3658
    %v3660 = vmul.f32 1.0, %v3659
    %v3661 = vtanh.pop %v3621
    %v3662 = vxor.u32 %v3623, 2147483648
    %v3663 = vmul.f32 %v3662, 1.442695
    %v3664 = vpow.pop %v3663
    %v3665 = vadd.f32 %v3664, 1.0
    %v3666 = vrcp.pop %v3665
    %v3667 = vmul.f32 1.0, %v3666
    %v3668 = vmul.f32 %v3660, %v3330
    %v3669 = vmul.f32 %v3654, %v3661
    %v3670 = vadd.f32 %v3668, %v3669
    %v3671 = vtanh.pop %v3670
    %v3672 = vmul.f32 %v3667, %v3671
    %v3673 = vld [vmem:[#allocation12] sm:$0xff]
    %v3674 = vld [vmem:[#allocation12 + $0x8] sm:$0xff]
    %v3675 = vld [vmem:[#allocation12 + $0x10] sm:$0xff]
    %v3676 = vld [vmem:[#allocation12 + $0x18] sm:$0xff]
    %v3677 = vld [vmem:[#allocation12 + $0x20] sm:$0xff]
    %v3678 = vld [vmem:[#allocation12 + $0x28] sm:$0xff]
    %v3679 = vld [vmem:[#allocation12 + $0x30] sm:$0xff]
    %v3680 = vld [vmem:[#allocation12 + $0x38] sm:$0xff]
    %v3681 = vld [vmem:[#allocation12 + $0x40] sm:$0xff]
    %v3682 = vld [vmem:[#allocation12 + $0x48] sm:$0xff]
    %v3683 = vld [vmem:[#allocation12 + $0x50] sm:$0xff]
    %v3684 = vld [vmem:[#allocation12 + $0x58] sm:$0xff]
    %v3685 = vld [vmem:[#allocation12 + $0x60] sm:$0xff]
    %v3686 = vld [vmem:[#allocation12 + $0x68] sm:$0xff]
    %v3687 = vld [vmem:[#allocation12 + $0x70] sm:$0xff]
    %v3688 = vld [vmem:[#allocation12 + $0x78] sm:$0xff]
    %v3689 = vld [vmem:[#allocation12 + $0x80] sm:$0xff]
    %v3690 = vld [vmem:[#allocation12 + $0x88] sm:$0xff]
    %v3691 = vld [vmem:[#allocation12 + $0x90] sm:$0xff]
    %v3692 = vld [vmem:[#allocation12 + $0x98] sm:$0xff]
    %v3693 = vld [vmem:[#allocation12 + $0xa0] sm:$0xff]
    %v3694 = vld [vmem:[#allocation12 + $0xa8] sm:$0xff]
    %v3695 = vld [vmem:[#allocation12 + $0xb0] sm:$0xff]
    %v3696 = vld [vmem:[#allocation12 + $0xb8] sm:$0xff]
    %v3697 = vld [vmem:[#allocation12 + $0xc0] sm:$0xff]
    %v3698 = vld [vmem:[#allocation12 + $0xc8] sm:$0xff]
    %v3699 = vld [vmem:[#allocation12 + $0xd0] sm:$0xff]
    %v3700 = vld [vmem:[#allocation12 + $0xd8] sm:$0xff]
    %v3701 = vld [vmem:[#allocation12 + $0xe0] sm:$0xff]
    %v3702 = vld [vmem:[#allocation12 + $0xe8] sm:$0xff]
    %v3703 = vld [vmem:[#allocation12 + $0xf0] sm:$0xff]
    %v3704 = vld [vmem:[#allocation12 + $0xf8] sm:$0xff]
    %3705 = vmatprep.subr.mxu0 0.0
    %3706 = vmatpush1.msra.mxu0 %v3689
    %3707 = vmatprep.subr.mxu0 0.0
    %3708 = vmatpush1.msra.mxu0 %v3690
    %3709 = vmatprep.subr.mxu0 0.0
    %3710 = vmatpush1.msra.mxu0 %v3691
    %3711 = vmatprep.subr.mxu0 0.0
    %3712 = vmatpush1.msra.mxu0 %v3692
    %3713 = vmatprep.subr.mxu0 0.0
    %3714 = vmatpush1.msra.mxu0 %v3693
    %3715 = vmatprep.subr.mxu0 0.0
    %3716 = vmatpush1.msra.mxu0 %v3694
    %3717 = vmatprep.subr.mxu0 0.0
    %3718 = vmatpush1.msra.mxu0 %v3695
    %3719 = vmatprep.subr.mxu0 0.0
    %3720 = vmatpush1.msra.mxu0 %v3696
    %3721 = vmatprep.subr.mxu0 0.0
    %3722 = vmatpush1.msra.mxu0 %v3697
    %3723 = vmatprep.subr.mxu0 0.0
    %3724 = vmatpush1.msra.mxu0 %v3698
    %3725 = vmatprep.subr.mxu0 0.0
    %3726 = vmatpush1.msra.mxu0 %v3699
    %3727 = vmatprep.subr.mxu0 0.0
    %3728 = vmatpush1.msra.mxu0 %v3700
    %3729 = vmatprep.subr.mxu0 0.0
    %3730 = vmatpush1.msra.mxu0 %v3701
    %3731 = vmatprep.subr.mxu0 0.0
    %3732 = vmatpush1.msra.mxu0 %v3702
    %3733 = vmatprep.subr.mxu0 0.0
    %3734 = vmatpush1.msra.mxu0 %v3703
    %3735 = vmatprep.subr.mxu0 0.0
    %3736 = vmatpush1.msra.mxu0 %v3704
    %3737 = vmatprep.subr.mxu0 0.0
    %3738 = vmatpush1.msra.mxu0 0.0
    %3739 = vmatprep.subr.mxu0 0.0
    %3740 = vmatpush1.msra.mxu0 0.0
    %3741 = vmatprep.subr.mxu0 0.0
    %3742 = vmatpush1.msra.mxu0 0.0
    %3743 = vmatprep.subr.mxu0 0.0
    %3744 = vmatpush1.msra.mxu0 0.0
    %3745 = vmatprep.subr.mxu0 0.0
    %3746 = vmatpush1.msra.mxu0 0.0
    %3747 = vmatprep.subr.mxu0 0.0
    %3748 = vmatpush1.msra.mxu0 0.0
    %3749 = vmatprep.subr.mxu0 0.0
    %3750 = vmatpush1.msra.mxu0 0.0
    %3751 = vmatprep.subr.mxu0 0.0
    %3752 = vmatpush1.msra.mxu0 0.0
    %3753 = vmatprep.subr.mxu0 0.0
    %3754 = vmatpush1.msra.mxu0 0.0
    %3755 = vmatprep.subr.mxu0 0.0
    %3756 = vmatpush1.msra.mxu0 0.0
    %3757 = vmatprep.subr.mxu0 0.0
    %3758 = vmatpush1.msra.mxu0 0.0
    %3759 = vmatprep.subr.mxu0 0.0
    %3760 = vmatpush1.msra.mxu0 0.0
    %3761 = vmatprep.subr.mxu0 0.0
    %3762 = vmatpush1.msra.mxu0 0.0
    %3763 = vmatprep.subr.mxu0 0.0
    %3764 = vmatpush1.msra.mxu0 0.0
    %3765 = vmatprep.subr.mxu0 0.0
    %3766 = vmatpush1.msra.mxu0 0.0
    %3767 = vmatprep.subr.mxu0 0.0
    %3768 = vmatpush1.msra.mxu0 0.0
    %3769 = vmatprep.mubr.f32.mxu0 0.0
    %3770 = vmatmul.mubr.f32.gmra.mrb[0].mxu0 %v3672
    %v3771 = vpop.f32.mrb[0].mxu0
    %v3772 = vadd.f32 0.0, %v3771
    %v3773 = vpop.f32.mrb[0].mxu0
    %3774 = vdwg.mxu0
    %3775 = vmatprep.subr.mxu0 0.0
    %3776 = vmatpush1.msra.mxu0 %v3673
    %3777 = vmatprep.subr.mxu0 0.0
    %3778 = vmatpush1.msra.mxu0 %v3674
    %3779 = vmatprep.subr.mxu0 0.0
    %3780 = vmatpush1.msra.mxu0 %v3675
    %3781 = vmatprep.subr.mxu0 0.0
    %3782 = vmatpush1.msra.mxu0 %v3676
    %3783 = vmatprep.subr.mxu0 0.0
    %3784 = vmatpush1.msra.mxu0 %v3677
    %3785 = vmatprep.subr.mxu0 0.0
    %3786 = vmatpush1.msra.mxu0 %v3678
    %3787 = vmatprep.subr.mxu0 0.0
    %3788 = vmatpush1.msra.mxu0 %v3679
    %3789 = vmatprep.subr.mxu0 0.0
    %3790 = vmatpush1.msra.mxu0 %v3680
    %3791 = vmatprep.subr.mxu0 0.0
    %3792 = vmatpush1.msra.mxu0 %v3681
    %3793 = vmatprep.subr.mxu0 0.0
    %3794 = vmatpush1.msra.mxu0 %v3682
    %3795 = vmatprep.subr.mxu0 0.0
    %3796 = vmatpush1.msra.mxu0 %v3683
    %3797 = vmatprep.subr.mxu0 0.0
    %3798 = vmatpush1.msra.mxu0 %v3684
    %3799 = vmatprep.subr.mxu0 0.0
    %3800 = vmatpush1.msra.mxu0 %v3685
    %3801 = vmatprep.subr.mxu0 0.0
    %3802 = vmatpush1.msra.mxu0 %v3686
    %3803 = vmatprep.subr.mxu0 0.0
    %3804 = vmatpush1.msra.mxu0 %v3687
    %3805 = vmatprep.subr.mxu0 0.0
    %3806 = vmatpush1.msra.mxu0 %v3688
    %3807 = vmatprep.subr.mxu0 0.0
    %3808 = vmatpush1.msra.mxu0 0.0
    %3809 = vmatprep.subr.mxu0 0.0
    %3810 = vmatpush1.msra.mxu0 0.0
    %3811 = vmatprep.subr.mxu0 0.0
    %3812 = vmatpush1.msra.mxu0 0.0
    %3813 = vmatprep.subr.mxu0 0.0
    %3814 = vmatpush1.msra.mxu0 0.0
    %3815 = vmatprep.subr.mxu0 0.0
    %3816 = vmatpush1.msra.mxu0 0.0
    %3817 = vmatprep.subr.mxu0 0.0
    %3818 = vmatpush1.msra.mxu0 0.0
    %3819 = vmatprep.subr.mxu0 0.0
    %3820 = vmatpush1.msra.mxu0 0.0
    %3821 = vmatprep.subr.mxu0 0.0
    %3822 = vmatpush1.msra.mxu0 0.0
    %3823 = vmatprep.subr.mxu0 0.0
    %3824 = vmatpush1.msra.mxu0 0.0
    %3825 = vmatprep.subr.mxu0 0.0
    %3826 = vmatpush1.msra.mxu0 0.0
    %3827 = vmatprep.subr.mxu0 0.0
    %3828 = vmatpush1.msra.mxu0 0.0
    %3829 = vmatprep.subr.mxu0 0.0
    %3830 = vmatpush1.msra.mxu0 0.0
    %3831 = vmatprep.subr.mxu0 0.0
    %3832 = vmatpush1.msra.mxu0 0.0
    %3833 = vmatprep.subr.mxu0 0.0
    %3834 = vmatpush1.msra.mxu0 0.0
    %3835 = vmatprep.subr.mxu0 0.0
    %3836 = vmatpush1.msra.mxu0 0.0
    %3837 = vmatprep.subr.mxu0 0.0
    %3838 = vmatpush1.msra.mxu0 0.0
    %3839 = vmatprep.mubr.f32.mxu0 0.0
    %3840 = vmatmul.mubr.f32.gmra.mrb[0].mxu0 %v3648
    %v3841 = vpop.f32.mrb[0].mxu0
    %v3842 = vadd.f32 %v3772, %v3841
    %v3843 = vpop.f32.mrb[0].mxu0
    %3844 = vdwg.mxu0
    %v3845 = vld [vmem:[%s6] sm:$0x1]
    %v3847 = vlaneseq
    %v3848 = vshrl.u32 %v3847, 7
    %v3849 = vsub.s32 0, %v3848
    %v3850 = vrot.slane %v3845, %v3849
    %v3852 = vadd.f32 %v3842, %v3850
    %3853 = vmax.xlane.f32.xlu0 %v3852
    %v3854 = vpop.xlane.xlu0 %3853
    %v3855 = vsub.f32 %v3852, %v3854
    %v3856 = vmul.f32 %v3855, 1.442695
    %v3857 = vpow.pop %v3856
    %3858 = vadd.xlane.f32.xlu0 %v3857
    %v3859 = vpop.xlane.xlu0 %3858
    %v3860 = vrcp.pop %v3859
    %v3861 = vmul.f32 %v3857, %v3860
    %3862 = vst [vmem:[#allocation14] sm:$0xff] %v3861
    // Predicated region
    $region54: #{tpu_custom_call.1} parent=1 // pred_check
      _
    $region55: #{tpu_custom_call.1} parent=1 // pred_check_branch
      %3864 = sbr.rel (0) target = $region57
    $region56: #{tpu_custom_call.1} parent=1 // pred_region
      %s3866 = ssub.s32 128, 128
      %3867 = vsyncadd [#allocation5], %s3866
      %s3869 = sshll.u32 [#allocation14], 4
      %s3870 = int_to_ptr.vmem [resolvable:$true] %s3869
      %3872 = dma.vmem_to_hbm [thread:$0]  %s3870, 128, %s7, [#allocation5]
    $region57: #{tpu_custom_call.1} parent=1 // pred_fallthru
      _
    // Predicated region
    $region58: #{tpu_custom_call.1} parent=1 // pred_check
      _
    $region59: #{tpu_custom_call.1} parent=1 // pred_check_branch
      %3874 = sbr.rel (0) target = $region61
    $region60: #{tpu_custom_call.1} parent=1 // pred_region
      %3875 = dma.done [#allocation5], 128
    $region61: #{tpu_custom_call.1} parent=1 // pred_fallthru
      _
    %3876 = vsyncpa [#allocation4], 1
    %3877 = vsyncpa [#allocation7], 1
    %3878 = vsyncpa [#allocation10], 1
    %3879 = vsyncpa [#allocation13], 1
    %3880 = vsyncpa [#allocation5], 1

</llo_original>
